<compile_context>
chip_gen: v7x
topology: tpu7x:2x2x1
jax: 0.10.0
libtpu: 0.0.40
codegen_flags: <defaults>
</compile_context>

<pallas_src>
import math
from functools import partial

import jax
import jax.numpy as jnp
from jax import lax
from jax.experimental import pallas as pl
from jax.experimental.pallas import tpu as pltpu


def _layer_norm(x, gamma, beta, eps=1e-5):
    mu = jnp.mean(x, axis=-1, keepdims=True)
    var = jnp.mean((x - mu) ** 2, axis=-1, keepdims=True)
    return (x - mu) * lax.rsqrt(var + eps) * gamma + beta


def _gelu_exact(x):
    # nn.GELU() default (erf-based, approximate='none')
    return 0.5 * x * (1.0 + lax.erf(x * (1.0 / math.sqrt(2.0))))


def self_attn_block_kernel(x_ref,
                           ln1g_ref, ln1b_ref,
                           wq_ref, bq_ref, wk_ref, bk_ref, wv_ref, bv_ref,
                           wm_ref, bm_ref,
                           ln2g_ref, ln2b_ref,
                           w1_ref, b1_ref, w2_ref, b2_ref,
                           o_ref, *, heads):
    Bt, S, D = x_ref.shape
    hd = D // heads
    rows = Bt * S
    scale = 1.0 / math.sqrt(hd)

    # Flatten (Bt, S, D) -> (Bt*S, D): leading-dim merge (free), fills the MXU.
    x = x_ref[...].astype(jnp.float32).reshape(rows, D)

    # ---------------- norm1 + QKV projections (one big row block) ------------
    # TODO(synk): attention mask path not implemented (mask=None only).
    xn = _layer_norm(x, ln1g_ref[0], ln1b_ref[0])
    xn_b = xn.astype(jnp.bfloat16)
    q = jnp.dot(xn_b, wq_ref[...], preferred_element_type=jnp.float32) + bq_ref[0]
    k = jnp.dot(xn_b, wk_ref[...], preferred_element_type=jnp.float32) + bk_ref[0]
    v = jnp.dot(xn_b, wv_ref[...], preferred_element_type=jnp.float32) + bv_ref[0]
    q = q * scale                           # fold 1/sqrt(head_dim) into q (f32)

    # -------- batched multi-head attention (single batched einsum pair) ------
    def split_heads(t):
        # (rows, D) -> (heads*Bt, S, hd), batch index g = h * Bt + b
        return jnp.concatenate(
            [t[:, h * hd:(h + 1) * hd].reshape(Bt, S, hd) for h in range(heads)],
            axis=0)

    qh = split_heads(q).astype(jnp.bfloat16)
    kh = split_heads(k).astype(jnp.bfloat16)
    vh = split_heads(v).astype(jnp.bfloat16)

    s = jnp.einsum('gqd,gkd->gqk', qh, kh,
                   preferred_element_type=jnp.float32)       # (heads*Bt, S, S)
    s = s - jnp.max(s, axis=-1, keepdims=True)               # stable softmax (f32)
    p = jnp.exp(s)
    p = p * pl.reciprocal(jnp.sum(p, axis=-1, keepdims=True), approx=True)
    o = jnp.einsum('gqk,gkd->gqd', p.astype(jnp.bfloat16), vh,
                   preferred_element_type=jnp.float32)       # (heads*Bt, S, hd)

    # Merge heads back to (rows, D); output projection stays ONE big matmul.
    attn = jnp.concatenate(
        [o[h * Bt:(h + 1) * Bt].reshape(rows, hd) for h in range(heads)],
        axis=-1)
    attn = jnp.dot(attn.astype(jnp.bfloat16), wm_ref[...],
                   preferred_element_type=jnp.float32) + bm_ref[0]
    x1 = x + attn

    # ---------------- norm2 + FFN ----------------
    xn2 = _layer_norm(x1, ln2g_ref[0], ln2b_ref[0])
    h1 = jnp.dot(xn2.astype(jnp.bfloat16), w1_ref[...],
                 preferred_element_type=jnp.float32) + b1_ref[0]
    h1 = _gelu_exact(h1)                                      # GELU in f32
    h2 = jnp.dot(h1.astype(jnp.bfloat16), w2_ref[...],
                 preferred_element_type=jnp.float32) + b2_ref[0]

    o_ref[...] = (x1 + h2).reshape(Bt, S, D).astype(o_ref.dtype)


_PARAM_ORDER = ("ln1_g", "ln1_b",
                "wq", "bq", "wk", "bk", "wv", "bv", "wm", "bm",
                "ln2_g", "ln2_b",
                "w1", "b1", "w2", "b2")
_BF16_WEIGHTS = frozenset({"wq", "wk", "wv", "wm", "w1", "w2"})


def _pick_batch_tile(B, S):
    # Aim for ~512 flattened rows per grid step; Bt must divide B.
    bt = max(1, min(B, max(1, 512 // max(S, 1))))
    while B % bt != 0:
        bt -= 1
    return bt


def self_attention_block(x, params, heads):
    B, S, D = x.shape
    assert D % heads == 0, "dim must be divisible by heads"
    bt = _pick_batch_tile(B, S)
    grid = (B // bt,)

    weights = []
    for name in _PARAM_ORDER:
        w = params[name]
        if name in _BF16_WEIGHTS:
            # bf16 weights: MXU-native dtype, halves weight HBM/VMEM traffic.
            w = w.astype(jnp.bfloat16)
        weights.append(w)

    in_specs = [pl.BlockSpec((bt, S, D), lambda i: (i, 0, 0))]
    for w in weights:
        in_specs.append(pl.BlockSpec(w.shape, lambda i: (0, 0)))
    out_spec = pl.BlockSpec((bt, S, D), lambda i: (i, 0, 0))

    # VMEM budget: double-buffered weights + activation block + intermediates.
    rows = bt * S
    w_bytes = sum(int(w.size) * w.dtype.itemsize for w in weights)
    act_bytes = rows * D * 4
    inter_bytes = rows * 4 * D * 4 + bt * heads * S * S * 4
    vmem_limit = int(min(max(2 * w_bytes + 6 * act_bytes + 2 * inter_bytes
                             + (4 << 20), 16 << 20), 64 << 20))

    # Advisory cost estimate for the XLA scheduler around the custom call.
    flops = grid[0] * (2 * rows * D * D * 4        # q/k/v/out projections
                       + 4 * rows * S * D          # QK^T + PV
                       + 2 * rows * D * 4 * D * 2)  # FFN fc1 + fc2
    transcendentals = grid[0] * rows * (4 * D + heads * S + 4)
    bytes_accessed = 2 * B * S * D * 4 + w_bytes * grid[0]

    kernel = partial(self_attn_block_kernel, heads=heads)
    return pl.pallas_call(
        kernel,
        out_shape=jax.ShapeDtypeStruct((B, S, D), x.dtype),
        grid_spec=pltpu.PrefetchScalarGridSpec(
            num_scalar_prefetch=0,
            grid=grid,
            in_specs=in_specs,
            out_specs=out_spec),
        compiler_params=pltpu.CompilerParams(
            dimension_semantics=("parallel",),       # batch blocks independent
            vmem_limit_bytes=vmem_limit),
        cost_estimate=pl.CostEstimate(
            flops=int(flops),
            transcendentals=int(transcendentals),
            bytes_accessed=int(bytes_accessed)),
    )(x, *weights)


def init_params(key, dim, ratio=4):
    """Deterministic synthetic parameters matching the module's shapes."""
    ks = jax.random.split(key, 6)

    def xavier(k, fan_in, fan_out):
        std = math.sqrt(2.0 / (fan_in + fan_out))   # xavier_normal_ gain=1
        return jax.random.normal(k, (fan_in, fan_out), jnp.float32) * std

    return dict(
        ln1_g=jnp.ones((1, dim), jnp.float32),
        ln1_b=jnp.zeros((1, dim), jnp.float32),
        wq=xavier(ks[0], dim, dim), bq=jnp.zeros((1, dim), jnp.float32),
        wk=xavier(ks[1], dim, dim), bk=jnp.zeros((1, dim), jnp.float32),
        wv=xavier(ks[2], dim, dim), bv=jnp.zeros((1, dim), jnp.float32),
        wm=xavier(ks[3], dim, dim), bm=jnp.zeros((1, dim), jnp.float32),
        ln2_g=jnp.ones((1, dim), jnp.float32),
        ln2_b=jnp.zeros((1, dim), jnp.float32),
        w1=jax.random.normal(ks[4], (dim, dim * ratio), jnp.float32) / math.sqrt(dim),
        b1=jnp.zeros((1, dim * ratio), jnp.float32),
        w2=jax.random.normal(ks[5], (dim * ratio, dim), jnp.float32) / math.sqrt(dim * ratio),
        b2=jnp.zeros((1, dim), jnp.float32),
    )


if __name__ == "__main__":
    key = jax.random.PRNGKey(0)
    kx, kp = jax.random.split(key)

    # Lane-friendly small shapes: last dim = 128 (dense vst), head_dim = 16.
    B, S, D, heads = 2, 16, 128, 8
    x = jax.random.normal(kx, (B, S, D), jnp.float32)
    params = init_params(kp, D)

    out = self_attention_block(x, params, heads)
    jax.block_until_ready(out)
    assert out.shape == (B, S, D)
    assert bool(jnp.all(jnp.isfinite(out)))
    print("KERNEL_OK")
</pallas_src>

<mosaic_0001>
module attributes {stable_mosaic.version = 11 : i64} {
  func.func @self_attn_block_kernel(%arg0: i32, %arg1: memref<2x16x128xf32, #tpu.memory_space<vmem>>, %arg2: memref<1x128xf32, #tpu.memory_space<vmem>>, %arg3: memref<1x128xf32, #tpu.memory_space<vmem>>, %arg4: memref<128x128xbf16, #tpu.memory_space<vmem>>, %arg5: memref<1x128xf32, #tpu.memory_space<vmem>>, %arg6: memref<128x128xbf16, #tpu.memory_space<vmem>>, %arg7: memref<1x128xf32, #tpu.memory_space<vmem>>, %arg8: memref<128x128xbf16, #tpu.memory_space<vmem>>, %arg9: memref<1x128xf32, #tpu.memory_space<vmem>>, %arg10: memref<128x128xbf16, #tpu.memory_space<vmem>>, %arg11: memref<1x128xf32, #tpu.memory_space<vmem>>, %arg12: memref<1x128xf32, #tpu.memory_space<vmem>>, %arg13: memref<1x128xf32, #tpu.memory_space<vmem>>, %arg14: memref<128x512xbf16, #tpu.memory_space<vmem>>, %arg15: memref<1x512xf32, #tpu.memory_space<vmem>>, %arg16: memref<512x128xbf16, #tpu.memory_space<vmem>>, %arg17: memref<1x128xf32, #tpu.memory_space<vmem>>, %arg18: memref<2x16x128xf32, #tpu.memory_space<vmem>>) attributes {dimension_semantics = [#tpu.dimension_semantics<parallel>], iteration_bounds = array<i64: 1>, scalar_prefetch = 0 : i64, scratch_operands = 0 : i64, tpu.core_type = #tpu.core_type<tc>, window_params = [{transform_indices = @transform_0, window_bounds = array<i64: 2, 16, 128>}, {pipeline_mode = #tpu.pipeline_mode<synchronous>, transform_indices = @transform_1, window_bounds = array<i64: 1, 128>}, {pipeline_mode = #tpu.pipeline_mode<synchronous>, transform_indices = @transform_2, window_bounds = array<i64: 1, 128>}, {pipeline_mode = #tpu.pipeline_mode<synchronous>, transform_indices = @transform_3, window_bounds = array<i64: 128, 128>}, {pipeline_mode = #tpu.pipeline_mode<synchronous>, transform_indices = @transform_4, window_bounds = array<i64: 1, 128>}, {pipeline_mode = #tpu.pipeline_mode<synchronous>, transform_indices = @transform_5, window_bounds = array<i64: 128, 128>}, {pipeline_mode = #tpu.pipeline_mode<synchronous>, transform_indices = @transform_6, window_bounds = array<i64: 1, 128>}, {pipeline_mode = #tpu.pipeline_mode<synchronous>, transform_indices = @transform_7, window_bounds = array<i64: 128, 128>}, {pipeline_mode = #tpu.pipeline_mode<synchronous>, transform_indices = @transform_8, window_bounds = array<i64: 1, 128>}, {pipeline_mode = #tpu.pipeline_mode<synchronous>, transform_indices = @transform_9, window_bounds = array<i64: 128, 128>}, {pipeline_mode = #tpu.pipeline_mode<synchronous>, transform_indices = @transform_10, window_bounds = array<i64: 1, 128>}, {pipeline_mode = #tpu.pipeline_mode<synchronous>, transform_indices = @transform_11, window_bounds = array<i64: 1, 128>}, {pipeline_mode = #tpu.pipeline_mode<synchronous>, transform_indices = @transform_12, window_bounds = array<i64: 1, 128>}, {pipeline_mode = #tpu.pipeline_mode<synchronous>, transform_indices = @transform_13, window_bounds = array<i64: 128, 512>}, {pipeline_mode = #tpu.pipeline_mode<synchronous>, transform_indices = @transform_14, window_bounds = array<i64: 1, 512>}, {pipeline_mode = #tpu.pipeline_mode<synchronous>, transform_indices = @transform_15, window_bounds = array<i64: 512, 128>}, {pipeline_mode = #tpu.pipeline_mode<synchronous>, transform_indices = @transform_16, window_bounds = array<i64: 1, 128>}, {transform_indices = @transform_17, window_bounds = array<i64: 2, 16, 128>}]} {
    %c0 = arith.constant 0 : index
    %c0_0 = arith.constant 0 : index
    %c0_1 = arith.constant 0 : index
    %0 = vector.load %arg1[%c0, %c0_0, %c0_1] : memref<2x16x128xf32, #tpu.memory_space<vmem>>, vector<2x16x128xf32>
    %1 = vector.shape_cast %0 : vector<2x16x128xf32> to vector<32x128xf32>
    %c0_2 = arith.constant 0 : index
    %c0_3 = arith.constant 0 : index
    %2 = vector.load %arg2[%c0_2, %c0_3] : memref<1x128xf32, #tpu.memory_space<vmem>>, vector<1x128xf32>
    %3 = vector.shape_cast %2 : vector<1x128xf32> to vector<128xf32>
    %c0_4 = arith.constant 0 : index
    %c0_5 = arith.constant 0 : index
    %4 = vector.load %arg3[%c0_4, %c0_5] : memref<1x128xf32, #tpu.memory_space<vmem>>, vector<1x128xf32>
    %5 = vector.shape_cast %4 : vector<1x128xf32> to vector<128xf32>
    %cst = arith.constant dense<0.000000e+00> : vector<32xf32>
    %6 = vector.multi_reduction <add>, %1, %cst [1] : vector<32x128xf32> to vector<32xf32>
    %7 = vector.shape_cast %6 : vector<32xf32> to vector<32x1xf32>
    %cst_6 = arith.constant 1.280000e+02 : f32
    %8 = vector.broadcast %cst_6 : f32 to vector<32x1xf32>
    %9 = arith.divf %7, %8 : vector<32x1xf32>
    %10 = vector.broadcast %9 : vector<32x1xf32> to vector<32x128xf32>
    %11 = arith.subf %1, %10 : vector<32x128xf32>
    %12 = arith.mulf %11, %11 : vector<32x128xf32>
    %cst_7 = arith.constant dense<0.000000e+00> : vector<32xf32>
    %13 = vector.multi_reduction <add>, %12, %cst_7 [1] : vector<32x128xf32> to vector<32xf32>
    %14 = vector.shape_cast %13 : vector<32xf32> to vector<32x1xf32>
    %cst_8 = arith.constant 1.280000e+02 : f32
    %15 = vector.broadcast %cst_8 : f32 to vector<32x1xf32>
    %16 = arith.divf %14, %15 : vector<32x1xf32>
    %17 = vector.broadcast %9 : vector<32x1xf32> to vector<32x128xf32>
    %18 = arith.subf %1, %17 : vector<32x128xf32>
    %cst_9 = arith.constant 9.99999974E-6 : f32
    %19 = vector.broadcast %cst_9 : f32 to vector<32x1xf32>
    %20 = arith.addf %16, %19 : vector<32x1xf32>
    %21 = math.rsqrt %20 : vector<32x1xf32>
    %22 = vector.broadcast %21 : vector<32x1xf32> to vector<32x128xf32>
    %23 = arith.mulf %18, %22 : vector<32x128xf32>
    %24 = vector.shape_cast %3 : vector<128xf32> to vector<1x128xf32>
    %25 = vector.broadcast %24 : vector<1x128xf32> to vector<32x128xf32>
    %26 = arith.mulf %23, %25 : vector<32x128xf32>
    %27 = vector.shape_cast %5 : vector<128xf32> to vector<1x128xf32>
    %28 = vector.broadcast %27 : vector<1x128xf32> to vector<32x128xf32>
    %29 = arith.addf %26, %28 : vector<32x128xf32>
    %30 = arith.truncf %29 : vector<32x128xf32> to vector<32x128xbf16>
    %c0_10 = arith.constant 0 : index
    %c0_11 = arith.constant 0 : index
    %31 = vector.load %arg4[%c0_10, %c0_11] : memref<128x128xbf16, #tpu.memory_space<vmem>>, vector<128x128xbf16>
    %cst_12 = arith.constant dense<0.000000e+00> : vector<32x128xf32>
    %32 = tpu.matmul %30, %31, %cst_12 {dimension_numbers = #tpu.dot_dimension_numbers<[1], [0], [0], [1], [0, 0, 1, 1], [], []>} : vector<32x128xbf16>, vector<128x128xbf16>, vector<32x128xf32> -> vector<32x128xf32>
    %c0_13 = arith.constant 0 : index
    %c0_14 = arith.constant 0 : index
    %33 = vector.load %arg5[%c0_13, %c0_14] : memref<1x128xf32, #tpu.memory_space<vmem>>, vector<1x128xf32>
    %34 = vector.shape_cast %33 : vector<1x128xf32> to vector<128xf32>
    %35 = vector.shape_cast %34 : vector<128xf32> to vector<1x128xf32>
    %36 = vector.broadcast %35 : vector<1x128xf32> to vector<32x128xf32>
    %37 = arith.addf %32, %36 : vector<32x128xf32>
    %c0_15 = arith.constant 0 : index
    %c0_16 = arith.constant 0 : index
    %38 = vector.load %arg6[%c0_15, %c0_16] : memref<128x128xbf16, #tpu.memory_space<vmem>>, vector<128x128xbf16>
    %cst_17 = arith.constant dense<0.000000e+00> : vector<32x128xf32>
    %39 = tpu.matmul %30, %38, %cst_17 {dimension_numbers = #tpu.dot_dimension_numbers<[1], [0], [0], [1], [0, 0, 1, 1], [], []>} : vector<32x128xbf16>, vector<128x128xbf16>, vector<32x128xf32> -> vector<32x128xf32>
    %c0_18 = arith.constant 0 : index
    %c0_19 = arith.constant 0 : index
    %40 = vector.load %arg7[%c0_18, %c0_19] : memref<1x128xf32, #tpu.memory_space<vmem>>, vector<1x128xf32>
    %41 = vector.shape_cast %40 : vector<1x128xf32> to vector<128xf32>
    %42 = vector.shape_cast %41 : vector<128xf32> to vector<1x128xf32>
    %43 = vector.broadcast %42 : vector<1x128xf32> to vector<32x128xf32>
    %44 = arith.addf %39, %43 : vector<32x128xf32>
    %c0_20 = arith.constant 0 : index
    %c0_21 = arith.constant 0 : index
    %45 = vector.load %arg8[%c0_20, %c0_21] : memref<128x128xbf16, #tpu.memory_space<vmem>>, vector<128x128xbf16>
    %cst_22 = arith.constant dense<0.000000e+00> : vector<32x128xf32>
    %46 = tpu.matmul %30, %45, %cst_22 {dimension_numbers = #tpu.dot_dimension_numbers<[1], [0], [0], [1], [0, 0, 1, 1], [], []>} : vector<32x128xbf16>, vector<128x128xbf16>, vector<32x128xf32> -> vector<32x128xf32>
    %c0_23 = arith.constant 0 : index
    %c0_24 = arith.constant 0 : index
    %47 = vector.load %arg9[%c0_23, %c0_24] : memref<1x128xf32, #tpu.memory_space<vmem>>, vector<1x128xf32>
    %48 = vector.shape_cast %47 : vector<1x128xf32> to vector<128xf32>
    %49 = vector.shape_cast %48 : vector<128xf32> to vector<1x128xf32>
    %50 = vector.broadcast %49 : vector<1x128xf32> to vector<32x128xf32>
    %51 = arith.addf %46, %50 : vector<32x128xf32>
    %cst_25 = arith.constant 2.500000e-01 : f32
    %52 = vector.broadcast %cst_25 : f32 to vector<32x128xf32>
    %53 = arith.mulf %37, %52 : vector<32x128xf32>
    %54 = vector.extract_strided_slice %53 {offsets = [0, 0], sizes = [32, 16], strides = [1, 1]} : vector<32x128xf32> to vector<32x16xf32>
    %55 = vector.shape_cast %54 : vector<32x16xf32> to vector<2x16x16xf32>
    %56 = vector.extract_strided_slice %53 {offsets = [0, 16], sizes = [32, 16], strides = [1, 1]} : vector<32x128xf32> to vector<32x16xf32>
    %57 = vector.shape_cast %56 : vector<32x16xf32> to vector<2x16x16xf32>
    %58 = vector.extract_strided_slice %53 {offsets = [0, 32], sizes = [32, 16], strides = [1, 1]} : vector<32x128xf32> to vector<32x16xf32>
    %59 = vector.shape_cast %58 : vector<32x16xf32> to vector<2x16x16xf32>
    %60 = vector.extract_strided_slice %53 {offsets = [0, 48], sizes = [32, 16], strides = [1, 1]} : vector<32x128xf32> to vector<32x16xf32>
    %61 = vector.shape_cast %60 : vector<32x16xf32> to vector<2x16x16xf32>
    %62 = vector.extract_strided_slice %53 {offsets = [0, 64], sizes = [32, 16], strides = [1, 1]} : vector<32x128xf32> to vector<32x16xf32>
    %63 = vector.shape_cast %62 : vector<32x16xf32> to vector<2x16x16xf32>
    %64 = vector.extract_strided_slice %53 {offsets = [0, 80], sizes = [32, 16], strides = [1, 1]} : vector<32x128xf32> to vector<32x16xf32>
    %65 = vector.shape_cast %64 : vector<32x16xf32> to vector<2x16x16xf32>
    %66 = vector.extract_strided_slice %53 {offsets = [0, 96], sizes = [32, 16], strides = [1, 1]} : vector<32x128xf32> to vector<32x16xf32>
    %67 = vector.shape_cast %66 : vector<32x16xf32> to vector<2x16x16xf32>
    %68 = vector.extract_strided_slice %53 {offsets = [0, 112], sizes = [32, 16], strides = [1, 1]} : vector<32x128xf32> to vector<32x16xf32>
    %69 = vector.shape_cast %68 : vector<32x16xf32> to vector<2x16x16xf32>
    %70 = tpu.concatenate %55, %57, %59, %61, %63, %65, %67, %69 in 0 : vector<2x16x16xf32>, vector<2x16x16xf32>, vector<2x16x16xf32>, vector<2x16x16xf32>, vector<2x16x16xf32>, vector<2x16x16xf32>, vector<2x16x16xf32>, vector<2x16x16xf32> -> vector<16x16x16xf32>
    %71 = arith.truncf %70 : vector<16x16x16xf32> to vector<16x16x16xbf16>
    %72 = vector.extract_strided_slice %44 {offsets = [0, 0], sizes = [32, 16], strides = [1, 1]} : vector<32x128xf32> to vector<32x16xf32>
    %73 = vector.shape_cast %72 : vector<32x16xf32> to vector<2x16x16xf32>
    %74 = vector.extract_strided_slice %44 {offsets = [0, 16], sizes = [32, 16], strides = [1, 1]} : vector<32x128xf32> to vector<32x16xf32>
    %75 = vector.shape_cast %74 : vector<32x16xf32> to vector<2x16x16xf32>
    %76 = vector.extract_strided_slice %44 {offsets = [0, 32], sizes = [32, 16], strides = [1, 1]} : vector<32x128xf32> to vector<32x16xf32>
    %77 = vector.shape_cast %76 : vector<32x16xf32> to vector<2x16x16xf32>
    %78 = vector.extract_strided_slice %44 {offsets = [0, 48], sizes = [32, 16], strides = [1, 1]} : vector<32x128xf32> to vector<32x16xf32>
    %79 = vector.shape_cast %78 : vector<32x16xf32> to vector<2x16x16xf32>
    %80 = vector.extract_strided_slice %44 {offsets = [0, 64], sizes = [32, 16], strides = [1, 1]} : vector<32x128xf32> to vector<32x16xf32>
    %81 = vector.shape_cast %80 : vector<32x16xf32> to vector<2x16x16xf32>
    %82 = vector.extract_strided_slice %44 {offsets = [0, 80], sizes = [32, 16], strides = [1, 1]} : vector<32x128xf32> to vector<32x16xf32>
    %83 = vector.shape_cast %82 : vector<32x16xf32> to vector<2x16x16xf32>
    %84 = vector.extract_strided_slice %44 {offsets = [0, 96], sizes = [32, 16], strides = [1, 1]} : vector<32x128xf32> to vector<32x16xf32>
    %85 = vector.shape_cast %84 : vector<32x16xf32> to vector<2x16x16xf32>
    %86 = vector.extract_strided_slice %44 {offsets = [0, 112], sizes = [32, 16], strides = [1, 1]} : vector<32x128xf32> to vector<32x16xf32>
    %87 = vector.shape_cast %86 : vector<32x16xf32> to vector<2x16x16xf32>
    %88 = tpu.concatenate %73, %75, %77, %79, %81, %83, %85, %87 in 0 : vector<2x16x16xf32>, vector<2x16x16xf32>, vector<2x16x16xf32>, vector<2x16x16xf32>, vector<2x16x16xf32>, vector<2x16x16xf32>, vector<2x16x16xf32>, vector<2x16x16xf32> -> vector<16x16x16xf32>
    %89 = arith.truncf %88 : vector<16x16x16xf32> to vector<16x16x16xbf16>
    %90 = vector.extract_strided_slice %51 {offsets = [0, 0], sizes = [32, 16], strides = [1, 1]} : vector<32x128xf32> to vector<32x16xf32>
    %91 = vector.shape_cast %90 : vector<32x16xf32> to vector<2x16x16xf32>
    %92 = vector.extract_strided_slice %51 {offsets = [0, 16], sizes = [32, 16], strides = [1, 1]} : vector<32x128xf32> to vector<32x16xf32>
    %93 = vector.shape_cast %92 : vector<32x16xf32> to vector<2x16x16xf32>
    %94 = vector.extract_strided_slice %51 {offsets = [0, 32], sizes = [32, 16], strides = [1, 1]} : vector<32x128xf32> to vector<32x16xf32>
    %95 = vector.shape_cast %94 : vector<32x16xf32> to vector<2x16x16xf32>
    %96 = vector.extract_strided_slice %51 {offsets = [0, 48], sizes = [32, 16], strides = [1, 1]} : vector<32x128xf32> to vector<32x16xf32>
    %97 = vector.shape_cast %96 : vector<32x16xf32> to vector<2x16x16xf32>
    %98 = vector.extract_strided_slice %51 {offsets = [0, 64], sizes = [32, 16], strides = [1, 1]} : vector<32x128xf32> to vector<32x16xf32>
    %99 = vector.shape_cast %98 : vector<32x16xf32> to vector<2x16x16xf32>
    %100 = vector.extract_strided_slice %51 {offsets = [0, 80], sizes = [32, 16], strides = [1, 1]} : vector<32x128xf32> to vector<32x16xf32>
    %101 = vector.shape_cast %100 : vector<32x16xf32> to vector<2x16x16xf32>
    %102 = vector.extract_strided_slice %51 {offsets = [0, 96], sizes = [32, 16], strides = [1, 1]} : vector<32x128xf32> to vector<32x16xf32>
    %103 = vector.shape_cast %102 : vector<32x16xf32> to vector<2x16x16xf32>
    %104 = vector.extract_strided_slice %51 {offsets = [0, 112], sizes = [32, 16], strides = [1, 1]} : vector<32x128xf32> to vector<32x16xf32>
    %105 = vector.shape_cast %104 : vector<32x16xf32> to vector<2x16x16xf32>
    %106 = tpu.concatenate %91, %93, %95, %97, %99, %101, %103, %105 in 0 : vector<2x16x16xf32>, vector<2x16x16xf32>, vector<2x16x16xf32>, vector<2x16x16xf32>, vector<2x16x16xf32>, vector<2x16x16xf32>, vector<2x16x16xf32>, vector<2x16x16xf32> -> vector<16x16x16xf32>
    %107 = arith.truncf %106 : vector<16x16x16xf32> to vector<16x16x16xbf16>
    "tpu.trace_start"() <{level = 10 : i32, message = "gqd,gkd->gqk"}> : () -> ()
    %cst_26 = arith.constant dense<0.000000e+00> : vector<16x16x16xf32>
    %108 = tpu.matmul %71, %89, %cst_26 {dimension_numbers = #tpu.dot_dimension_numbers<[2], [2], [1], [1], [0, 0, 0, 1, 1, 1], [0], [0]>} : vector<16x16x16xbf16>, vector<16x16x16xbf16>, vector<16x16x16xf32> -> vector<16x16x16xf32>
    "tpu.trace_stop"() : () -> ()
    %cst_27 = arith.constant dense<0xFF800000> : vector<16x16xf32>
    %109 = vector.multi_reduction <maximumf>, %108, %cst_27 [2] : vector<16x16x16xf32> to vector<16x16xf32>
    %110 = vector.shape_cast %109 : vector<16x16xf32> to vector<16x16x1xf32>
    %111 = vector.broadcast %110 : vector<16x16x1xf32> to vector<16x16x16xf32>
    %112 = arith.subf %108, %111 : vector<16x16x16xf32>
    %113 = math.exp %112 : vector<16x16x16xf32>
    %cst_28 = arith.constant dense<0.000000e+00> : vector<16x16xf32>
    %114 = vector.multi_reduction <add>, %113, %cst_28 [2] : vector<16x16x16xf32> to vector<16x16xf32>
    %115 = vector.shape_cast %114 : vector<16x16xf32> to vector<16x16x1xf32>
    %116 = tpu.reciprocal %115 {approx = true} : vector<16x16x1xf32> -> vector<16x16x1xf32>
    %117 = vector.broadcast %116 : vector<16x16x1xf32> to vector<16x16x16xf32>
    %118 = arith.mulf %113, %117 : vector<16x16x16xf32>
    %119 = arith.truncf %118 : vector<16x16x16xf32> to vector<16x16x16xbf16>
    "tpu.trace_start"() <{level = 10 : i32, message = "gqk,gkd->gqd"}> : () -> ()
    %cst_29 = arith.constant dense<0.000000e+00> : vector<16x16x16xf32>
    %120 = tpu.matmul %119, %107, %cst_29 {dimension_numbers = #tpu.dot_dimension_numbers<[2], [1], [1], [2], [0, 0, 0, 1, 1, 2], [0], [0]>} : vector<16x16x16xbf16>, vector<16x16x16xbf16>, vector<16x16x16xf32> -> vector<16x16x16xf32>
    "tpu.trace_stop"() : () -> ()
    %121 = vector.extract_strided_slice %120 {offsets = [0, 0, 0], sizes = [2, 16, 16], strides = [1, 1, 1]} : vector<16x16x16xf32> to vector<2x16x16xf32>
    %122 = vector.shape_cast %121 : vector<2x16x16xf32> to vector<32x16xf32>
    %123 = vector.extract_strided_slice %120 {offsets = [2, 0, 0], sizes = [2, 16, 16], strides = [1, 1, 1]} : vector<16x16x16xf32> to vector<2x16x16xf32>
    %124 = vector.shape_cast %123 : vector<2x16x16xf32> to vector<32x16xf32>
    %125 = vector.extract_strided_slice %120 {offsets = [4, 0, 0], sizes = [2, 16, 16], strides = [1, 1, 1]} : vector<16x16x16xf32> to vector<2x16x16xf32>
    %126 = vector.shape_cast %125 : vector<2x16x16xf32> to vector<32x16xf32>
    %127 = vector.extract_strided_slice %120 {offsets = [6, 0, 0], sizes = [2, 16, 16], strides = [1, 1, 1]} : vector<16x16x16xf32> to vector<2x16x16xf32>
    %128 = vector.shape_cast %127 : vector<2x16x16xf32> to vector<32x16xf32>
    %129 = vector.extract_strided_slice %120 {offsets = [8, 0, 0], sizes = [2, 16, 16], strides = [1, 1, 1]} : vector<16x16x16xf32> to vector<2x16x16xf32>
    %130 = vector.shape_cast %129 : vector<2x16x16xf32> to vector<32x16xf32>
    %131 = vector.extract_strided_slice %120 {offsets = [10, 0, 0], sizes = [2, 16, 16], strides = [1, 1, 1]} : vector<16x16x16xf32> to vector<2x16x16xf32>
    %132 = vector.shape_cast %131 : vector<2x16x16xf32> to vector<32x16xf32>
    %133 = vector.extract_strided_slice %120 {offsets = [12, 0, 0], sizes = [2, 16, 16], strides = [1, 1, 1]} : vector<16x16x16xf32> to vector<2x16x16xf32>
    %134 = vector.shape_cast %133 : vector<2x16x16xf32> to vector<32x16xf32>
    %135 = vector.extract_strided_slice %120 {offsets = [14, 0, 0], sizes = [2, 16, 16], strides = [1, 1, 1]} : vector<16x16x16xf32> to vector<2x16x16xf32>
    %136 = vector.shape_cast %135 : vector<2x16x16xf32> to vector<32x16xf32>
    %137 = tpu.concatenate %122, %124, %126, %128, %130, %132, %134, %136 in 1 : vector<32x16xf32>, vector<32x16xf32>, vector<32x16xf32>, vector<32x16xf32>, vector<32x16xf32>, vector<32x16xf32>, vector<32x16xf32>, vector<32x16xf32> -> vector<32x128xf32>
    %138 = arith.truncf %137 : vector<32x128xf32> to vector<32x128xbf16>
    %c0_30 = arith.constant 0 : index
    %c0_31 = arith.constant 0 : index
    %139 = vector.load %arg10[%c0_30, %c0_31] : memref<128x128xbf16, #tpu.memory_space<vmem>>, vector<128x128xbf16>
    %cst_32 = arith.constant dense<0.000000e+00> : vector<32x128xf32>
    %140 = tpu.matmul %138, %139, %cst_32 {dimension_numbers = #tpu.dot_dimension_numbers<[1], [0], [0], [1], [0, 0, 1, 1], [], []>} : vector<32x128xbf16>, vector<128x128xbf16>, vector<32x128xf32> -> vector<32x128xf32>
    %c0_33 = arith.constant 0 : index
    %c0_34 = arith.constant 0 : index
    %141 = vector.load %arg11[%c0_33, %c0_34] : memref<1x128xf32, #tpu.memory_space<vmem>>, vector<1x128xf32>
    %142 = vector.shape_cast %141 : vector<1x128xf32> to vector<128xf32>
    %143 = vector.shape_cast %142 : vector<128xf32> to vector<1x128xf32>
    %144 = vector.broadcast %143 : vector<1x128xf32> to vector<32x128xf32>
    %145 = arith.addf %140, %144 : vector<32x128xf32>
    %146 = arith.addf %1, %145 : vector<32x128xf32>
    %c0_35 = arith.constant 0 : index
    %c0_36 = arith.constant 0 : index
    %147 = vector.load %arg12[%c0_35, %c0_36] : memref<1x128xf32, #tpu.memory_space<vmem>>, vector<1x128xf32>
    %148 = vector.shape_cast %147 : vector<1x128xf32> to vector<128xf32>
    %c0_37 = arith.constant 0 : index
    %c0_38 = arith.constant 0 : index
    %149 = vector.load %arg13[%c0_37, %c0_38] : memref<1x128xf32, #tpu.memory_space<vmem>>, vector<1x128xf32>
    %150 = vector.shape_cast %149 : vector<1x128xf32> to vector<128xf32>
    %cst_39 = arith.constant dense<0.000000e+00> : vector<32xf32>
    %151 = vector.multi_reduction <add>, %146, %cst_39 [1] : vector<32x128xf32> to vector<32xf32>
    %152 = vector.shape_cast %151 : vector<32xf32> to vector<32x1xf32>
    %cst_40 = arith.constant 1.280000e+02 : f32
    %153 = vector.broadcast %cst_40 : f32 to vector<32x1xf32>
    %154 = arith.divf %152, %153 : vector<32x1xf32>
    %155 = vector.broadcast %154 : vector<32x1xf32> to vector<32x128xf32>
    %156 = arith.subf %146, %155 : vector<32x128xf32>
    %157 = arith.mulf %156, %156 : vector<32x128xf32>
    %cst_41 = arith.constant dense<0.000000e+00> : vector<32xf32>
    %158 = vector.multi_reduction <add>, %157, %cst_41 [1] : vector<32x128xf32> to vector<32xf32>
    %159 = vector.shape_cast %158 : vector<32xf32> to vector<32x1xf32>
    %cst_42 = arith.constant 1.280000e+02 : f32
    %160 = vector.broadcast %cst_42 : f32 to vector<32x1xf32>
    %161 = arith.divf %159, %160 : vector<32x1xf32>
    %162 = vector.broadcast %154 : vector<32x1xf32> to vector<32x128xf32>
    %163 = arith.subf %146, %162 : vector<32x128xf32>
    %cst_43 = arith.constant 9.99999974E-6 : f32
    %164 = vector.broadcast %cst_43 : f32 to vector<32x1xf32>
    %165 = arith.addf %161, %164 : vector<32x1xf32>
    %166 = math.rsqrt %165 : vector<32x1xf32>
    %167 = vector.broadcast %166 : vector<32x1xf32> to vector<32x128xf32>
    %168 = arith.mulf %163, %167 : vector<32x128xf32>
    %169 = vector.shape_cast %148 : vector<128xf32> to vector<1x128xf32>
    %170 = vector.broadcast %169 : vector<1x128xf32> to vector<32x128xf32>
    %171 = arith.mulf %168, %170 : vector<32x128xf32>
    %172 = vector.shape_cast %150 : vector<128xf32> to vector<1x128xf32>
    %173 = vector.broadcast %172 : vector<1x128xf32> to vector<32x128xf32>
    %174 = arith.addf %171, %173 : vector<32x128xf32>
    %175 = arith.truncf %174 : vector<32x128xf32> to vector<32x128xbf16>
    %c0_44 = arith.constant 0 : index
    %c0_45 = arith.constant 0 : index
    %176 = vector.load %arg14[%c0_44, %c0_45] : memref<128x512xbf16, #tpu.memory_space<vmem>>, vector<128x512xbf16>
    %cst_46 = arith.constant dense<0.000000e+00> : vector<32x512xf32>
    %177 = tpu.matmul %175, %176, %cst_46 {dimension_numbers = #tpu.dot_dimension_numbers<[1], [0], [0], [1], [0, 0, 1, 1], [], []>} : vector<32x128xbf16>, vector<128x512xbf16>, vector<32x512xf32> -> vector<32x512xf32>
    %c0_47 = arith.constant 0 : index
    %c0_48 = arith.constant 0 : index
    %178 = vector.load %arg15[%c0_47, %c0_48] : memref<1x512xf32, #tpu.memory_space<vmem>>, vector<1x512xf32>
    %179 = vector.shape_cast %178 : vector<1x512xf32> to vector<512xf32>
    %180 = vector.shape_cast %179 : vector<512xf32> to vector<1x512xf32>
    %181 = vector.broadcast %180 : vector<1x512xf32> to vector<32x512xf32>
    %182 = arith.addf %177, %181 : vector<32x512xf32>
    %cst_49 = arith.constant 5.000000e-01 : f32
    %183 = vector.broadcast %cst_49 : f32 to vector<32x512xf32>
    %184 = arith.mulf %183, %182 : vector<32x512xf32>
    %cst_50 = arith.constant 0.707106769 : f32
    %185 = vector.broadcast %cst_50 : f32 to vector<32x512xf32>
    %186 = arith.mulf %182, %185 : vector<32x512xf32>
    %187 = math.erf %186 : vector<32x512xf32>
    %cst_51 = arith.constant 1.000000e+00 : f32
    %188 = vector.broadcast %cst_51 : f32 to vector<32x512xf32>
    %189 = arith.addf %188, %187 : vector<32x512xf32>
    %190 = arith.mulf %184, %189 : vector<32x512xf32>
    %191 = arith.truncf %190 : vector<32x512xf32> to vector<32x512xbf16>
    %c0_52 = arith.constant 0 : index
    %c0_53 = arith.constant 0 : index
    %192 = vector.load %arg16[%c0_52, %c0_53] : memref<512x128xbf16, #tpu.memory_space<vmem>>, vector<512x128xbf16>
    %cst_54 = arith.constant dense<0.000000e+00> : vector<32x128xf32>
    %193 = tpu.matmul %191, %192, %cst_54 {dimension_numbers = #tpu.dot_dimension_numbers<[1], [0], [0], [1], [0, 0, 1, 1], [], []>} : vector<32x512xbf16>, vector<512x128xbf16>, vector<32x128xf32> -> vector<32x128xf32>
    %c0_55 = arith.constant 0 : index
    %c0_56 = arith.constant 0 : index
    %194 = vector.load %arg17[%c0_55, %c0_56] : memref<1x128xf32, #tpu.memory_space<vmem>>, vector<1x128xf32>
    %195 = vector.shape_cast %194 : vector<1x128xf32> to vector<128xf32>
    %196 = vector.shape_cast %195 : vector<128xf32> to vector<1x128xf32>
    %197 = vector.broadcast %196 : vector<1x128xf32> to vector<32x128xf32>
    %198 = arith.addf %193, %197 : vector<32x128xf32>
    %199 = arith.addf %146, %198 : vector<32x128xf32>
    %200 = vector.shape_cast %199 : vector<32x128xf32> to vector<2x16x128xf32>
    %c0_57 = arith.constant 0 : index
    %c0_58 = arith.constant 0 : index
    %c0_59 = arith.constant 0 : index
    %201 = vector.load %arg18[%c0_57, %c0_58, %c0_59] : memref<2x16x128xf32, #tpu.memory_space<vmem>>, vector<2x16x128xf32>
    tpu.vector_store %arg18[%c0_57, %c0_58, %c0_59], %200 {strides = array<i32>} : memref<2x16x128xf32, #tpu.memory_space<vmem>>, vector<2x16x128xf32>,
    return
  }
  func.func @transform_0(%arg0: i32) -> (i32, i32, i32) {
    %c0_i32 = arith.constant 0 : i32
    %c0_i32_0 = arith.constant 0 : i32
    %c0_i32_1 = arith.constant 0 : i32
    return %arg0, %c0_i32, %c0_i32_0 : i32, i32, i32
  }
  func.func @transform_1(%arg0: i32) -> (i32, i32) {
    %c0_i32 = arith.constant 0 : i32
    %c0_i32_0 = arith.constant 0 : i32
    %c0_i32_1 = arith.constant 0 : i32
    return %c0_i32, %c0_i32_0 : i32, i32
  }
  func.func @transform_2(%arg0: i32) -> (i32, i32) {
    %c0_i32 = arith.constant 0 : i32
    %c0_i32_0 = arith.constant 0 : i32
    %c0_i32_1 = arith.constant 0 : i32
    return %c0_i32, %c0_i32_0 : i32, i32
  }
  func.func @transform_3(%arg0: i32) -> (i32, i32) {
    %c0_i32 = arith.constant 0 : i32
    %c0_i32_0 = arith.constant 0 : i32
    %c0_i32_1 = arith.constant 0 : i32
    return %c0_i32, %c0_i32_0 : i32, i32
  }
  func.func @transform_4(%arg0: i32) -> (i32, i32) {
    %c0_i32 = arith.constant 0 : i32
    %c0_i32_0 = arith.constant 0 : i32
    %c0_i32_1 = arith.constant 0 : i32
    return %c0_i32, %c0_i32_0 : i32, i32
  }
  func.func @transform_5(%arg0: i32) -> (i32, i32) {
    %c0_i32 = arith.constant 0 : i32
    %c0_i32_0 = arith.constant 0 : i32
    %c0_i32_1 = arith.constant 0 : i32
    return %c0_i32, %c0_i32_0 : i32, i32
  }
  func.func @transform_6(%arg0: i32) -> (i32, i32) {
    %c0_i32 = arith.constant 0 : i32
    %c0_i32_0 = arith.constant 0 : i32
    %c0_i32_1 = arith.constant 0 : i32
    return %c0_i32, %c0_i32_0 : i32, i32
  }
  func.func @transform_7(%arg0: i32) -> (i32, i32) {
    %c0_i32 = arith.constant 0 : i32
    %c0_i32_0 = arith.constant 0 : i32
    %c0_i32_1 = arith.constant 0 : i32
    return %c0_i32, %c0_i32_0 : i32, i32
  }
  func.func @transform_8(%arg0: i32) -> (i32, i32) {
    %c0_i32 = arith.constant 0 : i32
    %c0_i32_0 = arith.constant 0 : i32
    %c0_i32_1 = arith.constant 0 : i32
    return %c0_i32, %c0_i32_0 : i32, i32
  }
  func.func @transform_9(%arg0: i32) -> (i32, i32) {
    %c0_i32 = arith.constant 0 : i32
    %c0_i32_0 = arith.constant 0 : i32
    %c0_i32_1 = arith.constant 0 : i32
    return %c0_i32, %c0_i32_0 : i32, i32
  }
  func.func @transform_10(%arg0: i32) -> (i32, i32) {
    %c0_i32 = arith.constant 0 : i32
    %c0_i32_0 = arith.constant 0 : i32
    %c0_i32_1 = arith.constant 0 : i32
    return %c0_i32, %c0_i32_0 : i32, i32
  }
  func.func @transform_11(%arg0: i32) -> (i32, i32) {
    %c0_i32 = arith.constant 0 : i32
    %c0_i32_0 = arith.constant 0 : i32
    %c0_i32_1 = arith.constant 0 : i32
    return %c0_i32, %c0_i32_0 : i32, i32
  }
  func.func @transform_12(%arg0: i32) -> (i32, i32) {
    %c0_i32 = arith.constant 0 : i32
    %c0_i32_0 = arith.constant 0 : i32
    %c0_i32_1 = arith.constant 0 : i32
    return %c0_i32, %c0_i32_0 : i32, i32
  }
  func.func @transform_13(%arg0: i32) -> (i32, i32) {
    %c0_i32 = arith.constant 0 : i32
    %c0_i32_0 = arith.constant 0 : i32
    %c0_i32_1 = arith.constant 0 : i32
    return %c0_i32, %c0_i32_0 : i32, i32
  }
  func.func @transform_14(%arg0: i32) -> (i32, i32) {
    %c0_i32 = arith.constant 0 : i32
    %c0_i32_0 = arith.constant 0 : i32
    %c0_i32_1 = arith.constant 0 : i32
    return %c0_i32, %c0_i32_0 : i32, i32
  }
  func.func @transform_15(%arg0: i32) -> (i32, i32) {
    %c0_i32 = arith.constant 0 : i32
    %c0_i32_0 = arith.constant 0 : i32
    %c0_i32_1 = arith.constant 0 : i32
    return %c0_i32, %c0_i32_0 : i32, i32
  }
  func.func @transform_16(%arg0: i32) -> (i32, i32) {
    %c0_i32 = arith.constant 0 : i32
    %c0_i32_0 = arith.constant 0 : i32
    %c0_i32_1 = arith.constant 0 : i32
    return %c0_i32, %c0_i32_0 : i32, i32
  }
  func.func @transform_17(%arg0: i32) -> (i32, i32, i32) {
    %c0_i32 = arith.constant 0 : i32
    %c0_i32_0 = arith.constant 0 : i32
    %c0_i32_1 = arith.constant 0 : i32
    return %arg0, %c0_i32, %c0_i32_0 : i32, i32, i32
  }
}

</mosaic_0001>

<llo_original>
// kernel: tpu_custom_call.1
$region0: #{tpu_custom_call.1}
  #allocation0 [shape = 'u32[]', space=smem, size = 0x4, offset = 0x4, fixed_abs, tag = 'smem constant byte address 0x4 - core index']
  #allocation1 [shape = 'u32[144,128]{1,0:T(1,128)}', space=vmem, size = 0x12000, scoped, tag = 'internal scratch']
  %s0 = inlined_call_operand.hbm [shape: f32[2,16,128], index: 0, kind: input, shape index: {}]
  %s1 = inlined_call_operand.vmem [shape: f32[1,128], index: 1, kind: input, shape index: {}]
  %s2 = inlined_call_operand.vmem [shape: f32[1,128], index: 2, kind: input, shape index: {}]
  %s3 = inlined_call_operand.hbm [shape: bf16[128,128], index: 3, kind: input, shape index: {}]
  %s4 = inlined_call_operand.vmem [shape: f32[1,128], index: 4, kind: input, shape index: {}]
  %s5 = inlined_call_operand.hbm [shape: bf16[128,128], index: 5, kind: input, shape index: {}]
  %s6 = inlined_call_operand.vmem [shape: f32[1,128], index: 6, kind: input, shape index: {}]
  %s7 = inlined_call_operand.hbm [shape: bf16[128,128], index: 7, kind: input, shape index: {}]
  %s8 = inlined_call_operand.vmem [shape: f32[1,128], index: 8, kind: input, shape index: {}]
  %s9 = inlined_call_operand.hbm [shape: bf16[128,128], index: 9, kind: input, shape index: {}]
  %s10 = inlined_call_operand.vmem [shape: f32[1,128], index: 10, kind: input, shape index: {}]
  %s11 = inlined_call_operand.vmem [shape: f32[1,128], index: 11, kind: input, shape index: {}]
  %s12 = inlined_call_operand.vmem [shape: f32[1,128], index: 12, kind: input, shape index: {}]
  %s13 = inlined_call_operand.hbm [shape: bf16[128,512], index: 13, kind: input, shape index: {}]
  %s14 = inlined_call_operand.vmem [shape: f32[1,512], index: 14, kind: input, shape index: {}]
  %s15 = inlined_call_operand.hbm [shape: bf16[512,128], index: 15, kind: input, shape index: {}]
  %s16 = inlined_call_operand.vmem [shape: f32[1,128], index: 16, kind: input, shape index: {}]
  %s17 = inlined_call_operand.hbm [shape: f32[2,16,128], index: 17, kind: output, shape index: {}]
  %s18 = sld [smem:[#allocation0]]
  $region106: #{tpu_custom_call.1} parent=0
    _
  %s20 = ssub.s32 1, %s18
  %s21 = scalar_select 0, %s20, %s18
  $region1: #{tpu_custom_call.1} parent=0
    #allocation2 [shape = 'u8[16384]{0}', space=vmem, size = 0x4000, scoped, tag = 'input window, operand 0, single buffered']
    #allocation3 [shape = 's32[1]{0}', space=sflag, size = 0x4, scoped, tag = 'scoped memory for tpu_custom_call.1']
    #allocation4 [shape = 's32[1]{0}', space=sflag, size = 0x4, scoped, tag = 'scoped memory for tpu_custom_call.1']
    #allocation5 [shape = 'u8[32768]{0}', space=vmem, size = 0x8000, scoped, tag = 'input window, operand 3, single buffered']
    #allocation6 [shape = 's32[1]{0}', space=sflag, size = 0x4, scoped, tag = 'scoped memory for tpu_custom_call.1']
    #allocation7 [shape = 'u8[32768]{0}', space=vmem, size = 0x8000, scoped, tag = 'input window, operand 5, single buffered']
    #allocation8 [shape = 'u8[32768]{0}', space=vmem, size = 0x8000, scoped, tag = 'input window, operand 7, single buffered']
    #allocation9 [shape = 's32[1]{0}', space=sflag, size = 0x4, scoped, tag = 'scoped memory for tpu_custom_call.1']
    #allocation10 [shape = 'u8[32768]{0}', space=vmem, size = 0x8000, scoped, tag = 'input window, operand 9, single buffered']
    #allocation11 [shape = 'u8[131072]{0}', space=vmem, size = 0x20000, scoped, tag = 'input window, operand 13, single buffered']
    #allocation12 [shape = 's32[1]{0}', space=sflag, size = 0x4, scoped, tag = 'scoped memory for tpu_custom_call.1']
    #allocation13 [shape = 'u8[131072]{0}', space=vmem, size = 0x20000, scoped, tag = 'input window, operand 15, single buffered']
    #allocation14 [shape = 'u8[16384]{0}', space=vmem, size = 0x4000, scoped, tag = 'output window, operand 0, single buffered']
    %22 = vsyncpa [#allocation3], 0
    %23 = vsyncpa [#allocation6], 0
    %24 = vsyncpa [#allocation9], 0
    %25 = vsyncpa [#allocation12], 0
    %26 = vsyncpa [#allocation4], 0
    // Predicated region
    $region2: #{tpu_custom_call.1} parent=1 // pred_check
      _
    $region3: #{tpu_custom_call.1} parent=1 // pred_check_branch
      %28 = sbr.rel (0) target = $region5
    $region4: #{tpu_custom_call.1} parent=1 // pred_region
      %s30 = ssub.s32 512, 512
      %31 = vsyncadd [#allocation3], %s30
      %s32 = sshll.u32 [#allocation2], 4
      %s33 = int_to_ptr.vmem [resolvable:$true] %s32
      %38 = dma.hbm_to_vmem [thread:$0]  %s0, 512, %s33, [#allocation3], 128, 128, 8
    $region5: #{tpu_custom_call.1} parent=1 // pred_fallthru
      _
    // Predicated region
    $region6: #{tpu_custom_call.1} parent=1 // pred_check
      _
    $region7: #{tpu_custom_call.1} parent=1 // pred_check_branch
      %40 = sbr.rel (0) target = $region9
    $region8: #{tpu_custom_call.1} parent=1 // pred_region
      _
    $region9: #{tpu_custom_call.1} parent=1 // pred_fallthru
      _
    // Predicated region
    $region10: #{tpu_custom_call.1} parent=1 // pred_check
      _
    $region11: #{tpu_custom_call.1} parent=1 // pred_check_branch
      %42 = sbr.rel (0) target = $region13
    $region12: #{tpu_custom_call.1} parent=1 // pred_region
      _
    $region13: #{tpu_custom_call.1} parent=1 // pred_fallthru
      _
    // Predicated region
    $region14: #{tpu_custom_call.1} parent=1 // pred_check
      _
    $region15: #{tpu_custom_call.1} parent=1 // pred_check_branch
      %44 = sbr.rel (0) target = $region17
    $region16: #{tpu_custom_call.1} parent=1 // pred_region
      %s46 = ssub.s32 1024, 1024
      %47 = vsyncadd [#allocation6], %s46
      %s48 = sshll.u32 [#allocation5], 4
      %s49 = int_to_ptr.vmem [resolvable:$true] %s48
      %54 = dma.hbm_to_vmem [thread:$0]  %s3, 1024, %s49, [#allocation6], 64, 64, 4
    $region17: #{tpu_custom_call.1} parent=1 // pred_fallthru
      _
    // Predicated region
    $region18: #{tpu_custom_call.1} parent=1 // pred_check
      _
    $region19: #{tpu_custom_call.1} parent=1 // pred_check_branch
      %56 = sbr.rel (0) target = $region21
    $region20: #{tpu_custom_call.1} parent=1 // pred_region
      _
    $region21: #{tpu_custom_call.1} parent=1 // pred_fallthru
      _
    // Predicated region
    $region22: #{tpu_custom_call.1} parent=1 // pred_check
      _
    $region23: #{tpu_custom_call.1} parent=1 // pred_check_branch
      %58 = sbr.rel (0) target = $region25
    $region24: #{tpu_custom_call.1} parent=1 // pred_region
      %s60 = ssub.s32 1024, 1024
      %61 = vsyncadd [#allocation6], %s60
      %s62 = sshll.u32 [#allocation7], 4
      %s63 = int_to_ptr.vmem [resolvable:$true] %s62
      %68 = dma.hbm_to_vmem [thread:$0]  %s5, 1024, %s63, [#allocation6], 64, 64, 4
    $region25: #{tpu_custom_call.1} parent=1 // pred_fallthru
      _
    // Predicated region
    $region26: #{tpu_custom_call.1} parent=1 // pred_check
      _
    $region27: #{tpu_custom_call.1} parent=1 // pred_check_branch
      %70 = sbr.rel (0) target = $region29
    $region28: #{tpu_custom_call.1} parent=1 // pred_region
      _
    $region29: #{tpu_custom_call.1} parent=1 // pred_fallthru
      _
    // Predicated region
    $region30: #{tpu_custom_call.1} parent=1 // pred_check
      _
    $region31: #{tpu_custom_call.1} parent=1 // pred_check_branch
      %72 = sbr.rel (0) target = $region33
    $region32: #{tpu_custom_call.1} parent=1 // pred_region
      %s74 = ssub.s32 1024, 1024
      %75 = vsyncadd [#allocation9], %s74
      %s76 = sshll.u32 [#allocation8], 4
      %s77 = int_to_ptr.vmem [resolvable:$true] %s76
      %82 = dma.hbm_to_vmem [thread:$0]  %s7, 1024, %s77, [#allocation9], 64, 64, 4
    $region33: #{tpu_custom_call.1} parent=1 // pred_fallthru
      _
    // Predicated region
    $region34: #{tpu_custom_call.1} parent=1 // pred_check
      _
    $region35: #{tpu_custom_call.1} parent=1 // pred_check_branch
      %84 = sbr.rel (0) target = $region37
    $region36: #{tpu_custom_call.1} parent=1 // pred_region
      _
    $region37: #{tpu_custom_call.1} parent=1 // pred_fallthru
      _
    // Predicated region
    $region38: #{tpu_custom_call.1} parent=1 // pred_check
      _
    $region39: #{tpu_custom_call.1} parent=1 // pred_check_branch
      %86 = sbr.rel (0) target = $region41
    $region40: #{tpu_custom_call.1} parent=1 // pred_region
      %s88 = ssub.s32 1024, 1024
      %89 = vsyncadd [#allocation9], %s88
      %s90 = sshll.u32 [#allocation10], 4
      %s91 = int_to_ptr.vmem [resolvable:$true] %s90
      %96 = dma.hbm_to_vmem [thread:$0]  %s9, 1024, %s91, [#allocation9], 64, 64, 4
    $region41: #{tpu_custom_call.1} parent=1 // pred_fallthru
      _
    // Predicated region
    $region42: #{tpu_custom_call.1} parent=1 // pred_check
      _
    $region43: #{tpu_custom_call.1} parent=1 // pred_check_branch
      %98 = sbr.rel (0) target = $region45
    $region44: #{tpu_custom_call.1} parent=1 // pred_region
      _
    $region45: #{tpu_custom_call.1} parent=1 // pred_fallthru
      _
    // Predicated region
    $region46: #{tpu_custom_call.1} parent=1 // pred_check
      _
    $region47: #{tpu_custom_call.1} parent=1 // pred_check_branch
      %100 = sbr.rel (0) target = $region49
    $region48: #{tpu_custom_call.1} parent=1 // pred_region
      _
    $region49: #{tpu_custom_call.1} parent=1 // pred_fallthru
      _
    // Predicated region
    $region50: #{tpu_custom_call.1} parent=1 // pred_check
      _
    $region51: #{tpu_custom_call.1} parent=1 // pred_check_branch
      %102 = sbr.rel (0) target = $region53
    $region52: #{tpu_custom_call.1} parent=1 // pred_region
      _
    $region53: #{tpu_custom_call.1} parent=1 // pred_fallthru
      _
    // Predicated region
    $region54: #{tpu_custom_call.1} parent=1 // pred_check
      _
    $region55: #{tpu_custom_call.1} parent=1 // pred_check_branch
      %104 = sbr.rel (0) target = $region57
    $region56: #{tpu_custom_call.1} parent=1 // pred_region
      %s106 = ssub.s32 4096, 4096
      %107 = vsyncadd [#allocation12], %s106
      %s108 = sshll.u32 [#allocation11], 4
      %s109 = int_to_ptr.vmem [resolvable:$true] %s108
      %114 = dma.hbm_to_vmem [thread:$0]  %s13, 4096, %s109, [#allocation12], 256, 256, 16
    $region57: #{tpu_custom_call.1} parent=1 // pred_fallthru
      _
    // Predicated region
    $region58: #{tpu_custom_call.1} parent=1 // pred_check
      _
    $region59: #{tpu_custom_call.1} parent=1 // pred_check_branch
      %116 = sbr.rel (0) target = $region61
    $region60: #{tpu_custom_call.1} parent=1 // pred_region
      _
    $region61: #{tpu_custom_call.1} parent=1 // pred_fallthru
      _
    // Predicated region
    $region62: #{tpu_custom_call.1} parent=1 // pred_check
      _
    $region63: #{tpu_custom_call.1} parent=1 // pred_check_branch
      %118 = sbr.rel (0) target = $region65
    $region64: #{tpu_custom_call.1} parent=1 // pred_region
      %s120 = ssub.s32 4096, 4096
      %121 = vsyncadd [#allocation12], %s120
      %s122 = sshll.u32 [#allocation13], 4
      %s123 = int_to_ptr.vmem [resolvable:$true] %s122
      %128 = dma.hbm_to_vmem [thread:$0]  %s15, 4096, %s123, [#allocation12], 64, 64, 4
    $region65: #{tpu_custom_call.1} parent=1 // pred_fallthru
      _
    // Predicated region
    $region66: #{tpu_custom_call.1} parent=1 // pred_check
      _
    $region67: #{tpu_custom_call.1} parent=1 // pred_check_branch
      %130 = sbr.rel (0) target = $region69
    $region68: #{tpu_custom_call.1} parent=1 // pred_region
      _
    $region69: #{tpu_custom_call.1} parent=1 // pred_fallthru
      _
    // Predicated region
    $region70: #{tpu_custom_call.1} parent=1 // pred_check
      _
    $region71: #{tpu_custom_call.1} parent=1 // pred_check_branch
      %132 = sbr.rel (0) target = $region73
    $region72: #{tpu_custom_call.1} parent=1 // pred_region
      %133 = dma.done [#allocation3], 512
    $region73: #{tpu_custom_call.1} parent=1 // pred_fallthru
      _
    // Predicated region
    $region74: #{tpu_custom_call.1} parent=1 // pred_check
      _
    $region75: #{tpu_custom_call.1} parent=1 // pred_check_branch
      %135 = sbr.rel (0) target = $region77
    $region76: #{tpu_custom_call.1} parent=1 // pred_region
      %136 = dma.done [#allocation6], 1024
    $region77: #{tpu_custom_call.1} parent=1 // pred_fallthru
      _
    // Predicated region
    $region78: #{tpu_custom_call.1} parent=1 // pred_check
      _
    $region79: #{tpu_custom_call.1} parent=1 // pred_check_branch
      %138 = sbr.rel (0) target = $region81
    $region80: #{tpu_custom_call.1} parent=1 // pred_region
      %139 = dma.done [#allocation6], 1024
    $region81: #{tpu_custom_call.1} parent=1 // pred_fallthru
      _
    // Predicated region
    $region82: #{tpu_custom_call.1} parent=1 // pred_check
      _
    $region83: #{tpu_custom_call.1} parent=1 // pred_check_branch
      %141 = sbr.rel (0) target = $region85
    $region84: #{tpu_custom_call.1} parent=1 // pred_region
      %142 = dma.done [#allocation9], 1024
    $region85: #{tpu_custom_call.1} parent=1 // pred_fallthru
      _
    // Predicated region
    $region86: #{tpu_custom_call.1} parent=1 // pred_check
      _
    $region87: #{tpu_custom_call.1} parent=1 // pred_check_branch
      %144 = sbr.rel (0) target = $region89
    $region88: #{tpu_custom_call.1} parent=1 // pred_region
      %145 = dma.done [#allocation9], 1024
    $region89: #{tpu_custom_call.1} parent=1 // pred_fallthru
      _
    // Predicated region
    $region90: #{tpu_custom_call.1} parent=1 // pred_check
      _
    $region91: #{tpu_custom_call.1} parent=1 // pred_check_branch
      %147 = sbr.rel (0) target = $region93
    $region92: #{tpu_custom_call.1} parent=1 // pred_region
      %148 = dma.done [#allocation12], 4096
    $region93: #{tpu_custom_call.1} parent=1 // pred_fallthru
      _
    // Predicated region
    $region94: #{tpu_custom_call.1} parent=1 // pred_check
      _
    $region95: #{tpu_custom_call.1} parent=1 // pred_check_branch
      %150 = sbr.rel (0) target = $region97
    $region96: #{tpu_custom_call.1} parent=1 // pred_region
      %151 = dma.done [#allocation12], 4096
    $region97: #{tpu_custom_call.1} parent=1 // pred_fallthru
      _
    %v153 = vld [vmem:[#allocation2] sm:$0xff]
    %v154 = vld [vmem:[#allocation2 + $0x8] sm:$0xff]
    %v155 = vld [vmem:[#allocation2 + $0x10] sm:$0xff]
    %v156 = vld [vmem:[#allocation2 + $0x18] sm:$0xff]
    %v157 = vld [vmem:[%s1] sm:$0x1]
    %v158 = vld [vmem:[%s2] sm:$0x1]
    %159 = vadd.xlane.f32.xlu0 %v153
    %v160 = vpop.xlane.xlu0 %159
    %161 = vadd.xlane.f32.xlu0 %v154
    %v162 = vpop.xlane.xlu0 %161
    %163 = vadd.xlane.f32.xlu0 %v155
    %v164 = vpop.xlane.xlu0 %163
    %165 = vadd.xlane.f32.xlu0 %v156
    %v166 = vpop.xlane.xlu0 %165
    %v167 = vrcp.pop 128.0
    %v168 = vmul.f32 %v160, %v167
    %v169 = vmul.f32 %v162, %v167
    %v170 = vmul.f32 %v164, %v167
    %v171 = vmul.f32 %v166, %v167
    %v172 = vsub.f32 %v153, %v168
    %v173 = vsub.f32 %v154, %v169
    %v174 = vsub.f32 %v155, %v170
    %v175 = vsub.f32 %v156, %v171
    %v176 = vmul.f32 %v172, %v172
    %v177 = vmul.f32 %v173, %v173
    %v178 = vmul.f32 %v174, %v174
    %v179 = vmul.f32 %v175, %v175
    %180 = vadd.xlane.f32.xlu0 %v176
    %v181 = vpop.xlane.xlu0 %180
    %182 = vadd.xlane.f32.xlu0 %v177
    %v183 = vpop.xlane.xlu0 %182
    %184 = vadd.xlane.f32.xlu0 %v178
    %v185 = vpop.xlane.xlu0 %184
    %186 = vadd.xlane.f32.xlu0 %v179
    %v187 = vpop.xlane.xlu0 %186
    %v188 = vmul.f32 %v181, %v167
    %v189 = vmul.f32 %v183, %v167
    %v190 = vmul.f32 %v185, %v167
    %v191 = vmul.f32 %v187, %v167
    %v192 = vadd.f32 %v188, 1e-05
    %v193 = vadd.f32 %v189, 1e-05
    %v194 = vadd.f32 %v190, 1e-05
    %v195 = vadd.f32 %v191, 1e-05
    %v196 = vrsqrt.pop %v192
    %v197 = vrsqrt.pop %v193
    %v198 = vrsqrt.pop %v194
    %v199 = vrsqrt.pop %v195
    %v200 = vmul.f32 %v172, %v196
    %v201 = vmul.f32 %v173, %v197
    %v202 = vmul.f32 %v174, %v198
    %v203 = vmul.f32 %v175, %v199
    %v205 = vlaneseq
    %v206 = vshrl.u32 %v205, 7
    %v207 = vsub.s32 0, %v206
    %v208 = vrot.slane %v157, %v207
    %v210 = vmul.f32 %v200, %v208
    %v211 = vmul.f32 %v201, %v208
    %v212 = vmul.f32 %v202, %v208
    %v213 = vmul.f32 %v203, %v208
    %v215 = vlaneseq
    %v216 = vshrl.u32 %v215, 7
    %v217 = vsub.s32 0, %v216
    %v218 = vrot.slane %v158, %v217
    %v220 = vadd.f32 %v210, %v218
    %v221 = vadd.f32 %v211, %v218
    %v222 = vadd.f32 %v212, %v218
    %v223 = vadd.f32 %v213, %v218
    %v224 = vpack.c.bf16 %v221, %v220
    %v225 = vpack.c.bf16 %v223, %v222
    %v226 = vld [vmem:[#allocation5] sm:$0xf]
    %v227 = vld [vmem:[#allocation5 + $0x4] sm:$0xf]
    %v228 = vld [vmem:[#allocation5 + $0x8] sm:$0xf]
    %v229 = vld [vmem:[#allocation5 + $0xc] sm:$0xf]
    %v230 = vld [vmem:[#allocation5 + $0x10] sm:$0xf]
    %v231 = vld [vmem:[#allocation5 + $0x14] sm:$0xf]
    %v232 = vld [vmem:[#allocation5 + $0x18] sm:$0xf]
    %v233 = vld [vmem:[#allocation5 + $0x1c] sm:$0xf]
    %v234 = vld [vmem:[#allocation5 + $0x20] sm:$0xf]
    %v235 = vld [vmem:[#allocation5 + $0x24] sm:$0xf]
    %v236 = vld [vmem:[#allocation5 + $0x28] sm:$0xf]
    %v237 = vld [vmem:[#allocation5 + $0x2c] sm:$0xf]
    %v238 = vld [vmem:[#allocation5 + $0x30] sm:$0xf]
    %v239 = vld [vmem:[#allocation5 + $0x34] sm:$0xf]
    %v240 = vld [vmem:[#allocation5 + $0x38] sm:$0xf]
    %v241 = vld [vmem:[#allocation5 + $0x3c] sm:$0xf]
    %v242 = vld [vmem:[%s4] sm:$0x1]
    %v244 = vlaneseq
    %v245 = vshrl.u32 %v244, 7
    %v246 = vsub.s32 0, %v245
    %v247 = vrot.slane %v242, %v246
    %v265 = vunpack.c.l.b16 %v226
    %v266 = vunpack.c.l.b16 %v227
    %v267 = vunpack.c.l.b16 %v228
    %v268 = vunpack.c.l.b16 %v229
    %v269 = vunpack.c.l.b16 %v230
    %v270 = vunpack.c.l.b16 %v231
    %v271 = vunpack.c.l.b16 %v232
    %v272 = vunpack.c.l.b16 %v233
    %v273 = vunpack.c.l.b16 %v234
    %v274 = vunpack.c.l.b16 %v235
    %v275 = vunpack.c.l.b16 %v236
    %v276 = vunpack.c.l.b16 %v237
    %v277 = vunpack.c.l.b16 %v238
    %v278 = vunpack.c.l.b16 %v239
    %v279 = vunpack.c.l.b16 %v240
    %v280 = vunpack.c.l.b16 %v241
    %v281 = vpack.c.b16 %v266, %v265
    %v282 = vpack.c.b16 %v268, %v267
    %v283 = vpack.c.b16 %v270, %v269
    %v284 = vpack.c.b16 %v272, %v271
    %v285 = vpack.c.b16 %v274, %v273
    %v286 = vpack.c.b16 %v276, %v275
    %v287 = vpack.c.b16 %v278, %v277
    %v288 = vpack.c.b16 %v280, %v279
    %297 = vmatprep.subr.bf16.mxu0 0
    %298 = vmatpush1.bf16.msra.mxu0 %v281
    %299 = vmatprep.subr.bf16.mxu0 0
    %300 = vmatpush1.bf16.msra.mxu0 %v282
    %301 = vmatprep.subr.bf16.mxu0 0
    %302 = vmatpush1.bf16.msra.mxu0 %v283
    %303 = vmatprep.subr.bf16.mxu0 0
    %304 = vmatpush1.bf16.msra.mxu0 %v284
    %305 = vmatprep.subr.bf16.mxu0 0
    %306 = vmatpush1.bf16.msra.mxu0 %v285
    %307 = vmatprep.subr.bf16.mxu0 0
    %308 = vmatpush1.bf16.msra.mxu0 %v286
    %309 = vmatprep.subr.bf16.mxu0 0
    %310 = vmatpush1.bf16.msra.mxu0 %v287
    %311 = vmatprep.subr.bf16.mxu0 0
    %312 = vmatpush1.bf16.msra.mxu0 %v288
    %313 = vmatprep.subr.bf16.mxu0 0
    %314 = vmatpush1.bf16.msra.mxu0 0
    %315 = vmatprep.subr.bf16.mxu0 0
    %316 = vmatpush1.bf16.msra.mxu0 0
    %317 = vmatprep.subr.bf16.mxu0 0
    %318 = vmatpush1.bf16.msra.mxu0 0
    %319 = vmatprep.subr.bf16.mxu0 0
    %320 = vmatpush1.bf16.msra.mxu0 0
    %321 = vmatprep.subr.bf16.mxu0 0
    %322 = vmatpush1.bf16.msra.mxu0 0
    %323 = vmatprep.subr.bf16.mxu0 0
    %324 = vmatpush1.bf16.msra.mxu0 0
    %325 = vmatprep.subr.bf16.mxu0 0
    %326 = vmatpush1.bf16.msra.mxu0 0
    %327 = vmatprep.subr.bf16.mxu0 0
    %328 = vmatpush1.bf16.msra.mxu0 0
    %329 = vmatprep.mubr.bf16.mxu0 0
    %330 = vmatmul.mubr.bf16.gmra.mrb[0].mxu0 %v224
    %v331 = vpop.f32.mrb[0].mxu0
    %v332 = vadd.f32 %v247, %v331
    %v333 = vpop.f32.mrb[0].mxu0
    %v334 = vpop.f32.mrb[0].mxu0
    %v335 = vadd.f32 %v247, %v334
    %v336 = vpop.f32.mrb[0].mxu0
    %337 = vmatprep.mubr.bf16.mxu0 0
    %338 = vmatmul.mubr.bf16.gmra.mrb[0].mxu0 %v225
    %v339 = vpop.f32.mrb[0].mxu0
    %v340 = vadd.f32 %v247, %v339
    %v341 = vpop.f32.mrb[0].mxu0
    %v342 = vpop.f32.mrb[0].mxu0
    %v343 = vadd.f32 %v247, %v342
    %v344 = vpop.f32.mrb[0].mxu0
    %345 = vdwg.mxu0
    %v346 = vld [vmem:[#allocation7] sm:$0xf]
    %v347 = vld [vmem:[#allocation7 + $0x4] sm:$0xf]
    %v348 = vld [vmem:[#allocation7 + $0x8] sm:$0xf]
    %v349 = vld [vmem:[#allocation7 + $0xc] sm:$0xf]
    %v350 = vld [vmem:[#allocation7 + $0x10] sm:$0xf]
    %v351 = vld [vmem:[#allocation7 + $0x14] sm:$0xf]
    %v352 = vld [vmem:[#allocation7 + $0x18] sm:$0xf]
    %v353 = vld [vmem:[#allocation7 + $0x1c] sm:$0xf]
    %v354 = vld [vmem:[#allocation7 + $0x20] sm:$0xf]
    %v355 = vld [vmem:[#allocation7 + $0x24] sm:$0xf]
    %v356 = vld [vmem:[#allocation7 + $0x28] sm:$0xf]
    %v357 = vld [vmem:[#allocation7 + $0x2c] sm:$0xf]
    %v358 = vld [vmem:[#allocation7 + $0x30] sm:$0xf]
    %v359 = vld [vmem:[#allocation7 + $0x34] sm:$0xf]
    %v360 = vld [vmem:[#allocation7 + $0x38] sm:$0xf]
    %v361 = vld [vmem:[#allocation7 + $0x3c] sm:$0xf]
    %v362 = vld [vmem:[%s6] sm:$0x1]
    %v364 = vlaneseq
    %v365 = vshrl.u32 %v364, 7
    %v366 = vsub.s32 0, %v365
    %v367 = vrot.slane %v362, %v366
    %v385 = vunpack.c.l.b16 %v346
    %v386 = vunpack.c.l.b16 %v347
    %v387 = vunpack.c.l.b16 %v348
    %v388 = vunpack.c.l.b16 %v349
    %v389 = vunpack.c.l.b16 %v350
    %v390 = vunpack.c.l.b16 %v351
    %v391 = vunpack.c.l.b16 %v352
    %v392 = vunpack.c.l.b16 %v353
    %v393 = vunpack.c.l.b16 %v354
    %v394 = vunpack.c.l.b16 %v355
    %v395 = vunpack.c.l.b16 %v356
    %v396 = vunpack.c.l.b16 %v357
    %v397 = vunpack.c.l.b16 %v358
    %v398 = vunpack.c.l.b16 %v359
    %v399 = vunpack.c.l.b16 %v360
    %v400 = vunpack.c.l.b16 %v361
    %v401 = vpack.c.b16 %v386, %v385
    %v402 = vpack.c.b16 %v388, %v387
    %v403 = vpack.c.b16 %v390, %v389
    %v404 = vpack.c.b16 %v392, %v391
    %v405 = vpack.c.b16 %v394, %v393
    %v406 = vpack.c.b16 %v396, %v395
    %v407 = vpack.c.b16 %v398, %v397
    %v408 = vpack.c.b16 %v400, %v399
    %417 = vmatprep.subr.bf16.mxu0 0
    %418 = vmatpush1.bf16.msra.mxu0 %v401
    %419 = vmatprep.subr.bf16.mxu0 0
    %420 = vmatpush1.bf16.msra.mxu0 %v402
    %421 = vmatprep.subr.bf16.mxu0 0
    %422 = vmatpush1.bf16.msra.mxu0 %v403
    %423 = vmatprep.subr.bf16.mxu0 0
    %424 = vmatpush1.bf16.msra.mxu0 %v404
    %425 = vmatprep.subr.bf16.mxu0 0
    %426 = vmatpush1.bf16.msra.mxu0 %v405
    %427 = vmatprep.subr.bf16.mxu0 0
    %428 = vmatpush1.bf16.msra.mxu0 %v406
    %429 = vmatprep.subr.bf16.mxu0 0
    %430 = vmatpush1.bf16.msra.mxu0 %v407
    %431 = vmatprep.subr.bf16.mxu0 0
    %432 = vmatpush1.bf16.msra.mxu0 %v408
    %433 = vmatprep.subr.bf16.mxu0 0
    %434 = vmatpush1.bf16.msra.mxu0 0
    %435 = vmatprep.subr.bf16.mxu0 0
    %436 = vmatpush1.bf16.msra.mxu0 0
    %437 = vmatprep.subr.bf16.mxu0 0
    %438 = vmatpush1.bf16.msra.mxu0 0
    %439 = vmatprep.subr.bf16.mxu0 0
    %440 = vmatpush1.bf16.msra.mxu0 0
    %441 = vmatprep.subr.bf16.mxu0 0
    %442 = vmatpush1.bf16.msra.mxu0 0
    %443 = vmatprep.subr.bf16.mxu0 0
    %444 = vmatpush1.bf16.msra.mxu0 0
    %445 = vmatprep.subr.bf16.mxu0 0
    %446 = vmatpush1.bf16.msra.mxu0 0
    %447 = vmatprep.subr.bf16.mxu0 0
    %448 = vmatpush1.bf16.msra.mxu0 0
    %449 = vmatprep.mubr.bf16.mxu0 0
    %450 = vmatmul.mubr.bf16.gmra.mrb[0].mxu0 %v224
    %v451 = vpop.f32.mrb[0].mxu0
    %v452 = vadd.f32 %v367, %v451
    %v453 = vpop.f32.mrb[0].mxu0
    %v454 = vpop.f32.mrb[0].mxu0
    %v455 = vadd.f32 %v367, %v454
    %v456 = vpop.f32.mrb[0].mxu0
    %457 = vmatprep.mubr.bf16.mxu0 0
    %458 = vmatmul.mubr.bf16.gmra.mrb[0].mxu0 %v225
    %v459 = vpop.f32.mrb[0].mxu0
    %v460 = vadd.f32 %v367, %v459
    %v461 = vpop.f32.mrb[0].mxu0
    %v462 = vpop.f32.mrb[0].mxu0
    %v463 = vadd.f32 %v367, %v462
    %v464 = vpop.f32.mrb[0].mxu0
    %465 = vdwg.mxu0
    %v466 = vld [vmem:[#allocation8] sm:$0xf]
    %v467 = vld [vmem:[#allocation8 + $0x4] sm:$0xf]
    %v468 = vld [vmem:[#allocation8 + $0x8] sm:$0xf]
    %v469 = vld [vmem:[#allocation8 + $0xc] sm:$0xf]
    %v470 = vld [vmem:[#allocation8 + $0x10] sm:$0xf]
    %v471 = vld [vmem:[#allocation8 + $0x14] sm:$0xf]
    %v472 = vld [vmem:[#allocation8 + $0x18] sm:$0xf]
    %v473 = vld [vmem:[#allocation8 + $0x1c] sm:$0xf]
    %v474 = vld [vmem:[#allocation8 + $0x20] sm:$0xf]
    %v475 = vld [vmem:[#allocation8 + $0x24] sm:$0xf]
    %v476 = vld [vmem:[#allocation8 + $0x28] sm:$0xf]
    %v477 = vld [vmem:[#allocation8 + $0x2c] sm:$0xf]
    %v478 = vld [vmem:[#allocation8 + $0x30] sm:$0xf]
    %v479 = vld [vmem:[#allocation8 + $0x34] sm:$0xf]
    %v480 = vld [vmem:[#allocation8 + $0x38] sm:$0xf]
    %v481 = vld [vmem:[#allocation8 + $0x3c] sm:$0xf]
    %v482 = vld [vmem:[%s8] sm:$0x1]
    %v484 = vlaneseq
    %v485 = vshrl.u32 %v484, 7
    %v486 = vsub.s32 0, %v485
    %v487 = vrot.slane %v482, %v486
    %v505 = vunpack.c.l.b16 %v466
    %v506 = vunpack.c.l.b16 %v467
    %v507 = vunpack.c.l.b16 %v468
    %v508 = vunpack.c.l.b16 %v469
    %v509 = vunpack.c.l.b16 %v470
    %v510 = vunpack.c.l.b16 %v471
    %v511 = vunpack.c.l.b16 %v472
    %v512 = vunpack.c.l.b16 %v473
    %v513 = vunpack.c.l.b16 %v474
    %v514 = vunpack.c.l.b16 %v475
    %v515 = vunpack.c.l.b16 %v476
    %v516 = vunpack.c.l.b16 %v477
    %v517 = vunpack.c.l.b16 %v478
    %v518 = vunpack.c.l.b16 %v479
    %v519 = vunpack.c.l.b16 %v480
    %v520 = vunpack.c.l.b16 %v481
    %v521 = vpack.c.b16 %v506, %v505
    %v522 = vpack.c.b16 %v508, %v507
    %v523 = vpack.c.b16 %v510, %v509
    %v524 = vpack.c.b16 %v512, %v511
    %v525 = vpack.c.b16 %v514, %v513
    %v526 = vpack.c.b16 %v516, %v515
    %v527 = vpack.c.b16 %v518, %v517
    %v528 = vpack.c.b16 %v520, %v519
    %537 = vmatprep.subr.bf16.mxu0 0
    %538 = vmatpush1.bf16.msra.mxu0 %v521
    %539 = vmatprep.subr.bf16.mxu0 0
    %540 = vmatpush1.bf16.msra.mxu0 %v522
    %541 = vmatprep.subr.bf16.mxu0 0
    %542 = vmatpush1.bf16.msra.mxu0 %v523
    %543 = vmatprep.subr.bf16.mxu0 0
    %544 = vmatpush1.bf16.msra.mxu0 %v524
    %545 = vmatprep.subr.bf16.mxu0 0
    %546 = vmatpush1.bf16.msra.mxu0 %v525
    %547 = vmatprep.subr.bf16.mxu0 0
    %548 = vmatpush1.bf16.msra.mxu0 %v526
    %549 = vmatprep.subr.bf16.mxu0 0
    %550 = vmatpush1.bf16.msra.mxu0 %v527
    %551 = vmatprep.subr.bf16.mxu0 0
    %552 = vmatpush1.bf16.msra.mxu0 %v528
    %553 = vmatprep.subr.bf16.mxu0 0
    %554 = vmatpush1.bf16.msra.mxu0 0
    %555 = vmatprep.subr.bf16.mxu0 0
    %556 = vmatpush1.bf16.msra.mxu0 0
    %557 = vmatprep.subr.bf16.mxu0 0
    %558 = vmatpush1.bf16.msra.mxu0 0
    %559 = vmatprep.subr.bf16.mxu0 0
    %560 = vmatpush1.bf16.msra.mxu0 0
    %561 = vmatprep.subr.bf16.mxu0 0
    %562 = vmatpush1.bf16.msra.mxu0 0
    %563 = vmatprep.subr.bf16.mxu0 0
    %564 = vmatpush1.bf16.msra.mxu0 0
    %565 = vmatprep.subr.bf16.mxu0 0
    %566 = vmatpush1.bf16.msra.mxu0 0
    %567 = vmatprep.subr.bf16.mxu0 0
    %568 = vmatpush1.bf16.msra.mxu0 0
    %569 = vmatprep.mubr.bf16.mxu0 0
    %570 = vmatmul.mubr.bf16.gmra.mrb[0].mxu0 %v224
    %v571 = vpop.f32.mrb[0].mxu0
    %v572 = vadd.f32 %v487, %v571
    %v573 = vpop.f32.mrb[0].mxu0
    %v574 = vpop.f32.mrb[0].mxu0
    %v575 = vadd.f32 %v487, %v574
    %v576 = vpop.f32.mrb[0].mxu0
    %577 = vmatprep.mubr.bf16.mxu0 0
    %578 = vmatmul.mubr.bf16.gmra.mrb[0].mxu0 %v225
    %v579 = vpop.f32.mrb[0].mxu0
    %v580 = vadd.f32 %v487, %v579
    %v581 = vpop.f32.mrb[0].mxu0
    %v582 = vpop.f32.mrb[0].mxu0
    %v583 = vadd.f32 %v487, %v582
    %v584 = vpop.f32.mrb[0].mxu0
    %585 = vdwg.mxu0
    %v586 = vmul.f32 %v332, 0.25
    %v587 = vmul.f32 %v335, 0.25
    %v588 = vmul.f32 %v340, 0.25
    %v589 = vmul.f32 %v343, 0.25
    %594 = vrot.lane.b32.xlu0 %v586, 112
    %v595 = vpop.permute.xlu0 %594
    %596 = vrot.lane.b32.xlu0 %v587, 112
    %v597 = vpop.permute.xlu0 %596
    %598 = vrot.lane.b32.xlu0 %v588, 112
    %v599 = vpop.permute.xlu0 %598
    %600 = vrot.lane.b32.xlu0 %v589, 112
    %v601 = vpop.permute.xlu0 %600
    %606 = vrot.lane.b32.xlu0 %v586, 96
    %v607 = vpop.permute.xlu0 %606
    %608 = vrot.lane.b32.xlu0 %v587, 96
    %v609 = vpop.permute.xlu0 %608
    %610 = vrot.lane.b32.xlu0 %v588, 96
    %v611 = vpop.permute.xlu0 %610
    %612 = vrot.lane.b32.xlu0 %v589, 96
    %v613 = vpop.permute.xlu0 %612
    %618 = vrot.lane.b32.xlu0 %v586, 80
    %v619 = vpop.permute.xlu0 %618
    %620 = vrot.lane.b32.xlu0 %v587, 80
    %v621 = vpop.permute.xlu0 %620
    %622 = vrot.lane.b32.xlu0 %v588, 80
    %v623 = vpop.permute.xlu0 %622
    %624 = vrot.lane.b32.xlu0 %v589, 80
    %v625 = vpop.permute.xlu0 %624
    %630 = vrot.lane.b32.xlu0 %v586, 64
    %v631 = vpop.permute.xlu0 %630
    %632 = vrot.lane.b32.xlu0 %v587, 64
    %v633 = vpop.permute.xlu0 %632
    %634 = vrot.lane.b32.xlu0 %v588, 64
    %v635 = vpop.permute.xlu0 %634
    %636 = vrot.lane.b32.xlu0 %v589, 64
    %v637 = vpop.permute.xlu0 %636
    %642 = vrot.lane.b32.xlu0 %v586, 48
    %v643 = vpop.permute.xlu0 %642
    %644 = vrot.lane.b32.xlu0 %v587, 48
    %v645 = vpop.permute.xlu0 %644
    %646 = vrot.lane.b32.xlu0 %v588, 48
    %v647 = vpop.permute.xlu0 %646
    %648 = vrot.lane.b32.xlu0 %v589, 48
    %v649 = vpop.permute.xlu0 %648
    %654 = vrot.lane.b32.xlu0 %v586, 32
    %v655 = vpop.permute.xlu0 %654
    %656 = vrot.lane.b32.xlu0 %v587, 32
    %v657 = vpop.permute.xlu0 %656
    %658 = vrot.lane.b32.xlu0 %v588, 32
    %v659 = vpop.permute.xlu0 %658
    %660 = vrot.lane.b32.xlu0 %v589, 32
    %v661 = vpop.permute.xlu0 %660
    %666 = vrot.lane.b32.xlu0 %v586, 16
    %v667 = vpop.permute.xlu0 %666
    %668 = vrot.lane.b32.xlu0 %v587, 16
    %v669 = vpop.permute.xlu0 %668
    %670 = vrot.lane.b32.xlu0 %v588, 16
    %v671 = vpop.permute.xlu0 %670
    %672 = vrot.lane.b32.xlu0 %v589, 16
    %v673 = vpop.permute.xlu0 %672
    %v678 = vpack.c.bf16 %v587, %v586
    %v679 = vpack.c.bf16 %v589, %v588
    %v680 = vpack.c.bf16 %v597, %v595
    %v681 = vpack.c.bf16 %v601, %v599
    %v682 = vpack.c.bf16 %v609, %v607
    %v683 = vpack.c.bf16 %v613, %v611
    %v684 = vpack.c.bf16 %v621, %v619
    %v685 = vpack.c.bf16 %v625, %v623
    %v686 = vpack.c.bf16 %v633, %v631
    %v687 = vpack.c.bf16 %v637, %v635
    %v688 = vpack.c.bf16 %v645, %v643
    %v689 = vpack.c.bf16 %v649, %v647
    %v690 = vpack.c.bf16 %v657, %v655
    %v691 = vpack.c.bf16 %v661, %v659
    %v692 = vpack.c.bf16 %v669, %v667
    %v693 = vpack.c.bf16 %v673, %v671
    %698 = vrot.lane.b32.xlu0 %v452, 112
    %v699 = vpop.permute.xlu0 %698
    %700 = vrot.lane.b32.xlu0 %v455, 112
    %v701 = vpop.permute.xlu0 %700
    %702 = vrot.lane.b32.xlu0 %v460, 112
    %v703 = vpop.permute.xlu0 %702
    %704 = vrot.lane.b32.xlu0 %v463, 112
    %v705 = vpop.permute.xlu0 %704
    %710 = vrot.lane.b32.xlu0 %v452, 96
    %v711 = vpop.permute.xlu0 %710
    %712 = vrot.lane.b32.xlu0 %v455, 96
    %v713 = vpop.permute.xlu0 %712
    %714 = vrot.lane.b32.xlu0 %v460, 96
    %v715 = vpop.permute.xlu0 %714
    %716 = vrot.lane.b32.xlu0 %v463, 96
    %v717 = vpop.permute.xlu0 %716
    %722 = vrot.lane.b32.xlu0 %v452, 80
    %v723 = vpop.permute.xlu0 %722
    %724 = vrot.lane.b32.xlu0 %v455, 80
    %v725 = vpop.permute.xlu0 %724
    %726 = vrot.lane.b32.xlu0 %v460, 80
    %v727 = vpop.permute.xlu0 %726
    %728 = vrot.lane.b32.xlu0 %v463, 80
    %v729 = vpop.permute.xlu0 %728
    %734 = vrot.lane.b32.xlu0 %v452, 64
    %v735 = vpop.permute.xlu0 %734
    %736 = vrot.lane.b32.xlu0 %v455, 64
    %v737 = vpop.permute.xlu0 %736
    %738 = vrot.lane.b32.xlu0 %v460, 64
    %v739 = vpop.permute.xlu0 %738
    %740 = vrot.lane.b32.xlu0 %v463, 64
    %v741 = vpop.permute.xlu0 %740
    %746 = vrot.lane.b32.xlu0 %v452, 48
    %v747 = vpop.permute.xlu0 %746
    %748 = vrot.lane.b32.xlu0 %v455, 48
    %v749 = vpop.permute.xlu0 %748
    %750 = vrot.lane.b32.xlu0 %v460, 48
    %v751 = vpop.permute.xlu0 %750
    %752 = vrot.lane.b32.xlu0 %v463, 48
    %v753 = vpop.permute.xlu0 %752
    %758 = vrot.lane.b32.xlu0 %v452, 32
    %v759 = vpop.permute.xlu0 %758
    %760 = vrot.lane.b32.xlu0 %v455, 32
    %v761 = vpop.permute.xlu0 %760
    %762 = vrot.lane.b32.xlu0 %v460, 32
    %v763 = vpop.permute.xlu0 %762
    %764 = vrot.lane.b32.xlu0 %v463, 32
    %v765 = vpop.permute.xlu0 %764
    %770 = vrot.lane.b32.xlu0 %v452, 16
    %v771 = vpop.permute.xlu0 %770
    %772 = vrot.lane.b32.xlu0 %v455, 16
    %v773 = vpop.permute.xlu0 %772
    %774 = vrot.lane.b32.xlu0 %v460, 16
    %v775 = vpop.permute.xlu0 %774
    %776 = vrot.lane.b32.xlu0 %v463, 16
    %v777 = vpop.permute.xlu0 %776
    %v782 = vpack.c.bf16 %v455, %v452
    %v783 = vpack.c.bf16 %v463, %v460
    %v784 = vpack.c.bf16 %v701, %v699
    %v785 = vpack.c.bf16 %v705, %v703
    %v786 = vpack.c.bf16 %v713, %v711
    %v787 = vpack.c.bf16 %v717, %v715
    %v788 = vpack.c.bf16 %v725, %v723
    %v789 = vpack.c.bf16 %v729, %v727
    %v790 = vpack.c.bf16 %v737, %v735
    %v791 = vpack.c.bf16 %v741, %v739
    %v792 = vpack.c.bf16 %v749, %v747
    %v793 = vpack.c.bf16 %v753, %v751
    %v794 = vpack.c.bf16 %v761, %v759
    %v795 = vpack.c.bf16 %v765, %v763
    %v796 = vpack.c.bf16 %v773, %v771
    %v797 = vpack.c.bf16 %v777, %v775
    %802 = vrot.lane.b32.xlu0 %v572, 112
    %v803 = vpop.permute.xlu0 %802
    %804 = vrot.lane.b32.xlu0 %v575, 112
    %v805 = vpop.permute.xlu0 %804
    %806 = vrot.lane.b32.xlu0 %v580, 112
    %v807 = vpop.permute.xlu0 %806
    %808 = vrot.lane.b32.xlu0 %v583, 112
    %v809 = vpop.permute.xlu0 %808
    %814 = vrot.lane.b32.xlu0 %v572, 96
    %v815 = vpop.permute.xlu0 %814
    %816 = vrot.lane.b32.xlu0 %v575, 96
    %v817 = vpop.permute.xlu0 %816
    %818 = vrot.lane.b32.xlu0 %v580, 96
    %v819 = vpop.permute.xlu0 %818
    %820 = vrot.lane.b32.xlu0 %v583, 96
    %v821 = vpop.permute.xlu0 %820
    %826 = vrot.lane.b32.xlu0 %v572, 80
    %v827 = vpop.permute.xlu0 %826
    %828 = vrot.lane.b32.xlu0 %v575, 80
    %v829 = vpop.permute.xlu0 %828
    %830 = vrot.lane.b32.xlu0 %v580, 80
    %v831 = vpop.permute.xlu0 %830
    %832 = vrot.lane.b32.xlu0 %v583, 80
    %v833 = vpop.permute.xlu0 %832
    %838 = vrot.lane.b32.xlu0 %v572, 64
    %v839 = vpop.permute.xlu0 %838
    %840 = vrot.lane.b32.xlu0 %v575, 64
    %v841 = vpop.permute.xlu0 %840
    %842 = vrot.lane.b32.xlu0 %v580, 64
    %v843 = vpop.permute.xlu0 %842
    %844 = vrot.lane.b32.xlu0 %v583, 64
    %v845 = vpop.permute.xlu0 %844
    %850 = vrot.lane.b32.xlu0 %v572, 48
    %v851 = vpop.permute.xlu0 %850
    %852 = vrot.lane.b32.xlu0 %v575, 48
    %v853 = vpop.permute.xlu0 %852
    %854 = vrot.lane.b32.xlu0 %v580, 48
    %v855 = vpop.permute.xlu0 %854
    %856 = vrot.lane.b32.xlu0 %v583, 48
    %v857 = vpop.permute.xlu0 %856
    %862 = vrot.lane.b32.xlu0 %v572, 32
    %v863 = vpop.permute.xlu0 %862
    %864 = vrot.lane.b32.xlu0 %v575, 32
    %v865 = vpop.permute.xlu0 %864
    %866 = vrot.lane.b32.xlu0 %v580, 32
    %v867 = vpop.permute.xlu0 %866
    %868 = vrot.lane.b32.xlu0 %v583, 32
    %v869 = vpop.permute.xlu0 %868
    %874 = vrot.lane.b32.xlu0 %v572, 16
    %v875 = vpop.permute.xlu0 %874
    %876 = vrot.lane.b32.xlu0 %v575, 16
    %v877 = vpop.permute.xlu0 %876
    %878 = vrot.lane.b32.xlu0 %v580, 16
    %v879 = vpop.permute.xlu0 %878
    %880 = vrot.lane.b32.xlu0 %v583, 16
    %v881 = vpop.permute.xlu0 %880
    %v886 = vpack.c.bf16 %v575, %v572
    %v887 = vpack.c.bf16 %v583, %v580
    %v888 = vpack.c.bf16 %v805, %v803
    %v889 = vpack.c.bf16 %v809, %v807
    %v890 = vpack.c.bf16 %v817, %v815
    %v891 = vpack.c.bf16 %v821, %v819
    %v892 = vpack.c.bf16 %v829, %v827
    %v893 = vpack.c.bf16 %v833, %v831
    %v894 = vpack.c.bf16 %v841, %v839
    %v895 = vpack.c.bf16 %v845, %v843
    %v896 = vpack.c.bf16 %v853, %v851
    %v897 = vpack.c.bf16 %v857, %v855
    %v898 = vpack.c.bf16 %v865, %v863
    %v899 = vpack.c.bf16 %v869, %v867
    %v900 = vpack.c.bf16 %v877, %v875
    %v901 = vpack.c.bf16 %v881, %v879
    %vm902 = vcmask 130048
    %v904 = vsel %vm902, %v678, 0
    %v907 = vsel %vm902, %v782, 0
    %909 = vmatprep.subr.bf16.mxu0 0
    %910 = vmatpush1.bf16.xpose.msra.mxu0 %v907
    %911 = vmatprep.subr.bf16.mxu0 0
    %912 = vmatpush1.bf16.xpose.msra.mxu0 0
    %913 = vmatprep.subr.bf16.mxu0 0
    %914 = vmatpush1.bf16.xpose.msra.mxu0 0
    %915 = vmatprep.subr.bf16.mxu0 0
    %916 = vmatpush1.bf16.xpose.msra.mxu0 0
    %917 = vmatprep.subr.bf16.mxu0 0
    %918 = vmatpush1.bf16.xpose.msra.mxu0 0
    %919 = vmatprep.subr.bf16.mxu0 0
    %920 = vmatpush1.bf16.xpose.msra.mxu0 0
    %921 = vmatprep.subr.bf16.mxu0 0
    %922 = vmatpush1.bf16.xpose.msra.mxu0 0
    %923 = vmatprep.subr.bf16.mxu0 0
    %924 = vmatpush1.bf16.xpose.msra.mxu0 0
    %925 = vmatprep.subr.bf16.mxu0 0
    %926 = vmatpush1.bf16.xpose.msra.mxu0 0
    %927 = vmatprep.subr.bf16.mxu0 0
    %928 = vmatpush1.bf16.xpose.msra.mxu0 0
    %929 = vmatprep.subr.bf16.mxu0 0
    %930 = vmatpush1.bf16.xpose.msra.mxu0 0
    %931 = vmatprep.subr.bf16.mxu0 0
    %932 = vmatpush1.bf16.xpose.msra.mxu0 0
    %933 = vmatprep.subr.bf16.mxu0 0
    %934 = vmatpush1.bf16.xpose.msra.mxu0 0
    %935 = vmatprep.subr.bf16.mxu0 0
    %936 = vmatpush1.bf16.xpose.msra.mxu0 0
    %937 = vmatprep.subr.bf16.mxu0 0
    %938 = vmatpush1.bf16.xpose.msra.mxu0 0
    %939 = vmatprep.subr.bf16.mxu0 0
    %940 = vmatpush1.bf16.xpose.msra.mxu0 0
    %941 = vmatprep.mubr.bf16.mxu0 0
    %942 = vmatmul.mubr.bf16.gmra.mrb[0].mxu0 %v904
    %v943 = vpop.f32.mrb[0].mxu0
    %v944 = vadd.f32 0.0, %v943
    %v945 = vpop.f32.mrb[0].mxu0
    %v946 = vpop.f32.mrb[0].mxu0
    %v947 = vadd.f32 0.0, %v946
    %v948 = vpop.f32.mrb[0].mxu0
    %949 = vdwg.mxu0
    %v951 = vsel %vm902, %v679, 0
    %v954 = vsel %vm902, %v783, 0
    %956 = vmatprep.subr.bf16.mxu0 0
    %957 = vmatpush1.bf16.xpose.msra.mxu0 %v954
    %958 = vmatprep.subr.bf16.mxu0 0
    %959 = vmatpush1.bf16.xpose.msra.mxu0 0
    %960 = vmatprep.subr.bf16.mxu0 0
    %961 = vmatpush1.bf16.xpose.msra.mxu0 0
    %962 = vmatprep.subr.bf16.mxu0 0
    %963 = vmatpush1.bf16.xpose.msra.mxu0 0
    %964 = vmatprep.subr.bf16.mxu0 0
    %965 = vmatpush1.bf16.xpose.msra.mxu0 0
    %966 = vmatprep.subr.bf16.mxu0 0
    %967 = vmatpush1.bf16.xpose.msra.mxu0 0
    %968 = vmatprep.subr.bf16.mxu0 0
    %969 = vmatpush1.bf16.xpose.msra.mxu0 0
    %970 = vmatprep.subr.bf16.mxu0 0
    %971 = vmatpush1.bf16.xpose.msra.mxu0 0
    %972 = vmatprep.subr.bf16.mxu0 0
    %973 = vmatpush1.bf16.xpose.msra.mxu0 0
    %974 = vmatprep.subr.bf16.mxu0 0
    %975 = vmatpush1.bf16.xpose.msra.mxu0 0
    %976 = vmatprep.subr.bf16.mxu0 0
    %977 = vmatpush1.bf16.xpose.msra.mxu0 0
    %978 = vmatprep.subr.bf16.mxu0 0
    %979 = vmatpush1.bf16.xpose.msra.mxu0 0
    %980 = vmatprep.subr.bf16.mxu0 0
    %981 = vmatpush1.bf16.xpose.msra.mxu0 0
    %982 = vmatprep.subr.bf16.mxu0 0
    %983 = vmatpush1.bf16.xpose.msra.mxu0 0
    %984 = vmatprep.subr.bf16.mxu0 0
    %985 = vmatpush1.bf16.xpose.msra.mxu0 0
    %986 = vmatprep.subr.bf16.mxu0 0
    %987 = vmatpush1.bf16.xpose.msra.mxu0 0
    %988 = vmatprep.mubr.bf16.mxu0 0
    %989 = vmatmul.mubr.bf16.gmra.mrb[0].mxu0 %v951
    %v990 = vpop.f32.mrb[0].mxu0
    %v991 = vadd.f32 0.0, %v990
    %v992 = vpop.f32.mrb[0].mxu0
    %v993 = vpop.f32.mrb[0].mxu0
    %v994 = vadd.f32 0.0, %v993
    %v995 = vpop.f32.mrb[0].mxu0
    %996 = vdwg.mxu0
    %v998 = vsel %vm902, %v680, 0
    %v1001 = vsel %vm902, %v784, 0
    %1003 = vmatprep.subr.bf16.mxu0 0
    %1004 = vmatpush1.bf16.xpose.msra.mxu0 %v1001
    %1005 = vmatprep.subr.bf16.mxu0 0
    %1006 = vmatpush1.bf16.xpose.msra.mxu0 0
    %1007 = vmatprep.subr.bf16.mxu0 0
    %1008 = vmatpush1.bf16.xpose.msra.mxu0 0
    %1009 = vmatprep.subr.bf16.mxu0 0
    %1010 = vmatpush1.bf16.xpose.msra.mxu0 0
    %1011 = vmatprep.subr.bf16.mxu0 0
    %1012 = vmatpush1.bf16.xpose.msra.mxu0 0
    %1013 = vmatprep.subr.bf16.mxu0 0
    %1014 = vmatpush1.bf16.xpose.msra.mxu0 0
    %1015 = vmatprep.subr.bf16.mxu0 0
    %1016 = vmatpush1.bf16.xpose.msra.mxu0 0
    %1017 = vmatprep.subr.bf16.mxu0 0
    %1018 = vmatpush1.bf16.xpose.msra.mxu0 0
    %1019 = vmatprep.subr.bf16.mxu0 0
    %1020 = vmatpush1.bf16.xpose.msra.mxu0 0
    %1021 = vmatprep.subr.bf16.mxu0 0
    %1022 = vmatpush1.bf16.xpose.msra.mxu0 0
    %1023 = vmatprep.subr.bf16.mxu0 0
    %1024 = vmatpush1.bf16.xpose.msra.mxu0 0
    %1025 = vmatprep.subr.bf16.mxu0 0
    %1026 = vmatpush1.bf16.xpose.msra.mxu0 0
    %1027 = vmatprep.subr.bf16.mxu0 0
    %1028 = vmatpush1.bf16.xpose.msra.mxu0 0
    %1029 = vmatprep.subr.bf16.mxu0 0
    %1030 = vmatpush1.bf16.xpose.msra.mxu0 0
    %1031 = vmatprep.subr.bf16.mxu0 0
    %1032 = vmatpush1.bf16.xpose.msra.mxu0 0
    %1033 = vmatprep.subr.bf16.mxu0 0
    %1034 = vmatpush1.bf16.xpose.msra.mxu0 0
    %1035 = vmatprep.mubr.bf16.mxu0 0
    %1036 = vmatmul.mubr.bf16.gmra.mrb[0].mxu0 %v998
    %v1037 = vpop.f32.mrb[0].mxu0
    %v1038 = vadd.f32 0.0, %v1037
    %v1039 = vpop.f32.mrb[0].mxu0
    %v1040 = vpop.f32.mrb[0].mxu0
    %v1041 = vadd.f32 0.0, %v1040
    %v1042 = vpop.f32.mrb[0].mxu0
    %1043 = vdwg.mxu0
    %v1045 = vsel %vm902, %v681, 0
    %v1048 = vsel %vm902, %v785, 0
    %1050 = vmatprep.subr.bf16.mxu0 0
    %1051 = vmatpush1.bf16.xpose.msra.mxu0 %v1048
    %1052 = vmatprep.subr.bf16.mxu0 0
    %1053 = vmatpush1.bf16.xpose.msra.mxu0 0
    %1054 = vmatprep.subr.bf16.mxu0 0
    %1055 = vmatpush1.bf16.xpose.msra.mxu0 0
    %1056 = vmatprep.subr.bf16.mxu0 0
    %1057 = vmatpush1.bf16.xpose.msra.mxu0 0
    %1058 = vmatprep.subr.bf16.mxu0 0
    %1059 = vmatpush1.bf16.xpose.msra.mxu0 0
    %1060 = vmatprep.subr.bf16.mxu0 0
    %1061 = vmatpush1.bf16.xpose.msra.mxu0 0
    %1062 = vmatprep.subr.bf16.mxu0 0
    %1063 = vmatpush1.bf16.xpose.msra.mxu0 0
    %1064 = vmatprep.subr.bf16.mxu0 0
    %1065 = vmatpush1.bf16.xpose.msra.mxu0 0
    %1066 = vmatprep.subr.bf16.mxu0 0
    %1067 = vmatpush1.bf16.xpose.msra.mxu0 0
    %1068 = vmatprep.subr.bf16.mxu0 0
    %1069 = vmatpush1.bf16.xpose.msra.mxu0 0
    %1070 = vmatprep.subr.bf16.mxu0 0
    %1071 = vmatpush1.bf16.xpose.msra.mxu0 0
    %1072 = vmatprep.subr.bf16.mxu0 0
    %1073 = vmatpush1.bf16.xpose.msra.mxu0 0
    %1074 = vmatprep.subr.bf16.mxu0 0
    %1075 = vmatpush1.bf16.xpose.msra.mxu0 0
    %1076 = vmatprep.subr.bf16.mxu0 0
    %1077 = vmatpush1.bf16.xpose.msra.mxu0 0
    %1078 = vmatprep.subr.bf16.mxu0 0
    %1079 = vmatpush1.bf16.xpose.msra.mxu0 0
    %1080 = vmatprep.subr.bf16.mxu0 0
    %1081 = vmatpush1.bf16.xpose.msra.mxu0 0
    %1082 = vmatprep.mubr.bf16.mxu0 0
    %1083 = vmatmul.mubr.bf16.gmra.mrb[0].mxu0 %v1045
    %v1084 = vpop.f32.mrb[0].mxu0
    %v1085 = vadd.f32 0.0, %v1084
    %v1086 = vpop.f32.mrb[0].mxu0
    %v1087 = vpop.f32.mrb[0].mxu0
    %v1088 = vadd.f32 0.0, %v1087
    %v1089 = vpop.f32.mrb[0].mxu0
    %1090 = vdwg.mxu0
    %v1092 = vsel %vm902, %v682, 0
    %v1095 = vsel %vm902, %v786, 0
    %1097 = vmatprep.subr.bf16.mxu0 0
    %1098 = vmatpush1.bf16.xpose.msra.mxu0 %v1095
    %1099 = vmatprep.subr.bf16.mxu0 0
    %1100 = vmatpush1.bf16.xpose.msra.mxu0 0
    %1101 = vmatprep.subr.bf16.mxu0 0
    %1102 = vmatpush1.bf16.xpose.msra.mxu0 0
    %1103 = vmatprep.subr.bf16.mxu0 0
    %1104 = vmatpush1.bf16.xpose.msra.mxu0 0
    %1105 = vmatprep.subr.bf16.mxu0 0
    %1106 = vmatpush1.bf16.xpose.msra.mxu0 0
    %1107 = vmatprep.subr.bf16.mxu0 0
    %1108 = vmatpush1.bf16.xpose.msra.mxu0 0
    %1109 = vmatprep.subr.bf16.mxu0 0
    %1110 = vmatpush1.bf16.xpose.msra.mxu0 0
    %1111 = vmatprep.subr.bf16.mxu0 0
    %1112 = vmatpush1.bf16.xpose.msra.mxu0 0
    %1113 = vmatprep.subr.bf16.mxu0 0
    %1114 = vmatpush1.bf16.xpose.msra.mxu0 0
    %1115 = vmatprep.subr.bf16.mxu0 0
    %1116 = vmatpush1.bf16.xpose.msra.mxu0 0
    %1117 = vmatprep.subr.bf16.mxu0 0
    %1118 = vmatpush1.bf16.xpose.msra.mxu0 0
    %1119 = vmatprep.subr.bf16.mxu0 0
    %1120 = vmatpush1.bf16.xpose.msra.mxu0 0
    %1121 = vmatprep.subr.bf16.mxu0 0
    %1122 = vmatpush1.bf16.xpose.msra.mxu0 0
    %1123 = vmatprep.subr.bf16.mxu0 0
    %1124 = vmatpush1.bf16.xpose.msra.mxu0 0
    %1125 = vmatprep.subr.bf16.mxu0 0
    %1126 = vmatpush1.bf16.xpose.msra.mxu0 0
    %1127 = vmatprep.subr.bf16.mxu0 0
    %1128 = vmatpush1.bf16.xpose.msra.mxu0 0
    %1129 = vmatprep.mubr.bf16.mxu0 0
    %1130 = vmatmul.mubr.bf16.gmra.mrb[0].mxu0 %v1092
    %v1131 = vpop.f32.mrb[0].mxu0
    %v1132 = vadd.f32 0.0, %v1131
    %v1133 = vpop.f32.mrb[0].mxu0
    %v1134 = vpop.f32.mrb[0].mxu0
    %v1135 = vadd.f32 0.0, %v1134
    %v1136 = vpop.f32.mrb[0].mxu0
    %1137 = vdwg.mxu0
    %v1139 = vsel %vm902, %v683, 0
    %v1142 = vsel %vm902, %v787, 0
    %1144 = vmatprep.subr.bf16.mxu0 0
    %1145 = vmatpush1.bf16.xpose.msra.mxu0 %v1142
    %1146 = vmatprep.subr.bf16.mxu0 0
    %1147 = vmatpush1.bf16.xpose.msra.mxu0 0
    %1148 = vmatprep.subr.bf16.mxu0 0
    %1149 = vmatpush1.bf16.xpose.msra.mxu0 0
    %1150 = vmatprep.subr.bf16.mxu0 0
    %1151 = vmatpush1.bf16.xpose.msra.mxu0 0
    %1152 = vmatprep.subr.bf16.mxu0 0
    %1153 = vmatpush1.bf16.xpose.msra.mxu0 0
    %1154 = vmatprep.subr.bf16.mxu0 0
    %1155 = vmatpush1.bf16.xpose.msra.mxu0 0
    %1156 = vmatprep.subr.bf16.mxu0 0
    %1157 = vmatpush1.bf16.xpose.msra.mxu0 0
    %1158 = vmatprep.subr.bf16.mxu0 0
    %1159 = vmatpush1.bf16.xpose.msra.mxu0 0
    %1160 = vmatprep.subr.bf16.mxu0 0
    %1161 = vmatpush1.bf16.xpose.msra.mxu0 0
    %1162 = vmatprep.subr.bf16.mxu0 0
    %1163 = vmatpush1.bf16.xpose.msra.mxu0 0
    %1164 = vmatprep.subr.bf16.mxu0 0
    %1165 = vmatpush1.bf16.xpose.msra.mxu0 0
    %1166 = vmatprep.subr.bf16.mxu0 0
    %1167 = vmatpush1.bf16.xpose.msra.mxu0 0
    %1168 = vmatprep.subr.bf16.mxu0 0
    %1169 = vmatpush1.bf16.xpose.msra.mxu0 0
    %1170 = vmatprep.subr.bf16.mxu0 0
    %1171 = vmatpush1.bf16.xpose.msra.mxu0 0
    %1172 = vmatprep.subr.bf16.mxu0 0
    %1173 = vmatpush1.bf16.xpose.msra.mxu0 0
    %1174 = vmatprep.subr.bf16.mxu0 0
    %1175 = vmatpush1.bf16.xpose.msra.mxu0 0
    %1176 = vmatprep.mubr.bf16.mxu0 0
    %1177 = vmatmul.mubr.bf16.gmra.mrb[0].mxu0 %v1139
    %v1178 = vpop.f32.mrb[0].mxu0
    %v1179 = vadd.f32 0.0, %v1178
    %v1180 = vpop.f32.mrb[0].mxu0
    %v1181 = vpop.f32.mrb[0].mxu0
    %v1182 = vadd.f32 0.0, %v1181
    %v1183 = vpop.f32.mrb[0].mxu0
    %1184 = vdwg.mxu0
    %v1186 = vsel %vm902, %v684, 0
    %v1189 = vsel %vm902, %v788, 0
    %1191 = vmatprep.subr.bf16.mxu0 0
    %1192 = vmatpush1.bf16.xpose.msra.mxu0 %v1189
    %1193 = vmatprep.subr.bf16.mxu0 0
    %1194 = vmatpush1.bf16.xpose.msra.mxu0 0
    %1195 = vmatprep.subr.bf16.mxu0 0
    %1196 = vmatpush1.bf16.xpose.msra.mxu0 0
    %1197 = vmatprep.subr.bf16.mxu0 0
    %1198 = vmatpush1.bf16.xpose.msra.mxu0 0
    %1199 = vmatprep.subr.bf16.mxu0 0
    %1200 = vmatpush1.bf16.xpose.msra.mxu0 0
    %1201 = vmatprep.subr.bf16.mxu0 0
    %1202 = vmatpush1.bf16.xpose.msra.mxu0 0
    %1203 = vmatprep.subr.bf16.mxu0 0
    %1204 = vmatpush1.bf16.xpose.msra.mxu0 0
    %1205 = vmatprep.subr.bf16.mxu0 0
    %1206 = vmatpush1.bf16.xpose.msra.mxu0 0
    %1207 = vmatprep.subr.bf16.mxu0 0
    %1208 = vmatpush1.bf16.xpose.msra.mxu0 0
    %1209 = vmatprep.subr.bf16.mxu0 0
    %1210 = vmatpush1.bf16.xpose.msra.mxu0 0
    %1211 = vmatprep.subr.bf16.mxu0 0
    %1212 = vmatpush1.bf16.xpose.msra.mxu0 0
    %1213 = vmatprep.subr.bf16.mxu0 0
    %1214 = vmatpush1.bf16.xpose.msra.mxu0 0
    %1215 = vmatprep.subr.bf16.mxu0 0
    %1216 = vmatpush1.bf16.xpose.msra.mxu0 0
    %1217 = vmatprep.subr.bf16.mxu0 0
    %1218 = vmatpush1.bf16.xpose.msra.mxu0 0
    %1219 = vmatprep.subr.bf16.mxu0 0
    %1220 = vmatpush1.bf16.xpose.msra.mxu0 0
    %1221 = vmatprep.subr.bf16.mxu0 0
    %1222 = vmatpush1.bf16.xpose.msra.mxu0 0
    %1223 = vmatprep.mubr.bf16.mxu0 0
    %1224 = vmatmul.mubr.bf16.gmra.mrb[0].mxu0 %v1186
    %v1225 = vpop.f32.mrb[0].mxu0
    %v1226 = vadd.f32 0.0, %v1225
    %v1227 = vpop.f32.mrb[0].mxu0
    %v1228 = vpop.f32.mrb[0].mxu0
    %v1229 = vadd.f32 0.0, %v1228
    %v1230 = vpop.f32.mrb[0].mxu0
    %1231 = vdwg.mxu0
    %v1233 = vsel %vm902, %v685, 0
    %v1236 = vsel %vm902, %v789, 0
    %1238 = vmatprep.subr.bf16.mxu0 0
    %1239 = vmatpush1.bf16.xpose.msra.mxu0 %v1236
    %1240 = vmatprep.subr.bf16.mxu0 0
    %1241 = vmatpush1.bf16.xpose.msra.mxu0 0
    %1242 = vmatprep.subr.bf16.mxu0 0
    %1243 = vmatpush1.bf16.xpose.msra.mxu0 0
    %1244 = vmatprep.subr.bf16.mxu0 0
    %1245 = vmatpush1.bf16.xpose.msra.mxu0 0
    %1246 = vmatprep.subr.bf16.mxu0 0
    %1247 = vmatpush1.bf16.xpose.msra.mxu0 0
    %1248 = vmatprep.subr.bf16.mxu0 0
    %1249 = vmatpush1.bf16.xpose.msra.mxu0 0
    %1250 = vmatprep.subr.bf16.mxu0 0
    %1251 = vmatpush1.bf16.xpose.msra.mxu0 0
    %1252 = vmatprep.subr.bf16.mxu0 0
    %1253 = vmatpush1.bf16.xpose.msra.mxu0 0
    %1254 = vmatprep.subr.bf16.mxu0 0
    %1255 = vmatpush1.bf16.xpose.msra.mxu0 0
    %1256 = vmatprep.subr.bf16.mxu0 0
    %1257 = vmatpush1.bf16.xpose.msra.mxu0 0
    %1258 = vmatprep.subr.bf16.mxu0 0
    %1259 = vmatpush1.bf16.xpose.msra.mxu0 0
    %1260 = vmatprep.subr.bf16.mxu0 0
    %1261 = vmatpush1.bf16.xpose.msra.mxu0 0
    %1262 = vmatprep.subr.bf16.mxu0 0
    %1263 = vmatpush1.bf16.xpose.msra.mxu0 0
    %1264 = vmatprep.subr.bf16.mxu0 0
    %1265 = vmatpush1.bf16.xpose.msra.mxu0 0
    %1266 = vmatprep.subr.bf16.mxu0 0
    %1267 = vmatpush1.bf16.xpose.msra.mxu0 0
    %1268 = vmatprep.subr.bf16.mxu0 0
    %1269 = vmatpush1.bf16.xpose.msra.mxu0 0
    %1270 = vmatprep.mubr.bf16.mxu0 0
    %1271 = vmatmul.mubr.bf16.gmra.mrb[0].mxu0 %v1233
    %v1272 = vpop.f32.mrb[0].mxu0
    %v1273 = vadd.f32 0.0, %v1272
    %v1274 = vpop.f32.mrb[0].mxu0
    %v1275 = vpop.f32.mrb[0].mxu0
    %v1276 = vadd.f32 0.0, %v1275
    %v1277 = vpop.f32.mrb[0].mxu0
    %1278 = vdwg.mxu0
    %v1280 = vsel %vm902, %v686, 0
    %v1283 = vsel %vm902, %v790, 0
    %1285 = vmatprep.subr.bf16.mxu0 0
    %1286 = vmatpush1.bf16.xpose.msra.mxu0 %v1283
    %1287 = vmatprep.subr.bf16.mxu0 0
    %1288 = vmatpush1.bf16.xpose.msra.mxu0 0
    %1289 = vmatprep.subr.bf16.mxu0 0
    %1290 = vmatpush1.bf16.xpose.msra.mxu0 0
    %1291 = vmatprep.subr.bf16.mxu0 0
    %1292 = vmatpush1.bf16.xpose.msra.mxu0 0
    %1293 = vmatprep.subr.bf16.mxu0 0
    %1294 = vmatpush1.bf16.xpose.msra.mxu0 0
    %1295 = vmatprep.subr.bf16.mxu0 0
    %1296 = vmatpush1.bf16.xpose.msra.mxu0 0
    %1297 = vmatprep.subr.bf16.mxu0 0
    %1298 = vmatpush1.bf16.xpose.msra.mxu0 0
    %1299 = vmatprep.subr.bf16.mxu0 0
    %1300 = vmatpush1.bf16.xpose.msra.mxu0 0
    %1301 = vmatprep.subr.bf16.mxu0 0
    %1302 = vmatpush1.bf16.xpose.msra.mxu0 0
    %1303 = vmatprep.subr.bf16.mxu0 0
    %1304 = vmatpush1.bf16.xpose.msra.mxu0 0
    %1305 = vmatprep.subr.bf16.mxu0 0
    %1306 = vmatpush1.bf16.xpose.msra.mxu0 0
    %1307 = vmatprep.subr.bf16.mxu0 0
    %1308 = vmatpush1.bf16.xpose.msra.mxu0 0
    %1309 = vmatprep.subr.bf16.mxu0 0
    %1310 = vmatpush1.bf16.xpose.msra.mxu0 0
    %1311 = vmatprep.subr.bf16.mxu0 0
    %1312 = vmatpush1.bf16.xpose.msra.mxu0 0
    %1313 = vmatprep.subr.bf16.mxu0 0
    %1314 = vmatpush1.bf16.xpose.msra.mxu0 0
    %1315 = vmatprep.subr.bf16.mxu0 0
    %1316 = vmatpush1.bf16.xpose.msra.mxu0 0
    %1317 = vmatprep.mubr.bf16.mxu0 0
    %1318 = vmatmul.mubr.bf16.gmra.mrb[0].mxu0 %v1280
    %v1319 = vpop.f32.mrb[0].mxu0
    %v1320 = vadd.f32 0.0, %v1319
    %v1321 = vpop.f32.mrb[0].mxu0
    %v1322 = vpop.f32.mrb[0].mxu0
    %v1323 = vadd.f32 0.0, %v1322
    %v1324 = vpop.f32.mrb[0].mxu0
    %1325 = vdwg.mxu0
    %v1327 = vsel %vm902, %v687, 0
    %v1330 = vsel %vm902, %v791, 0
    %1332 = vmatprep.subr.bf16.mxu0 0
    %1333 = vmatpush1.bf16.xpose.msra.mxu0 %v1330
    %1334 = vmatprep.subr.bf16.mxu0 0
    %1335 = vmatpush1.bf16.xpose.msra.mxu0 0
    %1336 = vmatprep.subr.bf16.mxu0 0
    %1337 = vmatpush1.bf16.xpose.msra.mxu0 0
    %1338 = vmatprep.subr.bf16.mxu0 0
    %1339 = vmatpush1.bf16.xpose.msra.mxu0 0
    %1340 = vmatprep.subr.bf16.mxu0 0
    %1341 = vmatpush1.bf16.xpose.msra.mxu0 0
    %1342 = vmatprep.subr.bf16.mxu0 0
    %1343 = vmatpush1.bf16.xpose.msra.mxu0 0
    %1344 = vmatprep.subr.bf16.mxu0 0
    %1345 = vmatpush1.bf16.xpose.msra.mxu0 0
    %1346 = vmatprep.subr.bf16.mxu0 0
    %1347 = vmatpush1.bf16.xpose.msra.mxu0 0
    %1348 = vmatprep.subr.bf16.mxu0 0
    %1349 = vmatpush1.bf16.xpose.msra.mxu0 0
    %1350 = vmatprep.subr.bf16.mxu0 0
    %1351 = vmatpush1.bf16.xpose.msra.mxu0 0
    %1352 = vmatprep.subr.bf16.mxu0 0
    %1353 = vmatpush1.bf16.xpose.msra.mxu0 0
    %1354 = vmatprep.subr.bf16.mxu0 0
    %1355 = vmatpush1.bf16.xpose.msra.mxu0 0
    %1356 = vmatprep.subr.bf16.mxu0 0
    %1357 = vmatpush1.bf16.xpose.msra.mxu0 0
    %1358 = vmatprep.subr.bf16.mxu0 0
    %1359 = vmatpush1.bf16.xpose.msra.mxu0 0
    %1360 = vmatprep.subr.bf16.mxu0 0
    %1361 = vmatpush1.bf16.xpose.msra.mxu0 0
    %1362 = vmatprep.subr.bf16.mxu0 0
    %1363 = vmatpush1.bf16.xpose.msra.mxu0 0
    %1364 = vmatprep.mubr.bf16.mxu0 0
    %1365 = vmatmul.mubr.bf16.gmra.mrb[0].mxu0 %v1327
    %v1366 = vpop.f32.mrb[0].mxu0
    %v1367 = vadd.f32 0.0, %v1366
    %v1368 = vpop.f32.mrb[0].mxu0
    %v1369 = vpop.f32.mrb[0].mxu0
    %v1370 = vadd.f32 0.0, %v1369
    %v1371 = vpop.f32.mrb[0].mxu0
    %1372 = vdwg.mxu0
    %v1374 = vsel %vm902, %v688, 0
    %v1377 = vsel %vm902, %v792, 0
    %1379 = vmatprep.subr.bf16.mxu0 0
    %1380 = vmatpush1.bf16.xpose.msra.mxu0 %v1377
    %1381 = vmatprep.subr.bf16.mxu0 0
    %1382 = vmatpush1.bf16.xpose.msra.mxu0 0
    %1383 = vmatprep.subr.bf16.mxu0 0
    %1384 = vmatpush1.bf16.xpose.msra.mxu0 0
    %1385 = vmatprep.subr.bf16.mxu0 0
    %1386 = vmatpush1.bf16.xpose.msra.mxu0 0
    %1387 = vmatprep.subr.bf16.mxu0 0
    %1388 = vmatpush1.bf16.xpose.msra.mxu0 0
    %1389 = vmatprep.subr.bf16.mxu0 0
    %1390 = vmatpush1.bf16.xpose.msra.mxu0 0
    %1391 = vmatprep.subr.bf16.mxu0 0
    %1392 = vmatpush1.bf16.xpose.msra.mxu0 0
    %1393 = vmatprep.subr.bf16.mxu0 0
    %1394 = vmatpush1.bf16.xpose.msra.mxu0 0
    %1395 = vmatprep.subr.bf16.mxu0 0
    %1396 = vmatpush1.bf16.xpose.msra.mxu0 0
    %1397 = vmatprep.subr.bf16.mxu0 0
    %1398 = vmatpush1.bf16.xpose.msra.mxu0 0
    %1399 = vmatprep.subr.bf16.mxu0 0
    %1400 = vmatpush1.bf16.xpose.msra.mxu0 0
    %1401 = vmatprep.subr.bf16.mxu0 0
    %1402 = vmatpush1.bf16.xpose.msra.mxu0 0
    %1403 = vmatprep.subr.bf16.mxu0 0
    %1404 = vmatpush1.bf16.xpose.msra.mxu0 0
    %1405 = vmatprep.subr.bf16.mxu0 0
    %1406 = vmatpush1.bf16.xpose.msra.mxu0 0
    %1407 = vmatprep.subr.bf16.mxu0 0
    %1408 = vmatpush1.bf16.xpose.msra.mxu0 0
    %1409 = vmatprep.subr.bf16.mxu0 0
    %1410 = vmatpush1.bf16.xpose.msra.mxu0 0
    %1411 = vmatprep.mubr.bf16.mxu0 0
    %1412 = vmatmul.mubr.bf16.gmra.mrb[0].mxu0 %v1374
    %v1413 = vpop.f32.mrb[0].mxu0
    %v1414 = vadd.f32 0.0, %v1413
    %v1415 = vpop.f32.mrb[0].mxu0
    %v1416 = vpop.f32.mrb[0].mxu0
    %v1417 = vadd.f32 0.0, %v1416
    %v1418 = vpop.f32.mrb[0].mxu0
    %1419 = vdwg.mxu0
    %v1421 = vsel %vm902, %v689, 0
    %v1424 = vsel %vm902, %v793, 0
    %1426 = vmatprep.subr.bf16.mxu0 0
    %1427 = vmatpush1.bf16.xpose.msra.mxu0 %v1424
    %1428 = vmatprep.subr.bf16.mxu0 0
    %1429 = vmatpush1.bf16.xpose.msra.mxu0 0
    %1430 = vmatprep.subr.bf16.mxu0 0
    %1431 = vmatpush1.bf16.xpose.msra.mxu0 0
    %1432 = vmatprep.subr.bf16.mxu0 0
    %1433 = vmatpush1.bf16.xpose.msra.mxu0 0
    %1434 = vmatprep.subr.bf16.mxu0 0
    %1435 = vmatpush1.bf16.xpose.msra.mxu0 0
    %1436 = vmatprep.subr.bf16.mxu0 0
    %1437 = vmatpush1.bf16.xpose.msra.mxu0 0
    %1438 = vmatprep.subr.bf16.mxu0 0
    %1439 = vmatpush1.bf16.xpose.msra.mxu0 0
    %1440 = vmatprep.subr.bf16.mxu0 0
    %1441 = vmatpush1.bf16.xpose.msra.mxu0 0
    %1442 = vmatprep.subr.bf16.mxu0 0
    %1443 = vmatpush1.bf16.xpose.msra.mxu0 0
    %1444 = vmatprep.subr.bf16.mxu0 0
    %1445 = vmatpush1.bf16.xpose.msra.mxu0 0
    %1446 = vmatprep.subr.bf16.mxu0 0
    %1447 = vmatpush1.bf16.xpose.msra.mxu0 0
    %1448 = vmatprep.subr.bf16.mxu0 0
    %1449 = vmatpush1.bf16.xpose.msra.mxu0 0
    %1450 = vmatprep.subr.bf16.mxu0 0
    %1451 = vmatpush1.bf16.xpose.msra.mxu0 0
    %1452 = vmatprep.subr.bf16.mxu0 0
    %1453 = vmatpush1.bf16.xpose.msra.mxu0 0
    %1454 = vmatprep.subr.bf16.mxu0 0
    %1455 = vmatpush1.bf16.xpose.msra.mxu0 0
    %1456 = vmatprep.subr.bf16.mxu0 0
    %1457 = vmatpush1.bf16.xpose.msra.mxu0 0
    %1458 = vmatprep.mubr.bf16.mxu0 0
    %1459 = vmatmul.mubr.bf16.gmra.mrb[0].mxu0 %v1421
    %v1460 = vpop.f32.mrb[0].mxu0
    %v1461 = vadd.f32 0.0, %v1460
    %v1462 = vpop.f32.mrb[0].mxu0
    %v1463 = vpop.f32.mrb[0].mxu0
    %v1464 = vadd.f32 0.0, %v1463
    %v1465 = vpop.f32.mrb[0].mxu0
    %1466 = vdwg.mxu0
    %v1468 = vsel %vm902, %v690, 0
    %v1471 = vsel %vm902, %v794, 0
    %1473 = vmatprep.subr.bf16.mxu0 0
    %1474 = vmatpush1.bf16.xpose.msra.mxu0 %v1471
    %1475 = vmatprep.subr.bf16.mxu0 0
    %1476 = vmatpush1.bf16.xpose.msra.mxu0 0
    %1477 = vmatprep.subr.bf16.mxu0 0
    %1478 = vmatpush1.bf16.xpose.msra.mxu0 0
    %1479 = vmatprep.subr.bf16.mxu0 0
    %1480 = vmatpush1.bf16.xpose.msra.mxu0 0
    %1481 = vmatprep.subr.bf16.mxu0 0
    %1482 = vmatpush1.bf16.xpose.msra.mxu0 0
    %1483 = vmatprep.subr.bf16.mxu0 0
    %1484 = vmatpush1.bf16.xpose.msra.mxu0 0
    %1485 = vmatprep.subr.bf16.mxu0 0
    %1486 = vmatpush1.bf16.xpose.msra.mxu0 0
    %1487 = vmatprep.subr.bf16.mxu0 0
    %1488 = vmatpush1.bf16.xpose.msra.mxu0 0
    %1489 = vmatprep.subr.bf16.mxu0 0
    %1490 = vmatpush1.bf16.xpose.msra.mxu0 0
    %1491 = vmatprep.subr.bf16.mxu0 0
    %1492 = vmatpush1.bf16.xpose.msra.mxu0 0
    %1493 = vmatprep.subr.bf16.mxu0 0
    %1494 = vmatpush1.bf16.xpose.msra.mxu0 0
    %1495 = vmatprep.subr.bf16.mxu0 0
    %1496 = vmatpush1.bf16.xpose.msra.mxu0 0
    %1497 = vmatprep.subr.bf16.mxu0 0
    %1498 = vmatpush1.bf16.xpose.msra.mxu0 0
    %1499 = vmatprep.subr.bf16.mxu0 0
    %1500 = vmatpush1.bf16.xpose.msra.mxu0 0
    %1501 = vmatprep.subr.bf16.mxu0 0
    %1502 = vmatpush1.bf16.xpose.msra.mxu0 0
    %1503 = vmatprep.subr.bf16.mxu0 0
    %1504 = vmatpush1.bf16.xpose.msra.mxu0 0
    %1505 = vmatprep.mubr.bf16.mxu0 0
    %1506 = vmatmul.mubr.bf16.gmra.mrb[0].mxu0 %v1468
    %v1507 = vpop.f32.mrb[0].mxu0
    %v1508 = vadd.f32 0.0, %v1507
    %v1509 = vpop.f32.mrb[0].mxu0
    %v1510 = vpop.f32.mrb[0].mxu0
    %v1511 = vadd.f32 0.0, %v1510
    %v1512 = vpop.f32.mrb[0].mxu0
    %1513 = vdwg.mxu0
    %v1515 = vsel %vm902, %v691, 0
    %v1518 = vsel %vm902, %v795, 0
    %1520 = vmatprep.subr.bf16.mxu0 0
    %1521 = vmatpush1.bf16.xpose.msra.mxu0 %v1518
    %1522 = vmatprep.subr.bf16.mxu0 0
    %1523 = vmatpush1.bf16.xpose.msra.mxu0 0
    %1524 = vmatprep.subr.bf16.mxu0 0
    %1525 = vmatpush1.bf16.xpose.msra.mxu0 0
    %1526 = vmatprep.subr.bf16.mxu0 0
    %1527 = vmatpush1.bf16.xpose.msra.mxu0 0
    %1528 = vmatprep.subr.bf16.mxu0 0
    %1529 = vmatpush1.bf16.xpose.msra.mxu0 0
    %1530 = vmatprep.subr.bf16.mxu0 0
    %1531 = vmatpush1.bf16.xpose.msra.mxu0 0
    %1532 = vmatprep.subr.bf16.mxu0 0
    %1533 = vmatpush1.bf16.xpose.msra.mxu0 0
    %1534 = vmatprep.subr.bf16.mxu0 0
    %1535 = vmatpush1.bf16.xpose.msra.mxu0 0
    %1536 = vmatprep.subr.bf16.mxu0 0
    %1537 = vmatpush1.bf16.xpose.msra.mxu0 0
    %1538 = vmatprep.subr.bf16.mxu0 0
    %1539 = vmatpush1.bf16.xpose.msra.mxu0 0
    %1540 = vmatprep.subr.bf16.mxu0 0
    %1541 = vmatpush1.bf16.xpose.msra.mxu0 0
    %1542 = vmatprep.subr.bf16.mxu0 0
    %1543 = vmatpush1.bf16.xpose.msra.mxu0 0
    %1544 = vmatprep.subr.bf16.mxu0 0
    %1545 = vmatpush1.bf16.xpose.msra.mxu0 0
    %1546 = vmatprep.subr.bf16.mxu0 0
    %1547 = vmatpush1.bf16.xpose.msra.mxu0 0
    %1548 = vmatprep.subr.bf16.mxu0 0
    %1549 = vmatpush1.bf16.xpose.msra.mxu0 0
    %1550 = vmatprep.subr.bf16.mxu0 0
    %1551 = vmatpush1.bf16.xpose.msra.mxu0 0
    %1552 = vmatprep.mubr.bf16.mxu0 0
    %1553 = vmatmul.mubr.bf16.gmra.mrb[0].mxu0 %v1515
    %v1554 = vpop.f32.mrb[0].mxu0
    %v1555 = vadd.f32 0.0, %v1554
    %v1556 = vpop.f32.mrb[0].mxu0
    %v1557 = vpop.f32.mrb[0].mxu0
    %v1558 = vadd.f32 0.0, %v1557
    %v1559 = vpop.f32.mrb[0].mxu0
    %1560 = vdwg.mxu0
    %v1562 = vsel %vm902, %v692, 0
    %v1565 = vsel %vm902, %v796, 0
    %1567 = vmatprep.subr.bf16.mxu0 0
    %1568 = vmatpush1.bf16.xpose.msra.mxu0 %v1565
    %1569 = vmatprep.subr.bf16.mxu0 0
    %1570 = vmatpush1.bf16.xpose.msra.mxu0 0
    %1571 = vmatprep.subr.bf16.mxu0 0
    %1572 = vmatpush1.bf16.xpose.msra.mxu0 0
    %1573 = vmatprep.subr.bf16.mxu0 0
    %1574 = vmatpush1.bf16.xpose.msra.mxu0 0
    %1575 = vmatprep.subr.bf16.mxu0 0
    %1576 = vmatpush1.bf16.xpose.msra.mxu0 0
    %1577 = vmatprep.subr.bf16.mxu0 0
    %1578 = vmatpush1.bf16.xpose.msra.mxu0 0
    %1579 = vmatprep.subr.bf16.mxu0 0
    %1580 = vmatpush1.bf16.xpose.msra.mxu0 0
    %1581 = vmatprep.subr.bf16.mxu0 0
    %1582 = vmatpush1.bf16.xpose.msra.mxu0 0
    %1583 = vmatprep.subr.bf16.mxu0 0
    %1584 = vmatpush1.bf16.xpose.msra.mxu0 0
    %1585 = vmatprep.subr.bf16.mxu0 0
    %1586 = vmatpush1.bf16.xpose.msra.mxu0 0
    %1587 = vmatprep.subr.bf16.mxu0 0
    %1588 = vmatpush1.bf16.xpose.msra.mxu0 0
    %1589 = vmatprep.subr.bf16.mxu0 0
    %1590 = vmatpush1.bf16.xpose.msra.mxu0 0
    %1591 = vmatprep.subr.bf16.mxu0 0
    %1592 = vmatpush1.bf16.xpose.msra.mxu0 0
    %1593 = vmatprep.subr.bf16.mxu0 0
    %1594 = vmatpush1.bf16.xpose.msra.mxu0 0
    %1595 = vmatprep.subr.bf16.mxu0 0
    %1596 = vmatpush1.bf16.xpose.msra.mxu0 0
    %1597 = vmatprep.subr.bf16.mxu0 0
    %1598 = vmatpush1.bf16.xpose.msra.mxu0 0
    %1599 = vmatprep.mubr.bf16.mxu0 0
    %1600 = vmatmul.mubr.bf16.gmra.mrb[0].mxu0 %v1562
    %v1601 = vpop.f32.mrb[0].mxu0
    %v1602 = vadd.f32 0.0, %v1601
    %v1603 = vpop.f32.mrb[0].mxu0
    %v1604 = vpop.f32.mrb[0].mxu0
    %v1605 = vadd.f32 0.0, %v1604
    %v1606 = vpop.f32.mrb[0].mxu0
    %1607 = vdwg.mxu0
    %v1609 = vsel %vm902, %v693, 0
    %v1612 = vsel %vm902, %v797, 0
    %1614 = vmatprep.subr.bf16.mxu0 0
    %1615 = vmatpush1.bf16.xpose.msra.mxu0 %v1612
    %1616 = vmatprep.subr.bf16.mxu0 0
    %1617 = vmatpush1.bf16.xpose.msra.mxu0 0
    %1618 = vmatprep.subr.bf16.mxu0 0
    %1619 = vmatpush1.bf16.xpose.msra.mxu0 0
    %1620 = vmatprep.subr.bf16.mxu0 0
    %1621 = vmatpush1.bf16.xpose.msra.mxu0 0
    %1622 = vmatprep.subr.bf16.mxu0 0
    %1623 = vmatpush1.bf16.xpose.msra.mxu0 0
    %1624 = vmatprep.subr.bf16.mxu0 0
    %1625 = vmatpush1.bf16.xpose.msra.mxu0 0
    %1626 = vmatprep.subr.bf16.mxu0 0
    %1627 = vmatpush1.bf16.xpose.msra.mxu0 0
    %1628 = vmatprep.subr.bf16.mxu0 0
    %1629 = vmatpush1.bf16.xpose.msra.mxu0 0
    %1630 = vmatprep.subr.bf16.mxu0 0
    %1631 = vmatpush1.bf16.xpose.msra.mxu0 0
    %1632 = vmatprep.subr.bf16.mxu0 0
    %1633 = vmatpush1.bf16.xpose.msra.mxu0 0
    %1634 = vmatprep.subr.bf16.mxu0 0
    %1635 = vmatpush1.bf16.xpose.msra.mxu0 0
    %1636 = vmatprep.subr.bf16.mxu0 0
    %1637 = vmatpush1.bf16.xpose.msra.mxu0 0
    %1638 = vmatprep.subr.bf16.mxu0 0
    %1639 = vmatpush1.bf16.xpose.msra.mxu0 0
    %1640 = vmatprep.subr.bf16.mxu0 0
    %1641 = vmatpush1.bf16.xpose.msra.mxu0 0
    %1642 = vmatprep.subr.bf16.mxu0 0
    %1643 = vmatpush1.bf16.xpose.msra.mxu0 0
    %1644 = vmatprep.subr.bf16.mxu0 0
    %1645 = vmatpush1.bf16.xpose.msra.mxu0 0
    %1646 = vmatprep.mubr.bf16.mxu0 0
    %1647 = vmatmul.mubr.bf16.gmra.mrb[0].mxu0 %v1609
    %v1648 = vpop.f32.mrb[0].mxu0
    %v1649 = vadd.f32 0.0, %v1648
    %v1650 = vpop.f32.mrb[0].mxu0
    %v1651 = vpop.f32.mrb[0].mxu0
    %v1652 = vadd.f32 0.0, %v1651
    %v1653 = vpop.f32.mrb[0].mxu0
    %1654 = vdwg.mxu0
    %v1655 = vsel %vm902, %v944, -inf
    %1656 = vmax.xlane.f32.xlu0 %v1655
    %v1657 = vpop.xlane.xlu0 %1656
    %v1658 = vsel %vm902, %v947, -inf
    %1659 = vmax.xlane.f32.xlu0 %v1658
    %v1660 = vpop.xlane.xlu0 %1659
    %v1661 = vsel %vm902, %v991, -inf
    %1662 = vmax.xlane.f32.xlu0 %v1661
    %v1663 = vpop.xlane.xlu0 %1662
    %v1664 = vsel %vm902, %v994, -inf
    %1665 = vmax.xlane.f32.xlu0 %v1664
    %v1666 = vpop.xlane.xlu0 %1665
    %v1667 = vsel %vm902, %v1038, -inf
    %1668 = vmax.xlane.f32.xlu0 %v1667
    %v1669 = vpop.xlane.xlu0 %1668
    %v1670 = vsel %vm902, %v1041, -inf
    %1671 = vmax.xlane.f32.xlu0 %v1670
    %v1672 = vpop.xlane.xlu0 %1671
    %v1673 = vsel %vm902, %v1085, -inf
    %1674 = vmax.xlane.f32.xlu0 %v1673
    %v1675 = vpop.xlane.xlu0 %1674
    %v1676 = vsel %vm902, %v1088, -inf
    %1677 = vmax.xlane.f32.xlu0 %v1676
    %v1678 = vpop.xlane.xlu0 %1677
    %v1679 = vsel %vm902, %v1132, -inf
    %1680 = vmax.xlane.f32.xlu0 %v1679
    %v1681 = vpop.xlane.xlu0 %1680
    %v1682 = vsel %vm902, %v1135, -inf
    %1683 = vmax.xlane.f32.xlu0 %v1682
    %v1684 = vpop.xlane.xlu0 %1683
    %v1685 = vsel %vm902, %v1179, -inf
    %1686 = vmax.xlane.f32.xlu0 %v1685
    %v1687 = vpop.xlane.xlu0 %1686
    %v1688 = vsel %vm902, %v1182, -inf
    %1689 = vmax.xlane.f32.xlu0 %v1688
    %v1690 = vpop.xlane.xlu0 %1689
    %v1691 = vsel %vm902, %v1226, -inf
    %1692 = vmax.xlane.f32.xlu0 %v1691
    %v1693 = vpop.xlane.xlu0 %1692
    %v1694 = vsel %vm902, %v1229, -inf
    %1695 = vmax.xlane.f32.xlu0 %v1694
    %v1696 = vpop.xlane.xlu0 %1695
    %v1697 = vsel %vm902, %v1273, -inf
    %1698 = vmax.xlane.f32.xlu0 %v1697
    %v1699 = vpop.xlane.xlu0 %1698
    %v1700 = vsel %vm902, %v1276, -inf
    %1701 = vmax.xlane.f32.xlu0 %v1700
    %v1702 = vpop.xlane.xlu0 %1701
    %v1703 = vsel %vm902, %v1320, -inf
    %1704 = vmax.xlane.f32.xlu0 %v1703
    %v1705 = vpop.xlane.xlu0 %1704
    %v1706 = vsel %vm902, %v1323, -inf
    %1707 = vmax.xlane.f32.xlu0 %v1706
    %v1708 = vpop.xlane.xlu0 %1707
    %v1709 = vsel %vm902, %v1367, -inf
    %1710 = vmax.xlane.f32.xlu0 %v1709
    %v1711 = vpop.xlane.xlu0 %1710
    %v1712 = vsel %vm902, %v1370, -inf
    %1713 = vmax.xlane.f32.xlu0 %v1712
    %v1714 = vpop.xlane.xlu0 %1713
    %v1715 = vsel %vm902, %v1414, -inf
    %1716 = vmax.xlane.f32.xlu0 %v1715
    %v1717 = vpop.xlane.xlu0 %1716
    %v1718 = vsel %vm902, %v1417, -inf
    %1719 = vmax.xlane.f32.xlu0 %v1718
    %v1720 = vpop.xlane.xlu0 %1719
    %v1721 = vsel %vm902, %v1461, -inf
    %1722 = vmax.xlane.f32.xlu0 %v1721
    %v1723 = vpop.xlane.xlu0 %1722
    %v1724 = vsel %vm902, %v1464, -inf
    %1725 = vmax.xlane.f32.xlu0 %v1724
    %v1726 = vpop.xlane.xlu0 %1725
    %v1727 = vsel %vm902, %v1508, -inf
    %1728 = vmax.xlane.f32.xlu0 %v1727
    %v1729 = vpop.xlane.xlu0 %1728
    %v1730 = vsel %vm902, %v1511, -inf
    %1731 = vmax.xlane.f32.xlu0 %v1730
    %v1732 = vpop.xlane.xlu0 %1731
    %v1733 = vsel %vm902, %v1555, -inf
    %1734 = vmax.xlane.f32.xlu0 %v1733
    %v1735 = vpop.xlane.xlu0 %1734
    %v1736 = vsel %vm902, %v1558, -inf
    %1737 = vmax.xlane.f32.xlu0 %v1736
    %v1738 = vpop.xlane.xlu0 %1737
    %v1739 = vsel %vm902, %v1602, -inf
    %1740 = vmax.xlane.f32.xlu0 %v1739
    %v1741 = vpop.xlane.xlu0 %1740
    %v1742 = vsel %vm902, %v1605, -inf
    %1743 = vmax.xlane.f32.xlu0 %v1742
    %v1744 = vpop.xlane.xlu0 %1743
    %v1745 = vsel %vm902, %v1649, -inf
    %1746 = vmax.xlane.f32.xlu0 %v1745
    %v1747 = vpop.xlane.xlu0 %1746
    %v1748 = vsel %vm902, %v1652, -inf
    %1749 = vmax.xlane.f32.xlu0 %v1748
    %v1750 = vpop.xlane.xlu0 %1749
    %v1751 = vsub.f32 %v944, %v1657
    %v1752 = vsub.f32 %v947, %v1660
    %v1753 = vsub.f32 %v991, %v1663
    %v1754 = vsub.f32 %v994, %v1666
    %v1755 = vsub.f32 %v1038, %v1669
    %v1756 = vsub.f32 %v1041, %v1672
    %v1757 = vsub.f32 %v1085, %v1675
    %v1758 = vsub.f32 %v1088, %v1678
    %v1759 = vsub.f32 %v1132, %v1681
    %v1760 = vsub.f32 %v1135, %v1684
    %v1761 = vsub.f32 %v1179, %v1687
    %v1762 = vsub.f32 %v1182, %v1690
    %v1763 = vsub.f32 %v1226, %v1693
    %v1764 = vsub.f32 %v1229, %v1696
    %v1765 = vsub.f32 %v1273, %v1699
    %v1766 = vsub.f32 %v1276, %v1702
    %v1767 = vsub.f32 %v1320, %v1705
    %v1768 = vsub.f32 %v1323, %v1708
    %v1769 = vsub.f32 %v1367, %v1711
    %v1770 = vsub.f32 %v1370, %v1714
    %v1771 = vsub.f32 %v1414, %v1717
    %v1772 = vsub.f32 %v1417, %v1720
    %v1773 = vsub.f32 %v1461, %v1723
    %v1774 = vsub.f32 %v1464, %v1726
    %v1775 = vsub.f32 %v1508, %v1729
    %v1776 = vsub.f32 %v1511, %v1732
    %v1777 = vsub.f32 %v1555, %v1735
    %v1778 = vsub.f32 %v1558, %v1738
    %v1779 = vsub.f32 %v1602, %v1741
    %v1780 = vsub.f32 %v1605, %v1744
    %v1781 = vsub.f32 %v1649, %v1747
    %v1782 = vsub.f32 %v1652, %v1750
    %v1783 = vmul.f32 %v1751, 1.442695
    %v1784 = vpow.pop %v1783
    %v1785 = vmul.f32 %v1752, 1.442695
    %v1786 = vpow.pop %v1785
    %v1787 = vmul.f32 %v1753, 1.442695
    %v1788 = vpow.pop %v1787
    %v1789 = vmul.f32 %v1754, 1.442695
    %v1790 = vpow.pop %v1789
    %v1791 = vmul.f32 %v1755, 1.442695
    %v1792 = vpow.pop %v1791
    %v1793 = vmul.f32 %v1756, 1.442695
    %v1794 = vpow.pop %v1793
    %v1795 = vmul.f32 %v1757, 1.442695
    %v1796 = vpow.pop %v1795
    %v1797 = vmul.f32 %v1758, 1.442695
    %v1798 = vpow.pop %v1797
    %v1799 = vmul.f32 %v1759, 1.442695
    %v1800 = vpow.pop %v1799
    %v1801 = vmul.f32 %v1760, 1.442695
    %v1802 = vpow.pop %v1801
    %v1803 = vmul.f32 %v1761, 1.442695
    %v1804 = vpow.pop %v1803
    %v1805 = vmul.f32 %v1762, 1.442695
    %v1806 = vpow.pop %v1805
    %v1807 = vmul.f32 %v1763, 1.442695
    %v1808 = vpow.pop %v1807
    %v1809 = vmul.f32 %v1764, 1.442695
    %v1810 = vpow.pop %v1809
    %v1811 = vmul.f32 %v1765, 1.442695
    %v1812 = vpow.pop %v1811
    %v1813 = vmul.f32 %v1766, 1.442695
    %v1814 = vpow.pop %v1813
    %v1815 = vmul.f32 %v1767, 1.442695
    %v1816 = vpow.pop %v1815
    %v1817 = vmul.f32 %v1768, 1.442695
    %v1818 = vpow.pop %v1817
    %v1819 = vmul.f32 %v1769, 1.442695
    %v1820 = vpow.pop %v1819
    %v1821 = vmul.f32 %v1770, 1.442695
    %v1822 = vpow.pop %v1821
    %v1823 = vmul.f32 %v1771, 1.442695
    %v1824 = vpow.pop %v1823
    %v1825 = vmul.f32 %v1772, 1.442695
    %v1826 = vpow.pop %v1825
    %v1827 = vmul.f32 %v1773, 1.442695
    %v1828 = vpow.pop %v1827
    %v1829 = vmul.f32 %v1774, 1.442695
    %v1830 = vpow.pop %v1829
    %v1831 = vmul.f32 %v1775, 1.442695
    %v1832 = vpow.pop %v1831
    %v1833 = vmul.f32 %v1776, 1.442695
    %v1834 = vpow.pop %v1833
    %v1835 = vmul.f32 %v1777, 1.442695
    %v1836 = vpow.pop %v1835
    %v1837 = vmul.f32 %v1778, 1.442695
    %v1838 = vpow.pop %v1837
    %v1839 = vmul.f32 %v1779, 1.442695
    %v1840 = vpow.pop %v1839
    %v1841 = vmul.f32 %v1780, 1.442695
    %v1842 = vpow.pop %v1841
    %v1843 = vmul.f32 %v1781, 1.442695
    %v1844 = vpow.pop %v1843
    %v1845 = vmul.f32 %v1782, 1.442695
    %v1846 = vpow.pop %v1845
    %v1847 = vsel %vm902, %v1784, 0.0
    %1848 = vadd.xlane.f32.xlu0 %v1847
    %v1849 = vpop.xlane.xlu0 %1848
    %v1850 = vsel %vm902, %v1786, 0.0
    %1851 = vadd.xlane.f32.xlu0 %v1850
    %v1852 = vpop.xlane.xlu0 %1851
    %v1853 = vsel %vm902, %v1788, 0.0
    %1854 = vadd.xlane.f32.xlu0 %v1853
    %v1855 = vpop.xlane.xlu0 %1854
    %v1856 = vsel %vm902, %v1790, 0.0
    %1857 = vadd.xlane.f32.xlu0 %v1856
    %v1858 = vpop.xlane.xlu0 %1857
    %v1859 = vsel %vm902, %v1792, 0.0
    %1860 = vadd.xlane.f32.xlu0 %v1859
    %v1861 = vpop.xlane.xlu0 %1860
    %v1862 = vsel %vm902, %v1794, 0.0
    %1863 = vadd.xlane.f32.xlu0 %v1862
    %v1864 = vpop.xlane.xlu0 %1863
    %v1865 = vsel %vm902, %v1796, 0.0
    %1866 = vadd.xlane.f32.xlu0 %v1865
    %v1867 = vpop.xlane.xlu0 %1866
    %v1868 = vsel %vm902, %v1798, 0.0
    %1869 = vadd.xlane.f32.xlu0 %v1868
    %v1870 = vpop.xlane.xlu0 %1869
    %v1871 = vsel %vm902, %v1800, 0.0
    %1872 = vadd.xlane.f32.xlu0 %v1871
    %v1873 = vpop.xlane.xlu0 %1872
    %v1874 = vsel %vm902, %v1802, 0.0
    %1875 = vadd.xlane.f32.xlu0 %v1874
    %v1876 = vpop.xlane.xlu0 %1875
    %v1877 = vsel %vm902, %v1804, 0.0
    %1878 = vadd.xlane.f32.xlu0 %v1877
    %v1879 = vpop.xlane.xlu0 %1878
    %v1880 = vsel %vm902, %v1806, 0.0
    %1881 = vadd.xlane.f32.xlu0 %v1880
    %v1882 = vpop.xlane.xlu0 %1881
    %v1883 = vsel %vm902, %v1808, 0.0
    %1884 = vadd.xlane.f32.xlu0 %v1883
    %v1885 = vpop.xlane.xlu0 %1884
    %v1886 = vsel %vm902, %v1810, 0.0
    %1887 = vadd.xlane.f32.xlu0 %v1886
    %v1888 = vpop.xlane.xlu0 %1887
    %v1889 = vsel %vm902, %v1812, 0.0
    %1890 = vadd.xlane.f32.xlu0 %v1889
    %v1891 = vpop.xlane.xlu0 %1890
    %v1892 = vsel %vm902, %v1814, 0.0
    %1893 = vadd.xlane.f32.xlu0 %v1892
    %v1894 = vpop.xlane.xlu0 %1893
    %v1895 = vsel %vm902, %v1816, 0.0
    %1896 = vadd.xlane.f32.xlu0 %v1895
    %v1897 = vpop.xlane.xlu0 %1896
    %v1898 = vsel %vm902, %v1818, 0.0
    %1899 = vadd.xlane.f32.xlu0 %v1898
    %v1900 = vpop.xlane.xlu0 %1899
    %v1901 = vsel %vm902, %v1820, 0.0
    %1902 = vadd.xlane.f32.xlu0 %v1901
    %v1903 = vpop.xlane.xlu0 %1902
    %v1904 = vsel %vm902, %v1822, 0.0
    %1905 = vadd.xlane.f32.xlu0 %v1904
    %v1906 = vpop.xlane.xlu0 %1905
    %v1907 = vsel %vm902, %v1824, 0.0
    %1908 = vadd.xlane.f32.xlu0 %v1907
    %v1909 = vpop.xlane.xlu0 %1908
    %v1910 = vsel %vm902, %v1826, 0.0
    %1911 = vadd.xlane.f32.xlu0 %v1910
    %v1912 = vpop.xlane.xlu0 %1911
    %v1913 = vsel %vm902, %v1828, 0.0
    %1914 = vadd.xlane.f32.xlu0 %v1913
    %v1915 = vpop.xlane.xlu0 %1914
    %v1916 = vsel %vm902, %v1830, 0.0
    %1917 = vadd.xlane.f32.xlu0 %v1916
    %v1918 = vpop.xlane.xlu0 %1917
    %v1919 = vsel %vm902, %v1832, 0.0
    %1920 = vadd.xlane.f32.xlu0 %v1919
    %v1921 = vpop.xlane.xlu0 %1920
    %v1922 = vsel %vm902, %v1834, 0.0
    %1923 = vadd.xlane.f32.xlu0 %v1922
    %v1924 = vpop.xlane.xlu0 %1923
    %v1925 = vsel %vm902, %v1836, 0.0
    %1926 = vadd.xlane.f32.xlu0 %v1925
    %v1927 = vpop.xlane.xlu0 %1926
    %v1928 = vsel %vm902, %v1838, 0.0
    %1929 = vadd.xlane.f32.xlu0 %v1928
    %v1930 = vpop.xlane.xlu0 %1929
    %v1931 = vsel %vm902, %v1840, 0.0
    %1932 = vadd.xlane.f32.xlu0 %v1931
    %v1933 = vpop.xlane.xlu0 %1932
    %v1934 = vsel %vm902, %v1842, 0.0
    %1935 = vadd.xlane.f32.xlu0 %v1934
    %v1936 = vpop.xlane.xlu0 %1935
    %v1937 = vsel %vm902, %v1844, 0.0
    %1938 = vadd.xlane.f32.xlu0 %v1937
    %v1939 = vpop.xlane.xlu0 %1938
    %v1940 = vsel %vm902, %v1846, 0.0
    %1941 = vadd.xlane.f32.xlu0 %v1940
    %v1942 = vpop.xlane.xlu0 %1941
    %v1943 = vrcp.pop %v1849
    %v1944 = vrcp.pop %v1852
    %v1945 = vrcp.pop %v1855
    %v1946 = vrcp.pop %v1858
    %v1947 = vrcp.pop %v1861
    %v1948 = vrcp.pop %v1864
    %v1949 = vrcp.pop %v1867
    %v1950 = vrcp.pop %v1870
    %v1951 = vrcp.pop %v1873
    %v1952 = vrcp.pop %v1876
    %v1953 = vrcp.pop %v1879
    %v1954 = vrcp.pop %v1882
    %v1955 = vrcp.pop %v1885
    %v1956 = vrcp.pop %v1888
    %v1957 = vrcp.pop %v1891
    %v1958 = vrcp.pop %v1894
    %v1959 = vrcp.pop %v1897
    %v1960 = vrcp.pop %v1900
    %v1961 = vrcp.pop %v1903
    %v1962 = vrcp.pop %v1906
    %v1963 = vrcp.pop %v1909
    %v1964 = vrcp.pop %v1912
    %v1965 = vrcp.pop %v1915
    %v1966 = vrcp.pop %v1918
    %v1967 = vrcp.pop %v1921
    %v1968 = vrcp.pop %v1924
    %v1969 = vrcp.pop %v1927
    %v1970 = vrcp.pop %v1930
    %v1971 = vrcp.pop %v1933
    %v1972 = vrcp.pop %v1936
    %v1973 = vrcp.pop %v1939
    %v1974 = vrcp.pop %v1942
    %v1975 = vmul.f32 %v1784, %v1943
    %v1976 = vmul.f32 %v1786, %v1944
    %v1977 = vmul.f32 %v1788, %v1945
    %v1978 = vmul.f32 %v1790, %v1946
    %v1979 = vmul.f32 %v1792, %v1947
    %v1980 = vmul.f32 %v1794, %v1948
    %v1981 = vmul.f32 %v1796, %v1949
    %v1982 = vmul.f32 %v1798, %v1950
    %v1983 = vmul.f32 %v1800, %v1951
    %v1984 = vmul.f32 %v1802, %v1952
    %v1985 = vmul.f32 %v1804, %v1953
    %v1986 = vmul.f32 %v1806, %v1954
    %v1987 = vmul.f32 %v1808, %v1955
    %v1988 = vmul.f32 %v1810, %v1956
    %v1989 = vmul.f32 %v1812, %v1957
    %v1990 = vmul.f32 %v1814, %v1958
    %v1991 = vmul.f32 %v1816, %v1959
    %v1992 = vmul.f32 %v1818, %v1960
    %v1993 = vmul.f32 %v1820, %v1961
    %v1994 = vmul.f32 %v1822, %v1962
    %v1995 = vmul.f32 %v1824, %v1963
    %v1996 = vmul.f32 %v1826, %v1964
    %v1997 = vmul.f32 %v1828, %v1965
    %v1998 = vmul.f32 %v1830, %v1966
    %v1999 = vmul.f32 %v1832, %v1967
    %v2000 = vmul.f32 %v1834, %v1968
    %v2001 = vmul.f32 %v1836, %v1969
    %v2002 = vmul.f32 %v1838, %v1970
    %v2003 = vmul.f32 %v1840, %v1971
    %v2004 = vmul.f32 %v1842, %v1972
    %v2005 = vmul.f32 %v1844, %v1973
    %v2006 = vmul.f32 %v1846, %v1974
    %v2007 = vpack.c.bf16 %v1976, %v1975
    %v2008 = vpack.c.bf16 %v1978, %v1977
    %v2009 = vpack.c.bf16 %v1980, %v1979
    %v2010 = vpack.c.bf16 %v1982, %v1981
    %v2011 = vpack.c.bf16 %v1984, %v1983
    %v2012 = vpack.c.bf16 %v1986, %v1985
    %v2013 = vpack.c.bf16 %v1988, %v1987
    %v2014 = vpack.c.bf16 %v1990, %v1989
    %v2015 = vpack.c.bf16 %v1992, %v1991
    %v2016 = vpack.c.bf16 %v1994, %v1993
    %v2017 = vpack.c.bf16 %v1996, %v1995
    %v2018 = vpack.c.bf16 %v1998, %v1997
    %v2019 = vpack.c.bf16 %v2000, %v1999
    %v2020 = vpack.c.bf16 %v2002, %v2001
    %v2021 = vpack.c.bf16 %v2004, %v2003
    %v2022 = vpack.c.bf16 %v2006, %v2005
    %v2024 = vsel %vm902, %v2007, 0
    %2026 = vmatprep.subr.bf16.mxu0 0
    %2027 = vmatpush1.bf16.msra.mxu0 %v886
    %2028 = vmatprep.subr.bf16.mxu0 0
    %2029 = vmatpush1.bf16.msra.mxu0 0
    %2030 = vmatprep.subr.bf16.mxu0 0
    %2031 = vmatpush1.bf16.msra.mxu0 0
    %2032 = vmatprep.subr.bf16.mxu0 0
    %2033 = vmatpush1.bf16.msra.mxu0 0
    %2034 = vmatprep.subr.bf16.mxu0 0
    %2035 = vmatpush1.bf16.msra.mxu0 0
    %2036 = vmatprep.subr.bf16.mxu0 0
    %2037 = vmatpush1.bf16.msra.mxu0 0
    %2038 = vmatprep.subr.bf16.mxu0 0
    %2039 = vmatpush1.bf16.msra.mxu0 0
    %2040 = vmatprep.subr.bf16.mxu0 0
    %2041 = vmatpush1.bf16.msra.mxu0 0
    %2042 = vmatprep.subr.bf16.mxu0 0
    %2043 = vmatpush1.bf16.msra.mxu0 0
    %2044 = vmatprep.subr.bf16.mxu0 0
    %2045 = vmatpush1.bf16.msra.mxu0 0
    %2046 = vmatprep.subr.bf16.mxu0 0
    %2047 = vmatpush1.bf16.msra.mxu0 0
    %2048 = vmatprep.subr.bf16.mxu0 0
    %2049 = vmatpush1.bf16.msra.mxu0 0
    %2050 = vmatprep.subr.bf16.mxu0 0
    %2051 = vmatpush1.bf16.msra.mxu0 0
    %2052 = vmatprep.subr.bf16.mxu0 0
    %2053 = vmatpush1.bf16.msra.mxu0 0
    %2054 = vmatprep.subr.bf16.mxu0 0
    %2055 = vmatpush1.bf16.msra.mxu0 0
    %2056 = vmatprep.subr.bf16.mxu0 0
    %2057 = vmatpush1.bf16.msra.mxu0 0
    %2058 = vmatprep.mubr.bf16.mxu0 0
    %2059 = vmatmul.mubr.bf16.gmra.mrb[0].mxu0 %v2024
    %v2060 = vpop.f32.mrb[0].mxu0
    %v2061 = vadd.f32 0.0, %v2060
    %v2062 = vpop.f32.mrb[0].mxu0
    %v2063 = vpop.f32.mrb[0].mxu0
    %v2064 = vadd.f32 0.0, %v2063
    %v2065 = vpop.f32.mrb[0].mxu0
    %2066 = vdwg.mxu0
    %v2068 = vsel %vm902, %v2008, 0
    %2070 = vmatprep.subr.bf16.mxu0 0
    %2071 = vmatpush1.bf16.msra.mxu0 %v887
    %2072 = vmatprep.subr.bf16.mxu0 0
    %2073 = vmatpush1.bf16.msra.mxu0 0
    %2074 = vmatprep.subr.bf16.mxu0 0
    %2075 = vmatpush1.bf16.msra.mxu0 0
    %2076 = vmatprep.subr.bf16.mxu0 0
    %2077 = vmatpush1.bf16.msra.mxu0 0
    %2078 = vmatprep.subr.bf16.mxu0 0
    %2079 = vmatpush1.bf16.msra.mxu0 0
    %2080 = vmatprep.subr.bf16.mxu0 0
    %2081 = vmatpush1.bf16.msra.mxu0 0
    %2082 = vmatprep.subr.bf16.mxu0 0
    %2083 = vmatpush1.bf16.msra.mxu0 0
    %2084 = vmatprep.subr.bf16.mxu0 0
    %2085 = vmatpush1.bf16.msra.mxu0 0
    %2086 = vmatprep.subr.bf16.mxu0 0
    %2087 = vmatpush1.bf16.msra.mxu0 0
    %2088 = vmatprep.subr.bf16.mxu0 0
    %2089 = vmatpush1.bf16.msra.mxu0 0
    %2090 = vmatprep.subr.bf16.mxu0 0
    %2091 = vmatpush1.bf16.msra.mxu0 0
    %2092 = vmatprep.subr.bf16.mxu0 0
    %2093 = vmatpush1.bf16.msra.mxu0 0
    %2094 = vmatprep.subr.bf16.mxu0 0
    %2095 = vmatpush1.bf16.msra.mxu0 0
    %2096 = vmatprep.subr.bf16.mxu0 0
    %2097 = vmatpush1.bf16.msra.mxu0 0
    %2098 = vmatprep.subr.bf16.mxu0 0
    %2099 = vmatpush1.bf16.msra.mxu0 0
    %2100 = vmatprep.subr.bf16.mxu0 0
    %2101 = vmatpush1.bf16.msra.mxu0 0
    %2102 = vmatprep.mubr.bf16.mxu0 0
    %2103 = vmatmul.mubr.bf16.gmra.mrb[0].mxu0 %v2068
    %v2104 = vpop.f32.mrb[0].mxu0
    %v2105 = vadd.f32 0.0, %v2104
    %v2106 = vpop.f32.mrb[0].mxu0
    %v2107 = vpop.f32.mrb[0].mxu0
    %v2108 = vadd.f32 0.0, %v2107
    %v2109 = vpop.f32.mrb[0].mxu0
    %2110 = vdwg.mxu0
    %v2112 = vsel %vm902, %v2009, 0
    %2114 = vmatprep.subr.bf16.mxu0 0
    %2115 = vmatpush1.bf16.msra.mxu0 %v888
    %2116 = vmatprep.subr.bf16.mxu0 0
    %2117 = vmatpush1.bf16.msra.mxu0 0
    %2118 = vmatprep.subr.bf16.mxu0 0
    %2119 = vmatpush1.bf16.msra.mxu0 0
    %2120 = vmatprep.subr.bf16.mxu0 0
    %2121 = vmatpush1.bf16.msra.mxu0 0
    %2122 = vmatprep.subr.bf16.mxu0 0
    %2123 = vmatpush1.bf16.msra.mxu0 0
    %2124 = vmatprep.subr.bf16.mxu0 0
    %2125 = vmatpush1.bf16.msra.mxu0 0
    %2126 = vmatprep.subr.bf16.mxu0 0
    %2127 = vmatpush1.bf16.msra.mxu0 0
    %2128 = vmatprep.subr.bf16.mxu0 0
    %2129 = vmatpush1.bf16.msra.mxu0 0
    %2130 = vmatprep.subr.bf16.mxu0 0
    %2131 = vmatpush1.bf16.msra.mxu0 0
    %2132 = vmatprep.subr.bf16.mxu0 0
    %2133 = vmatpush1.bf16.msra.mxu0 0
    %2134 = vmatprep.subr.bf16.mxu0 0
    %2135 = vmatpush1.bf16.msra.mxu0 0
    %2136 = vmatprep.subr.bf16.mxu0 0
    %2137 = vmatpush1.bf16.msra.mxu0 0
    %2138 = vmatprep.subr.bf16.mxu0 0
    %2139 = vmatpush1.bf16.msra.mxu0 0
    %2140 = vmatprep.subr.bf16.mxu0 0
    %2141 = vmatpush1.bf16.msra.mxu0 0
    %2142 = vmatprep.subr.bf16.mxu0 0
    %2143 = vmatpush1.bf16.msra.mxu0 0
    %2144 = vmatprep.subr.bf16.mxu0 0
    %2145 = vmatpush1.bf16.msra.mxu0 0
    %2146 = vmatprep.mubr.bf16.mxu0 0
    %2147 = vmatmul.mubr.bf16.gmra.mrb[0].mxu0 %v2112
    %v2148 = vpop.f32.mrb[0].mxu0
    %v2149 = vadd.f32 0.0, %v2148
    %v2150 = vpop.f32.mrb[0].mxu0
    %v2151 = vpop.f32.mrb[0].mxu0
    %v2152 = vadd.f32 0.0, %v2151
    %v2153 = vpop.f32.mrb[0].mxu0
    %2154 = vdwg.mxu0
    %v2156 = vsel %vm902, %v2010, 0
    %2158 = vmatprep.subr.bf16.mxu0 0
    %2159 = vmatpush1.bf16.msra.mxu0 %v889
    %2160 = vmatprep.subr.bf16.mxu0 0
    %2161 = vmatpush1.bf16.msra.mxu0 0
    %2162 = vmatprep.subr.bf16.mxu0 0
    %2163 = vmatpush1.bf16.msra.mxu0 0
    %2164 = vmatprep.subr.bf16.mxu0 0
    %2165 = vmatpush1.bf16.msra.mxu0 0
    %2166 = vmatprep.subr.bf16.mxu0 0
    %2167 = vmatpush1.bf16.msra.mxu0 0
    %2168 = vmatprep.subr.bf16.mxu0 0
    %2169 = vmatpush1.bf16.msra.mxu0 0
    %2170 = vmatprep.subr.bf16.mxu0 0
    %2171 = vmatpush1.bf16.msra.mxu0 0
    %2172 = vmatprep.subr.bf16.mxu0 0
    %2173 = vmatpush1.bf16.msra.mxu0 0
    %2174 = vmatprep.subr.bf16.mxu0 0
    %2175 = vmatpush1.bf16.msra.mxu0 0
    %2176 = vmatprep.subr.bf16.mxu0 0
    %2177 = vmatpush1.bf16.msra.mxu0 0
    %2178 = vmatprep.subr.bf16.mxu0 0
    %2179 = vmatpush1.bf16.msra.mxu0 0
    %2180 = vmatprep.subr.bf16.mxu0 0
    %2181 = vmatpush1.bf16.msra.mxu0 0
    %2182 = vmatprep.subr.bf16.mxu0 0
    %2183 = vmatpush1.bf16.msra.mxu0 0
    %2184 = vmatprep.subr.bf16.mxu0 0
    %2185 = vmatpush1.bf16.msra.mxu0 0
    %2186 = vmatprep.subr.bf16.mxu0 0
    %2187 = vmatpush1.bf16.msra.mxu0 0
    %2188 = vmatprep.subr.bf16.mxu0 0
    %2189 = vmatpush1.bf16.msra.mxu0 0
    %2190 = vmatprep.mubr.bf16.mxu0 0
    %2191 = vmatmul.mubr.bf16.gmra.mrb[0].mxu0 %v2156
    %v2192 = vpop.f32.mrb[0].mxu0
    %v2193 = vadd.f32 0.0, %v2192
    %v2194 = vpop.f32.mrb[0].mxu0
    %v2195 = vpop.f32.mrb[0].mxu0
    %v2196 = vadd.f32 0.0, %v2195
    %v2197 = vpop.f32.mrb[0].mxu0
    %2198 = vdwg.mxu0
    %v2200 = vsel %vm902, %v2011, 0
    %2202 = vmatprep.subr.bf16.mxu0 0
    %2203 = vmatpush1.bf16.msra.mxu0 %v890
    %2204 = vmatprep.subr.bf16.mxu0 0
    %2205 = vmatpush1.bf16.msra.mxu0 0
    %2206 = vmatprep.subr.bf16.mxu0 0
    %2207 = vmatpush1.bf16.msra.mxu0 0
    %2208 = vmatprep.subr.bf16.mxu0 0
    %2209 = vmatpush1.bf16.msra.mxu0 0
    %2210 = vmatprep.subr.bf16.mxu0 0
    %2211 = vmatpush1.bf16.msra.mxu0 0
    %2212 = vmatprep.subr.bf16.mxu0 0
    %2213 = vmatpush1.bf16.msra.mxu0 0
    %2214 = vmatprep.subr.bf16.mxu0 0
    %2215 = vmatpush1.bf16.msra.mxu0 0
    %2216 = vmatprep.subr.bf16.mxu0 0
    %2217 = vmatpush1.bf16.msra.mxu0 0
    %2218 = vmatprep.subr.bf16.mxu0 0
    %2219 = vmatpush1.bf16.msra.mxu0 0
    %2220 = vmatprep.subr.bf16.mxu0 0
    %2221 = vmatpush1.bf16.msra.mxu0 0
    %2222 = vmatprep.subr.bf16.mxu0 0
    %2223 = vmatpush1.bf16.msra.mxu0 0
    %2224 = vmatprep.subr.bf16.mxu0 0
    %2225 = vmatpush1.bf16.msra.mxu0 0
    %2226 = vmatprep.subr.bf16.mxu0 0
    %2227 = vmatpush1.bf16.msra.mxu0 0
    %2228 = vmatprep.subr.bf16.mxu0 0
    %2229 = vmatpush1.bf16.msra.mxu0 0
    %2230 = vmatprep.subr.bf16.mxu0 0
    %2231 = vmatpush1.bf16.msra.mxu0 0
    %2232 = vmatprep.subr.bf16.mxu0 0
    %2233 = vmatpush1.bf16.msra.mxu0 0
    %2234 = vmatprep.mubr.bf16.mxu0 0
    %2235 = vmatmul.mubr.bf16.gmra.mrb[0].mxu0 %v2200
    %v2236 = vpop.f32.mrb[0].mxu0
    %v2237 = vadd.f32 0.0, %v2236
    %v2238 = vpop.f32.mrb[0].mxu0
    %v2239 = vpop.f32.mrb[0].mxu0
    %v2240 = vadd.f32 0.0, %v2239
    %v2241 = vpop.f32.mrb[0].mxu0
    %2242 = vdwg.mxu0
    %v2244 = vsel %vm902, %v2012, 0
    %2246 = vmatprep.subr.bf16.mxu0 0
    %2247 = vmatpush1.bf16.msra.mxu0 %v891
    %2248 = vmatprep.subr.bf16.mxu0 0
    %2249 = vmatpush1.bf16.msra.mxu0 0
    %2250 = vmatprep.subr.bf16.mxu0 0
    %2251 = vmatpush1.bf16.msra.mxu0 0
    %2252 = vmatprep.subr.bf16.mxu0 0
    %2253 = vmatpush1.bf16.msra.mxu0 0
    %2254 = vmatprep.subr.bf16.mxu0 0
    %2255 = vmatpush1.bf16.msra.mxu0 0
    %2256 = vmatprep.subr.bf16.mxu0 0
    %2257 = vmatpush1.bf16.msra.mxu0 0
    %2258 = vmatprep.subr.bf16.mxu0 0
    %2259 = vmatpush1.bf16.msra.mxu0 0
    %2260 = vmatprep.subr.bf16.mxu0 0
    %2261 = vmatpush1.bf16.msra.mxu0 0
    %2262 = vmatprep.subr.bf16.mxu0 0
    %2263 = vmatpush1.bf16.msra.mxu0 0
    %2264 = vmatprep.subr.bf16.mxu0 0
    %2265 = vmatpush1.bf16.msra.mxu0 0
    %2266 = vmatprep.subr.bf16.mxu0 0
    %2267 = vmatpush1.bf16.msra.mxu0 0
    %2268 = vmatprep.subr.bf16.mxu0 0
    %2269 = vmatpush1.bf16.msra.mxu0 0
    %2270 = vmatprep.subr.bf16.mxu0 0
    %2271 = vmatpush1.bf16.msra.mxu0 0
    %2272 = vmatprep.subr.bf16.mxu0 0
    %2273 = vmatpush1.bf16.msra.mxu0 0
    %2274 = vmatprep.subr.bf16.mxu0 0
    %2275 = vmatpush1.bf16.msra.mxu0 0
    %2276 = vmatprep.subr.bf16.mxu0 0
    %2277 = vmatpush1.bf16.msra.mxu0 0
    %2278 = vmatprep.mubr.bf16.mxu0 0
    %2279 = vmatmul.mubr.bf16.gmra.mrb[0].mxu0 %v2244
    %v2280 = vpop.f32.mrb[0].mxu0
    %v2281 = vadd.f32 0.0, %v2280
    %v2282 = vpop.f32.mrb[0].mxu0
    %v2283 = vpop.f32.mrb[0].mxu0
    %v2284 = vadd.f32 0.0, %v2283
    %v2285 = vpop.f32.mrb[0].mxu0
    %2286 = vdwg.mxu0
    %v2288 = vsel %vm902, %v2013, 0
    %2290 = vmatprep.subr.bf16.mxu0 0
    %2291 = vmatpush1.bf16.msra.mxu0 %v892
    %2292 = vmatprep.subr.bf16.mxu0 0
    %2293 = vmatpush1.bf16.msra.mxu0 0
    %2294 = vmatprep.subr.bf16.mxu0 0
    %2295 = vmatpush1.bf16.msra.mxu0 0
    %2296 = vmatprep.subr.bf16.mxu0 0
    %2297 = vmatpush1.bf16.msra.mxu0 0
    %2298 = vmatprep.subr.bf16.mxu0 0
    %2299 = vmatpush1.bf16.msra.mxu0 0
    %2300 = vmatprep.subr.bf16.mxu0 0
    %2301 = vmatpush1.bf16.msra.mxu0 0
    %2302 = vmatprep.subr.bf16.mxu0 0
    %2303 = vmatpush1.bf16.msra.mxu0 0
    %2304 = vmatprep.subr.bf16.mxu0 0
    %2305 = vmatpush1.bf16.msra.mxu0 0
    %2306 = vmatprep.subr.bf16.mxu0 0
    %2307 = vmatpush1.bf16.msra.mxu0 0
    %2308 = vmatprep.subr.bf16.mxu0 0
    %2309 = vmatpush1.bf16.msra.mxu0 0
    %2310 = vmatprep.subr.bf16.mxu0 0
    %2311 = vmatpush1.bf16.msra.mxu0 0
    %2312 = vmatprep.subr.bf16.mxu0 0
    %2313 = vmatpush1.bf16.msra.mxu0 0
    %2314 = vmatprep.subr.bf16.mxu0 0
    %2315 = vmatpush1.bf16.msra.mxu0 0
    %2316 = vmatprep.subr.bf16.mxu0 0
    %2317 = vmatpush1.bf16.msra.mxu0 0
    %2318 = vmatprep.subr.bf16.mxu0 0
    %2319 = vmatpush1.bf16.msra.mxu0 0
    %2320 = vmatprep.subr.bf16.mxu0 0
    %2321 = vmatpush1.bf16.msra.mxu0 0
    %2322 = vmatprep.mubr.bf16.mxu0 0
    %2323 = vmatmul.mubr.bf16.gmra.mrb[0].mxu0 %v2288
    %v2324 = vpop.f32.mrb[0].mxu0
    %v2325 = vadd.f32 0.0, %v2324
    %v2326 = vpop.f32.mrb[0].mxu0
    %v2327 = vpop.f32.mrb[0].mxu0
    %v2328 = vadd.f32 0.0, %v2327
    %v2329 = vpop.f32.mrb[0].mxu0
    %2330 = vdwg.mxu0
    %v2332 = vsel %vm902, %v2014, 0
    %2334 = vmatprep.subr.bf16.mxu0 0
    %2335 = vmatpush1.bf16.msra.mxu0 %v893
    %2336 = vmatprep.subr.bf16.mxu0 0
    %2337 = vmatpush1.bf16.msra.mxu0 0
    %2338 = vmatprep.subr.bf16.mxu0 0
    %2339 = vmatpush1.bf16.msra.mxu0 0
    %2340 = vmatprep.subr.bf16.mxu0 0
    %2341 = vmatpush1.bf16.msra.mxu0 0
    %2342 = vmatprep.subr.bf16.mxu0 0
    %2343 = vmatpush1.bf16.msra.mxu0 0
    %2344 = vmatprep.subr.bf16.mxu0 0
    %2345 = vmatpush1.bf16.msra.mxu0 0
    %2346 = vmatprep.subr.bf16.mxu0 0
    %2347 = vmatpush1.bf16.msra.mxu0 0
    %2348 = vmatprep.subr.bf16.mxu0 0
    %2349 = vmatpush1.bf16.msra.mxu0 0
    %2350 = vmatprep.subr.bf16.mxu0 0
    %2351 = vmatpush1.bf16.msra.mxu0 0
    %2352 = vmatprep.subr.bf16.mxu0 0
    %2353 = vmatpush1.bf16.msra.mxu0 0
    %2354 = vmatprep.subr.bf16.mxu0 0
    %2355 = vmatpush1.bf16.msra.mxu0 0
    %2356 = vmatprep.subr.bf16.mxu0 0
    %2357 = vmatpush1.bf16.msra.mxu0 0
    %2358 = vmatprep.subr.bf16.mxu0 0
    %2359 = vmatpush1.bf16.msra.mxu0 0
    %2360 = vmatprep.subr.bf16.mxu0 0
    %2361 = vmatpush1.bf16.msra.mxu0 0
    %2362 = vmatprep.subr.bf16.mxu0 0
    %2363 = vmatpush1.bf16.msra.mxu0 0
    %2364 = vmatprep.subr.bf16.mxu0 0
    %2365 = vmatpush1.bf16.msra.mxu0 0
    %2366 = vmatprep.mubr.bf16.mxu0 0
    %2367 = vmatmul.mubr.bf16.gmra.mrb[0].mxu0 %v2332
    %v2368 = vpop.f32.mrb[0].mxu0
    %v2369 = vadd.f32 0.0, %v2368
    %v2370 = vpop.f32.mrb[0].mxu0
    %v2371 = vpop.f32.mrb[0].mxu0
    %v2372 = vadd.f32 0.0, %v2371
    %v2373 = vpop.f32.mrb[0].mxu0
    %2374 = vdwg.mxu0
    %v2376 = vsel %vm902, %v2015, 0
    %2378 = vmatprep.subr.bf16.mxu0 0
    %2379 = vmatpush1.bf16.msra.mxu0 %v894
    %2380 = vmatprep.subr.bf16.mxu0 0
    %2381 = vmatpush1.bf16.msra.mxu0 0
    %2382 = vmatprep.subr.bf16.mxu0 0
    %2383 = vmatpush1.bf16.msra.mxu0 0
    %2384 = vmatprep.subr.bf16.mxu0 0
    %2385 = vmatpush1.bf16.msra.mxu0 0
    %2386 = vmatprep.subr.bf16.mxu0 0
    %2387 = vmatpush1.bf16.msra.mxu0 0
    %2388 = vmatprep.subr.bf16.mxu0 0
    %2389 = vmatpush1.bf16.msra.mxu0 0
    %2390 = vmatprep.subr.bf16.mxu0 0
    %2391 = vmatpush1.bf16.msra.mxu0 0
    %2392 = vmatprep.subr.bf16.mxu0 0
    %2393 = vmatpush1.bf16.msra.mxu0 0
    %2394 = vmatprep.subr.bf16.mxu0 0
    %2395 = vmatpush1.bf16.msra.mxu0 0
    %2396 = vmatprep.subr.bf16.mxu0 0
    %2397 = vmatpush1.bf16.msra.mxu0 0
    %2398 = vmatprep.subr.bf16.mxu0 0
    %2399 = vmatpush1.bf16.msra.mxu0 0
    %2400 = vmatprep.subr.bf16.mxu0 0
    %2401 = vmatpush1.bf16.msra.mxu0 0
    %2402 = vmatprep.subr.bf16.mxu0 0
    %2403 = vmatpush1.bf16.msra.mxu0 0
    %2404 = vmatprep.subr.bf16.mxu0 0
    %2405 = vmatpush1.bf16.msra.mxu0 0
    %2406 = vmatprep.subr.bf16.mxu0 0
    %2407 = vmatpush1.bf16.msra.mxu0 0
    %2408 = vmatprep.subr.bf16.mxu0 0
    %2409 = vmatpush1.bf16.msra.mxu0 0
    %2410 = vmatprep.mubr.bf16.mxu0 0
    %2411 = vmatmul.mubr.bf16.gmra.mrb[0].mxu0 %v2376
    %v2412 = vpop.f32.mrb[0].mxu0
    %v2413 = vadd.f32 0.0, %v2412
    %v2414 = vpop.f32.mrb[0].mxu0
    %v2415 = vpop.f32.mrb[0].mxu0
    %v2416 = vadd.f32 0.0, %v2415
    %v2417 = vpop.f32.mrb[0].mxu0
    %2418 = vdwg.mxu0
    %v2420 = vsel %vm902, %v2016, 0
    %2422 = vmatprep.subr.bf16.mxu0 0
    %2423 = vmatpush1.bf16.msra.mxu0 %v895
    %2424 = vmatprep.subr.bf16.mxu0 0
    %2425 = vmatpush1.bf16.msra.mxu0 0
    %2426 = vmatprep.subr.bf16.mxu0 0
    %2427 = vmatpush1.bf16.msra.mxu0 0
    %2428 = vmatprep.subr.bf16.mxu0 0
    %2429 = vmatpush1.bf16.msra.mxu0 0
    %2430 = vmatprep.subr.bf16.mxu0 0
    %2431 = vmatpush1.bf16.msra.mxu0 0
    %2432 = vmatprep.subr.bf16.mxu0 0
    %2433 = vmatpush1.bf16.msra.mxu0 0
    %2434 = vmatprep.subr.bf16.mxu0 0
    %2435 = vmatpush1.bf16.msra.mxu0 0
    %2436 = vmatprep.subr.bf16.mxu0 0
    %2437 = vmatpush1.bf16.msra.mxu0 0
    %2438 = vmatprep.subr.bf16.mxu0 0
    %2439 = vmatpush1.bf16.msra.mxu0 0
    %2440 = vmatprep.subr.bf16.mxu0 0
    %2441 = vmatpush1.bf16.msra.mxu0 0
    %2442 = vmatprep.subr.bf16.mxu0 0
    %2443 = vmatpush1.bf16.msra.mxu0 0
    %2444 = vmatprep.subr.bf16.mxu0 0
    %2445 = vmatpush1.bf16.msra.mxu0 0
    %2446 = vmatprep.subr.bf16.mxu0 0
    %2447 = vmatpush1.bf16.msra.mxu0 0
    %2448 = vmatprep.subr.bf16.mxu0 0
    %2449 = vmatpush1.bf16.msra.mxu0 0
    %2450 = vmatprep.subr.bf16.mxu0 0
    %2451 = vmatpush1.bf16.msra.mxu0 0
    %2452 = vmatprep.subr.bf16.mxu0 0
    %2453 = vmatpush1.bf16.msra.mxu0 0
    %2454 = vmatprep.mubr.bf16.mxu0 0
    %2455 = vmatmul.mubr.bf16.gmra.mrb[0].mxu0 %v2420
    %v2456 = vpop.f32.mrb[0].mxu0
    %v2457 = vadd.f32 0.0, %v2456
    %v2458 = vpop.f32.mrb[0].mxu0
    %v2459 = vpop.f32.mrb[0].mxu0
    %v2460 = vadd.f32 0.0, %v2459
    %v2461 = vpop.f32.mrb[0].mxu0
    %2462 = vdwg.mxu0
    %v2464 = vsel %vm902, %v2017, 0
    %2466 = vmatprep.subr.bf16.mxu0 0
    %2467 = vmatpush1.bf16.msra.mxu0 %v896
    %2468 = vmatprep.subr.bf16.mxu0 0
    %2469 = vmatpush1.bf16.msra.mxu0 0
    %2470 = vmatprep.subr.bf16.mxu0 0
    %2471 = vmatpush1.bf16.msra.mxu0 0
    %2472 = vmatprep.subr.bf16.mxu0 0
    %2473 = vmatpush1.bf16.msra.mxu0 0
    %2474 = vmatprep.subr.bf16.mxu0 0
    %2475 = vmatpush1.bf16.msra.mxu0 0
    %2476 = vmatprep.subr.bf16.mxu0 0
    %2477 = vmatpush1.bf16.msra.mxu0 0
    %2478 = vmatprep.subr.bf16.mxu0 0
    %2479 = vmatpush1.bf16.msra.mxu0 0
    %2480 = vmatprep.subr.bf16.mxu0 0
    %2481 = vmatpush1.bf16.msra.mxu0 0
    %2482 = vmatprep.subr.bf16.mxu0 0
    %2483 = vmatpush1.bf16.msra.mxu0 0
    %2484 = vmatprep.subr.bf16.mxu0 0
    %2485 = vmatpush1.bf16.msra.mxu0 0
    %2486 = vmatprep.subr.bf16.mxu0 0
    %2487 = vmatpush1.bf16.msra.mxu0 0
    %2488 = vmatprep.subr.bf16.mxu0 0
    %2489 = vmatpush1.bf16.msra.mxu0 0
    %2490 = vmatprep.subr.bf16.mxu0 0
    %2491 = vmatpush1.bf16.msra.mxu0 0
    %2492 = vmatprep.subr.bf16.mxu0 0
    %2493 = vmatpush1.bf16.msra.mxu0 0
    %2494 = vmatprep.subr.bf16.mxu0 0
    %2495 = vmatpush1.bf16.msra.mxu0 0
    %2496 = vmatprep.subr.bf16.mxu0 0
    %2497 = vmatpush1.bf16.msra.mxu0 0
    %2498 = vmatprep.mubr.bf16.mxu0 0
    %2499 = vmatmul.mubr.bf16.gmra.mrb[0].mxu0 %v2464
    %v2500 = vpop.f32.mrb[0].mxu0
    %v2501 = vadd.f32 0.0, %v2500
    %v2502 = vpop.f32.mrb[0].mxu0
    %v2503 = vpop.f32.mrb[0].mxu0
    %v2504 = vadd.f32 0.0, %v2503
    %v2505 = vpop.f32.mrb[0].mxu0
    %2506 = vdwg.mxu0
    %v2508 = vsel %vm902, %v2018, 0
    %2510 = vmatprep.subr.bf16.mxu0 0
    %2511 = vmatpush1.bf16.msra.mxu0 %v897
    %2512 = vmatprep.subr.bf16.mxu0 0
    %2513 = vmatpush1.bf16.msra.mxu0 0
    %2514 = vmatprep.subr.bf16.mxu0 0
    %2515 = vmatpush1.bf16.msra.mxu0 0
    %2516 = vmatprep.subr.bf16.mxu0 0
    %2517 = vmatpush1.bf16.msra.mxu0 0
    %2518 = vmatprep.subr.bf16.mxu0 0
    %2519 = vmatpush1.bf16.msra.mxu0 0
    %2520 = vmatprep.subr.bf16.mxu0 0
    %2521 = vmatpush1.bf16.msra.mxu0 0
    %2522 = vmatprep.subr.bf16.mxu0 0
    %2523 = vmatpush1.bf16.msra.mxu0 0
    %2524 = vmatprep.subr.bf16.mxu0 0
    %2525 = vmatpush1.bf16.msra.mxu0 0
    %2526 = vmatprep.subr.bf16.mxu0 0
    %2527 = vmatpush1.bf16.msra.mxu0 0
    %2528 = vmatprep.subr.bf16.mxu0 0
    %2529 = vmatpush1.bf16.msra.mxu0 0
    %2530 = vmatprep.subr.bf16.mxu0 0
    %2531 = vmatpush1.bf16.msra.mxu0 0
    %2532 = vmatprep.subr.bf16.mxu0 0
    %2533 = vmatpush1.bf16.msra.mxu0 0
    %2534 = vmatprep.subr.bf16.mxu0 0
    %2535 = vmatpush1.bf16.msra.mxu0 0
    %2536 = vmatprep.subr.bf16.mxu0 0
    %2537 = vmatpush1.bf16.msra.mxu0 0
    %2538 = vmatprep.subr.bf16.mxu0 0
    %2539 = vmatpush1.bf16.msra.mxu0 0
    %2540 = vmatprep.subr.bf16.mxu0 0
    %2541 = vmatpush1.bf16.msra.mxu0 0
    %2542 = vmatprep.mubr.bf16.mxu0 0
    %2543 = vmatmul.mubr.bf16.gmra.mrb[0].mxu0 %v2508
    %v2544 = vpop.f32.mrb[0].mxu0
    %v2545 = vadd.f32 0.0, %v2544
    %v2546 = vpop.f32.mrb[0].mxu0
    %v2547 = vpop.f32.mrb[0].mxu0
    %v2548 = vadd.f32 0.0, %v2547
    %v2549 = vpop.f32.mrb[0].mxu0
    %2550 = vdwg.mxu0
    %v2552 = vsel %vm902, %v2019, 0
    %2554 = vmatprep.subr.bf16.mxu0 0
    %2555 = vmatpush1.bf16.msra.mxu0 %v898
    %2556 = vmatprep.subr.bf16.mxu0 0
    %2557 = vmatpush1.bf16.msra.mxu0 0
    %2558 = vmatprep.subr.bf16.mxu0 0
    %2559 = vmatpush1.bf16.msra.mxu0 0
    %2560 = vmatprep.subr.bf16.mxu0 0
    %2561 = vmatpush1.bf16.msra.mxu0 0
    %2562 = vmatprep.subr.bf16.mxu0 0
    %2563 = vmatpush1.bf16.msra.mxu0 0
    %2564 = vmatprep.subr.bf16.mxu0 0
    %2565 = vmatpush1.bf16.msra.mxu0 0
    %2566 = vmatprep.subr.bf16.mxu0 0
    %2567 = vmatpush1.bf16.msra.mxu0 0
    %2568 = vmatprep.subr.bf16.mxu0 0
    %2569 = vmatpush1.bf16.msra.mxu0 0
    %2570 = vmatprep.subr.bf16.mxu0 0
    %2571 = vmatpush1.bf16.msra.mxu0 0
    %2572 = vmatprep.subr.bf16.mxu0 0
    %2573 = vmatpush1.bf16.msra.mxu0 0
    %2574 = vmatprep.subr.bf16.mxu0 0
    %2575 = vmatpush1.bf16.msra.mxu0 0
    %2576 = vmatprep.subr.bf16.mxu0 0
    %2577 = vmatpush1.bf16.msra.mxu0 0
    %2578 = vmatprep.subr.bf16.mxu0 0
    %2579 = vmatpush1.bf16.msra.mxu0 0
    %2580 = vmatprep.subr.bf16.mxu0 0
    %2581 = vmatpush1.bf16.msra.mxu0 0
    %2582 = vmatprep.subr.bf16.mxu0 0
    %2583 = vmatpush1.bf16.msra.mxu0 0
    %2584 = vmatprep.subr.bf16.mxu0 0
    %2585 = vmatpush1.bf16.msra.mxu0 0
    %2586 = vmatprep.mubr.bf16.mxu0 0
    %2587 = vmatmul.mubr.bf16.gmra.mrb[0].mxu0 %v2552
    %v2588 = vpop.f32.mrb[0].mxu0
    %v2589 = vadd.f32 0.0, %v2588
    %v2590 = vpop.f32.mrb[0].mxu0
    %v2591 = vpop.f32.mrb[0].mxu0
    %v2592 = vadd.f32 0.0, %v2591
    %v2593 = vpop.f32.mrb[0].mxu0
    %2594 = vdwg.mxu0
    %v2596 = vsel %vm902, %v2020, 0
    %2598 = vmatprep.subr.bf16.mxu0 0
    %2599 = vmatpush1.bf16.msra.mxu0 %v899
    %2600 = vmatprep.subr.bf16.mxu0 0
    %2601 = vmatpush1.bf16.msra.mxu0 0
    %2602 = vmatprep.subr.bf16.mxu0 0
    %2603 = vmatpush1.bf16.msra.mxu0 0
    %2604 = vmatprep.subr.bf16.mxu0 0
    %2605 = vmatpush1.bf16.msra.mxu0 0
    %2606 = vmatprep.subr.bf16.mxu0 0
    %2607 = vmatpush1.bf16.msra.mxu0 0
    %2608 = vmatprep.subr.bf16.mxu0 0
    %2609 = vmatpush1.bf16.msra.mxu0 0
    %2610 = vmatprep.subr.bf16.mxu0 0
    %2611 = vmatpush1.bf16.msra.mxu0 0
    %2612 = vmatprep.subr.bf16.mxu0 0
    %2613 = vmatpush1.bf16.msra.mxu0 0
    %2614 = vmatprep.subr.bf16.mxu0 0
    %2615 = vmatpush1.bf16.msra.mxu0 0
    %2616 = vmatprep.subr.bf16.mxu0 0
    %2617 = vmatpush1.bf16.msra.mxu0 0
    %2618 = vmatprep.subr.bf16.mxu0 0
    %2619 = vmatpush1.bf16.msra.mxu0 0
    %2620 = vmatprep.subr.bf16.mxu0 0
    %2621 = vmatpush1.bf16.msra.mxu0 0
    %2622 = vmatprep.subr.bf16.mxu0 0
    %2623 = vmatpush1.bf16.msra.mxu0 0
    %2624 = vmatprep.subr.bf16.mxu0 0
    %2625 = vmatpush1.bf16.msra.mxu0 0
    %2626 = vmatprep.subr.bf16.mxu0 0
    %2627 = vmatpush1.bf16.msra.mxu0 0
    %2628 = vmatprep.subr.bf16.mxu0 0
    %2629 = vmatpush1.bf16.msra.mxu0 0
    %2630 = vmatprep.mubr.bf16.mxu0 0
    %2631 = vmatmul.mubr.bf16.gmra.mrb[0].mxu0 %v2596
    %v2632 = vpop.f32.mrb[0].mxu0
    %v2633 = vadd.f32 0.0, %v2632
    %v2634 = vpop.f32.mrb[0].mxu0
    %v2635 = vpop.f32.mrb[0].mxu0
    %v2636 = vadd.f32 0.0, %v2635
    %v2637 = vpop.f32.mrb[0].mxu0
    %2638 = vdwg.mxu0
    %v2640 = vsel %vm902, %v2021, 0
    %2642 = vmatprep.subr.bf16.mxu0 0
    %2643 = vmatpush1.bf16.msra.mxu0 %v900
    %2644 = vmatprep.subr.bf16.mxu0 0
    %2645 = vmatpush1.bf16.msra.mxu0 0
    %2646 = vmatprep.subr.bf16.mxu0 0
    %2647 = vmatpush1.bf16.msra.mxu0 0
    %2648 = vmatprep.subr.bf16.mxu0 0
    %2649 = vmatpush1.bf16.msra.mxu0 0
    %2650 = vmatprep.subr.bf16.mxu0 0
    %2651 = vmatpush1.bf16.msra.mxu0 0
    %2652 = vmatprep.subr.bf16.mxu0 0
    %2653 = vmatpush1.bf16.msra.mxu0 0
    %2654 = vmatprep.subr.bf16.mxu0 0
    %2655 = vmatpush1.bf16.msra.mxu0 0
    %2656 = vmatprep.subr.bf16.mxu0 0
    %2657 = vmatpush1.bf16.msra.mxu0 0
    %2658 = vmatprep.subr.bf16.mxu0 0
    %2659 = vmatpush1.bf16.msra.mxu0 0
    %2660 = vmatprep.subr.bf16.mxu0 0
    %2661 = vmatpush1.bf16.msra.mxu0 0
    %2662 = vmatprep.subr.bf16.mxu0 0
    %2663 = vmatpush1.bf16.msra.mxu0 0
    %2664 = vmatprep.subr.bf16.mxu0 0
    %2665 = vmatpush1.bf16.msra.mxu0 0
    %2666 = vmatprep.subr.bf16.mxu0 0
    %2667 = vmatpush1.bf16.msra.mxu0 0
    %2668 = vmatprep.subr.bf16.mxu0 0
    %2669 = vmatpush1.bf16.msra.mxu0 0
    %2670 = vmatprep.subr.bf16.mxu0 0
    %2671 = vmatpush1.bf16.msra.mxu0 0
    %2672 = vmatprep.subr.bf16.mxu0 0
    %2673 = vmatpush1.bf16.msra.mxu0 0
    %2674 = vmatprep.mubr.bf16.mxu0 0
    %2675 = vmatmul.mubr.bf16.gmra.mrb[0].mxu0 %v2640
    %v2676 = vpop.f32.mrb[0].mxu0
    %v2677 = vadd.f32 0.0, %v2676
    %v2678 = vpop.f32.mrb[0].mxu0
    %v2679 = vpop.f32.mrb[0].mxu0
    %v2680 = vadd.f32 0.0, %v2679
    %v2681 = vpop.f32.mrb[0].mxu0
    %2682 = vdwg.mxu0
    %v2684 = vsel %vm902, %v2022, 0
    %2686 = vmatprep.subr.bf16.mxu0 0
    %2687 = vmatpush1.bf16.msra.mxu0 %v901
    %2688 = vmatprep.subr.bf16.mxu0 0
    %2689 = vmatpush1.bf16.msra.mxu0 0
    %2690 = vmatprep.subr.bf16.mxu0 0
    %2691 = vmatpush1.bf16.msra.mxu0 0
    %2692 = vmatprep.subr.bf16.mxu0 0
    %2693 = vmatpush1.bf16.msra.mxu0 0
    %2694 = vmatprep.subr.bf16.mxu0 0
    %2695 = vmatpush1.bf16.msra.mxu0 0
    %2696 = vmatprep.subr.bf16.mxu0 0
    %2697 = vmatpush1.bf16.msra.mxu0 0
    %2698 = vmatprep.subr.bf16.mxu0 0
    %2699 = vmatpush1.bf16.msra.mxu0 0
    %2700 = vmatprep.subr.bf16.mxu0 0
    %2701 = vmatpush1.bf16.msra.mxu0 0
    %2702 = vmatprep.subr.bf16.mxu0 0
    %2703 = vmatpush1.bf16.msra.mxu0 0
    %2704 = vmatprep.subr.bf16.mxu0 0
    %2705 = vmatpush1.bf16.msra.mxu0 0
    %2706 = vmatprep.subr.bf16.mxu0 0
    %2707 = vmatpush1.bf16.msra.mxu0 0
    %2708 = vmatprep.subr.bf16.mxu0 0
    %2709 = vmatpush1.bf16.msra.mxu0 0
    %2710 = vmatprep.subr.bf16.mxu0 0
    %2711 = vmatpush1.bf16.msra.mxu0 0
    %2712 = vmatprep.subr.bf16.mxu0 0
    %2713 = vmatpush1.bf16.msra.mxu0 0
    %2714 = vmatprep.subr.bf16.mxu0 0
    %2715 = vmatpush1.bf16.msra.mxu0 0
    %2716 = vmatprep.subr.bf16.mxu0 0
    %2717 = vmatpush1.bf16.msra.mxu0 0
    %2718 = vmatprep.mubr.bf16.mxu0 0
    %2719 = vmatmul.mubr.bf16.gmra.mrb[0].mxu0 %v2684
    %v2720 = vpop.f32.mrb[0].mxu0
    %v2721 = vadd.f32 0.0, %v2720
    %v2722 = vpop.f32.mrb[0].mxu0
    %v2723 = vpop.f32.mrb[0].mxu0
    %v2724 = vadd.f32 0.0, %v2723
    %v2725 = vpop.f32.mrb[0].mxu0
    %2726 = vdwg.mxu0
    %2731 = vrot.lane.b32.xlu0 %v2149, 16
    %v2732 = vpop.permute.xlu0 %2731
    %2733 = vrot.lane.b32.xlu0 %v2152, 16
    %v2734 = vpop.permute.xlu0 %2733
    %2735 = vrot.lane.b32.xlu0 %v2193, 16
    %v2736 = vpop.permute.xlu0 %2735
    %2737 = vrot.lane.b32.xlu0 %v2196, 16
    %v2738 = vpop.permute.xlu0 %2737
    %2747 = vrot.lane.b32.xlu0 %v2237, 32
    %v2748 = vpop.permute.xlu0 %2747
    %2749 = vrot.lane.b32.xlu0 %v2240, 32
    %v2750 = vpop.permute.xlu0 %2749
    %2751 = vrot.lane.b32.xlu0 %v2281, 32
    %v2752 = vpop.permute.xlu0 %2751
    %2753 = vrot.lane.b32.xlu0 %v2284, 32
    %v2754 = vpop.permute.xlu0 %2753
    %2763 = vrot.lane.b32.xlu0 %v2325, 48
    %v2764 = vpop.permute.xlu0 %2763
    %2765 = vrot.lane.b32.xlu0 %v2328, 48
    %v2766 = vpop.permute.xlu0 %2765
    %2767 = vrot.lane.b32.xlu0 %v2369, 48
    %v2768 = vpop.permute.xlu0 %2767
    %2769 = vrot.lane.b32.xlu0 %v2372, 48
    %v2770 = vpop.permute.xlu0 %2769
    %2779 = vrot.lane.b32.xlu0 %v2413, 64
    %v2780 = vpop.permute.xlu0 %2779
    %2781 = vrot.lane.b32.xlu0 %v2416, 64
    %v2782 = vpop.permute.xlu0 %2781
    %2783 = vrot.lane.b32.xlu0 %v2457, 64
    %v2784 = vpop.permute.xlu0 %2783
    %2785 = vrot.lane.b32.xlu0 %v2460, 64
    %v2786 = vpop.permute.xlu0 %2785
    %2795 = vrot.lane.b32.xlu0 %v2501, 80
    %v2796 = vpop.permute.xlu0 %2795
    %2797 = vrot.lane.b32.xlu0 %v2504, 80
    %v2798 = vpop.permute.xlu0 %2797
    %2799 = vrot.lane.b32.xlu0 %v2545, 80
    %v2800 = vpop.permute.xlu0 %2799
    %2801 = vrot.lane.b32.xlu0 %v2548, 80
    %v2802 = vpop.permute.xlu0 %2801
    %2811 = vrot.lane.b32.xlu0 %v2589, 96
    %v2812 = vpop.permute.xlu0 %2811
    %2813 = vrot.lane.b32.xlu0 %v2592, 96
    %v2814 = vpop.permute.xlu0 %2813
    %2815 = vrot.lane.b32.xlu0 %v2633, 96
    %v2816 = vpop.permute.xlu0 %2815
    %2817 = vrot.lane.b32.xlu0 %v2636, 96
    %v2818 = vpop.permute.xlu0 %2817
    %2827 = vrot.lane.b32.xlu0 %v2677, 112
    %v2828 = vpop.permute.xlu0 %2827
    %2829 = vrot.lane.b32.xlu0 %v2680, 112
    %v2830 = vpop.permute.xlu0 %2829
    %2831 = vrot.lane.b32.xlu0 %v2721, 112
    %v2832 = vpop.permute.xlu0 %2831
    %2833 = vrot.lane.b32.xlu0 %v2724, 112
    %v2834 = vpop.permute.xlu0 %2833
    %v2839 = vsel %vm902, %v2061, %v2732
    %v2840 = vsel %vm902, %v2064, %v2734
    %v2841 = vsel %vm902, %v2105, %v2736
    %v2842 = vsel %vm902, %v2108, %v2738
    %vm2843 = vcmask 261120
    %v2844 = vsel %vm2843, %v2839, %v2748
    %v2845 = vsel %vm2843, %v2840, %v2750
    %v2846 = vsel %vm2843, %v2841, %v2752
    %v2847 = vsel %vm2843, %v2842, %v2754
    %vm2848 = vcmask 392192
    %v2849 = vsel %vm2848, %v2844, %v2764
    %v2850 = vsel %vm2848, %v2845, %v2766
    %v2851 = vsel %vm2848, %v2846, %v2768
    %v2852 = vsel %vm2848, %v2847, %v2770
    %vm2853 = vcmask 523264
    %v2854 = vsel %vm2853, %v2849, %v2780
    %v2855 = vsel %vm2853, %v2850, %v2782
    %v2856 = vsel %vm2853, %v2851, %v2784
    %v2857 = vsel %vm2853, %v2852, %v2786
    %vm2858 = vcmask 654336
    %v2859 = vsel %vm2858, %v2854, %v2796
    %v2860 = vsel %vm2858, %v2855, %v2798
    %v2861 = vsel %vm2858, %v2856, %v2800
    %v2862 = vsel %vm2858, %v2857, %v2802
    %vm2863 = vcmask 785408
    %v2864 = vsel %vm2863, %v2859, %v2812
    %v2865 = vsel %vm2863, %v2860, %v2814
    %v2866 = vsel %vm2863, %v2861, %v2816
    %v2867 = vsel %vm2863, %v2862, %v2818
    %vm2868 = vcmask 916480
    %v2869 = vsel %vm2868, %v2864, %v2828
    %v2870 = vsel %vm2868, %v2865, %v2830
    %v2871 = vsel %vm2868, %v2866, %v2832
    %v2872 = vsel %vm2868, %v2867, %v2834
    %v2873 = vpack.c.bf16 %v2870, %v2869
    %v2874 = vpack.c.bf16 %v2872, %v2871
    %v2875 = vld [vmem:[#allocation10] sm:$0xf]
    %v2876 = vld [vmem:[#allocation10 + $0x4] sm:$0xf]
    %v2877 = vld [vmem:[#allocation10 + $0x8] sm:$0xf]
    %v2878 = vld [vmem:[#allocation10 + $0xc] sm:$0xf]
    %v2879 = vld [vmem:[#allocation10 + $0x10] sm:$0xf]
    %v2880 = vld [vmem:[#allocation10 + $0x14] sm:$0xf]
    %v2881 = vld [vmem:[#allocation10 + $0x18] sm:$0xf]
    %v2882 = vld [vmem:[#allocation10 + $0x1c] sm:$0xf]
    %v2883 = vld [vmem:[#allocation10 + $0x20] sm:$0xf]
    %v2884 = vld [vmem:[#allocation10 + $0x24] sm:$0xf]
    %v2885 = vld [vmem:[#allocation10 + $0x28] sm:$0xf]
    %v2886 = vld [vmem:[#allocation10 + $0x2c] sm:$0xf]
    %v2887 = vld [vmem:[#allocation10 + $0x30] sm:$0xf]
    %v2888 = vld [vmem:[#allocation10 + $0x34] sm:$0xf]
    %v2889 = vld [vmem:[#allocation10 + $0x38] sm:$0xf]
    %v2890 = vld [vmem:[#allocation10 + $0x3c] sm:$0xf]
    %v2891 = vld [vmem:[%s10] sm:$0x1]
    %v2893 = vlaneseq
    %v2894 = vshrl.u32 %v2893, 7
    %v2895 = vsub.s32 0, %v2894
    %v2896 = vrot.slane %v2891, %v2895
    %v2914 = vunpack.c.l.b16 %v2875
    %v2915 = vunpack.c.l.b16 %v2876
    %v2916 = vunpack.c.l.b16 %v2877
    %v2917 = vunpack.c.l.b16 %v2878
    %v2918 = vunpack.c.l.b16 %v2879
    %v2919 = vunpack.c.l.b16 %v2880
    %v2920 = vunpack.c.l.b16 %v2881
    %v2921 = vunpack.c.l.b16 %v2882
    %v2922 = vunpack.c.l.b16 %v2883
    %v2923 = vunpack.c.l.b16 %v2884
    %v2924 = vunpack.c.l.b16 %v2885
    %v2925 = vunpack.c.l.b16 %v2886
    %v2926 = vunpack.c.l.b16 %v2887
    %v2927 = vunpack.c.l.b16 %v2888
    %v2928 = vunpack.c.l.b16 %v2889
    %v2929 = vunpack.c.l.b16 %v2890
    %v2930 = vpack.c.b16 %v2915, %v2914
    %v2931 = vpack.c.b16 %v2917, %v2916
    %v2932 = vpack.c.b16 %v2919, %v2918
    %v2933 = vpack.c.b16 %v2921, %v2920
    %v2934 = vpack.c.b16 %v2923, %v2922
    %v2935 = vpack.c.b16 %v2925, %v2924
    %v2936 = vpack.c.b16 %v2927, %v2926
    %v2937 = vpack.c.b16 %v2929, %v2928
    %2946 = vmatprep.subr.bf16.mxu0 0
    %2947 = vmatpush1.bf16.msra.mxu0 %v2930
    %2948 = vmatprep.subr.bf16.mxu0 0
    %2949 = vmatpush1.bf16.msra.mxu0 %v2931
    %2950 = vmatprep.subr.bf16.mxu0 0
    %2951 = vmatpush1.bf16.msra.mxu0 %v2932
    %2952 = vmatprep.subr.bf16.mxu0 0
    %2953 = vmatpush1.bf16.msra.mxu0 %v2933
    %2954 = vmatprep.subr.bf16.mxu0 0
    %2955 = vmatpush1.bf16.msra.mxu0 %v2934
    %2956 = vmatprep.subr.bf16.mxu0 0
    %2957 = vmatpush1.bf16.msra.mxu0 %v2935
    %2958 = vmatprep.subr.bf16.mxu0 0
    %2959 = vmatpush1.bf16.msra.mxu0 %v2936
    %2960 = vmatprep.subr.bf16.mxu0 0
    %2961 = vmatpush1.bf16.msra.mxu0 %v2937
    %2962 = vmatprep.subr.bf16.mxu0 0
    %2963 = vmatpush1.bf16.msra.mxu0 0
    %2964 = vmatprep.subr.bf16.mxu0 0
    %2965 = vmatpush1.bf16.msra.mxu0 0
    %2966 = vmatprep.subr.bf16.mxu0 0
    %2967 = vmatpush1.bf16.msra.mxu0 0
    %2968 = vmatprep.subr.bf16.mxu0 0
    %2969 = vmatpush1.bf16.msra.mxu0 0
    %2970 = vmatprep.subr.bf16.mxu0 0
    %2971 = vmatpush1.bf16.msra.mxu0 0
    %2972 = vmatprep.subr.bf16.mxu0 0
    %2973 = vmatpush1.bf16.msra.mxu0 0
    %2974 = vmatprep.subr.bf16.mxu0 0
    %2975 = vmatpush1.bf16.msra.mxu0 0
    %2976 = vmatprep.subr.bf16.mxu0 0
    %2977 = vmatpush1.bf16.msra.mxu0 0
    %2978 = vmatprep.mubr.bf16.mxu0 0
    %2979 = vmatmul.mubr.bf16.gmra.mrb[0].mxu0 %v2873
    %v2980 = vpop.f32.mrb[0].mxu0
    %v2981 = vadd.f32 %v2896, %v2980
    %v2982 = vpop.f32.mrb[0].mxu0
    %v2983 = vpop.f32.mrb[0].mxu0
    %v2984 = vadd.f32 %v2896, %v2983
    %v2985 = vpop.f32.mrb[0].mxu0
    %2986 = vmatprep.mubr.bf16.mxu0 0
    %2987 = vmatmul.mubr.bf16.gmra.mrb[0].mxu0 %v2874
    %v2988 = vpop.f32.mrb[0].mxu0
    %v2989 = vadd.f32 %v2896, %v2988
    %v2990 = vpop.f32.mrb[0].mxu0
    %v2991 = vpop.f32.mrb[0].mxu0
    %v2992 = vadd.f32 %v2896, %v2991
    %v2993 = vpop.f32.mrb[0].mxu0
    %2994 = vdwg.mxu0
    %v2995 = vadd.f32 %v153, %v2981
    %v2996 = vadd.f32 %v154, %v2984
    %v2997 = vadd.f32 %v155, %v2989
    %v2998 = vadd.f32 %v156, %v2992
    %v2999 = vld [vmem:[%s11] sm:$0x1]
    %v3000 = vld [vmem:[%s12] sm:$0x1]
    %3001 = vadd.xlane.f32.xlu0 %v2995
    %v3002 = vpop.xlane.xlu0 %3001
    %3003 = vadd.xlane.f32.xlu0 %v2996
    %v3004 = vpop.xlane.xlu0 %3003
    %3005 = vadd.xlane.f32.xlu0 %v2997
    %v3006 = vpop.xlane.xlu0 %3005
    %3007 = vadd.xlane.f32.xlu0 %v2998
    %v3008 = vpop.xlane.xlu0 %3007
    %v3009 = vmul.f32 %v3002, %v167
    %v3010 = vmul.f32 %v3004, %v167
    %v3011 = vmul.f32 %v3006, %v167
    %v3012 = vmul.f32 %v3008, %v167
    %v3013 = vsub.f32 %v2995, %v3009
    %v3014 = vsub.f32 %v2996, %v3010
    %v3015 = vsub.f32 %v2997, %v3011
    %v3016 = vsub.f32 %v2998, %v3012
    %v3017 = vmul.f32 %v3013, %v3013
    %v3018 = vmul.f32 %v3014, %v3014
    %v3019 = vmul.f32 %v3015, %v3015
    %v3020 = vmul.f32 %v3016, %v3016
    %3021 = vadd.xlane.f32.xlu0 %v3017
    %v3022 = vpop.xlane.xlu0 %3021
    %3023 = vadd.xlane.f32.xlu0 %v3018
    %v3024 = vpop.xlane.xlu0 %3023
    %3025 = vadd.xlane.f32.xlu0 %v3019
    %v3026 = vpop.xlane.xlu0 %3025
    %3027 = vadd.xlane.f32.xlu0 %v3020
    %v3028 = vpop.xlane.xlu0 %3027
    %v3029 = vmul.f32 %v3022, %v167
    %v3030 = vmul.f32 %v3024, %v167
    %v3031 = vmul.f32 %v3026, %v167
    %v3032 = vmul.f32 %v3028, %v167
    %v3033 = vadd.f32 %v3029, 1e-05
    %v3034 = vadd.f32 %v3030, 1e-05
    %v3035 = vadd.f32 %v3031, 1e-05
    %v3036 = vadd.f32 %v3032, 1e-05
    %v3037 = vrsqrt.pop %v3033
    %v3038 = vrsqrt.pop %v3034
    %v3039 = vrsqrt.pop %v3035
    %v3040 = vrsqrt.pop %v3036
    %v3041 = vmul.f32 %v3013, %v3037
    %v3042 = vmul.f32 %v3014, %v3038
    %v3043 = vmul.f32 %v3015, %v3039
    %v3044 = vmul.f32 %v3016, %v3040
    %v3046 = vlaneseq
    %v3047 = vshrl.u32 %v3046, 7
    %v3048 = vsub.s32 0, %v3047
    %v3049 = vrot.slane %v2999, %v3048
    %v3051 = vmul.f32 %v3041, %v3049
    %v3052 = vmul.f32 %v3042, %v3049
    %v3053 = vmul.f32 %v3043, %v3049
    %v3054 = vmul.f32 %v3044, %v3049
    %v3056 = vlaneseq
    %v3057 = vshrl.u32 %v3056, 7
    %v3058 = vsub.s32 0, %v3057
    %v3059 = vrot.slane %v3000, %v3058
    %v3061 = vadd.f32 %v3051, %v3059
    %v3062 = vadd.f32 %v3052, %v3059
    %v3063 = vadd.f32 %v3053, %v3059
    %v3064 = vadd.f32 %v3054, %v3059
    %v3065 = vpack.c.bf16 %v3062, %v3061
    %v3066 = vpack.c.bf16 %v3064, %v3063
    %v3067 = vld [vmem:[#allocation11] sm:$0xff]
    %v3068 = vld [vmem:[#allocation11 + $0x8] sm:$0xff]
    %v3069 = vld [vmem:[#allocation11 + $0x10] sm:$0xff]
    %v3070 = vld [vmem:[#allocation11 + $0x18] sm:$0xff]
    %v3071 = vld [vmem:[#allocation11 + $0x20] sm:$0xff]
    %v3072 = vld [vmem:[#allocation11 + $0x28] sm:$0xff]
    %v3073 = vld [vmem:[#allocation11 + $0x30] sm:$0xff]
    %v3074 = vld [vmem:[#allocation11 + $0x38] sm:$0xff]
    %v3075 = vld [vmem:[#allocation11 + $0x40] sm:$0xff]
    %v3076 = vld [vmem:[#allocation11 + $0x48] sm:$0xff]
    %v3077 = vld [vmem:[#allocation11 + $0x50] sm:$0xff]
    %v3078 = vld [vmem:[#allocation11 + $0x58] sm:$0xff]
    %v3079 = vld [vmem:[#allocation11 + $0x60] sm:$0xff]
    %v3080 = vld [vmem:[#allocation11 + $0x68] sm:$0xff]
    %v3081 = vld [vmem:[#allocation11 + $0x70] sm:$0xff]
    %v3082 = vld [vmem:[#allocation11 + $0x78] sm:$0xff]
    %v3083 = vld [vmem:[#allocation11 + $0x80] sm:$0xff]
    %v3084 = vld [vmem:[#allocation11 + $0x88] sm:$0xff]
    %v3085 = vld [vmem:[#allocation11 + $0x90] sm:$0xff]
    %v3086 = vld [vmem:[#allocation11 + $0x98] sm:$0xff]
    %v3087 = vld [vmem:[#allocation11 + $0xa0] sm:$0xff]
    %v3088 = vld [vmem:[#allocation11 + $0xa8] sm:$0xff]
    %v3089 = vld [vmem:[#allocation11 + $0xb0] sm:$0xff]
    %v3090 = vld [vmem:[#allocation11 + $0xb8] sm:$0xff]
    %v3091 = vld [vmem:[#allocation11 + $0xc0] sm:$0xff]
    %v3092 = vld [vmem:[#allocation11 + $0xc8] sm:$0xff]
    %v3093 = vld [vmem:[#allocation11 + $0xd0] sm:$0xff]
    %v3094 = vld [vmem:[#allocation11 + $0xd8] sm:$0xff]
    %v3095 = vld [vmem:[#allocation11 + $0xe0] sm:$0xff]
    %v3096 = vld [vmem:[#allocation11 + $0xe8] sm:$0xff]
    %v3097 = vld [vmem:[#allocation11 + $0xf0] sm:$0xff]
    %v3098 = vld [vmem:[#allocation11 + $0xf8] sm:$0xff]
    %v3099 = vld [vmem:[%s14] sm:$0xf]
    %v3101 = vlaneseq
    %v3102 = vshrl.u32 %v3101, 7
    %v3103 = vsub.s32 0, %v3102
    %v3104 = vrot.slane %v3099, %v3103
    %v3105 = vlaneseq
    %v3106 = vshrl.u32 %v3105, 7
    %v3107 = vsub.s32 1, %v3106
    %v3108 = vrot.slane %v3099, %v3107
    %v3109 = vlaneseq
    %v3110 = vshrl.u32 %v3109, 7
    %v3111 = vsub.s32 2, %v3110
    %v3112 = vrot.slane %v3099, %v3111
    %v3113 = vlaneseq
    %v3114 = vshrl.u32 %v3113, 7
    %v3115 = vsub.s32 3, %v3114
    %v3116 = vrot.slane %v3099, %v3115
    %v3153 = vunpack.c.l.b16 %v3067
    %v3154 = vunpack.c.h.b16 %v3067
    %v3155 = vunpack.c.l.b16 %v3068
    %v3156 = vunpack.c.h.b16 %v3068
    %v3157 = vunpack.c.l.b16 %v3069
    %v3158 = vunpack.c.h.b16 %v3069
    %v3159 = vunpack.c.l.b16 %v3070
    %v3160 = vunpack.c.h.b16 %v3070
    %v3161 = vunpack.c.l.b16 %v3071
    %v3162 = vunpack.c.h.b16 %v3071
    %v3163 = vunpack.c.l.b16 %v3072
    %v3164 = vunpack.c.h.b16 %v3072
    %v3165 = vunpack.c.l.b16 %v3073
    %v3166 = vunpack.c.h.b16 %v3073
    %v3167 = vunpack.c.l.b16 %v3074
    %v3168 = vunpack.c.h.b16 %v3074
    %v3169 = vunpack.c.l.b16 %v3075
    %v3170 = vunpack.c.h.b16 %v3075
    %v3171 = vunpack.c.l.b16 %v3076
    %v3172 = vunpack.c.h.b16 %v3076
    %v3173 = vunpack.c.l.b16 %v3077
    %v3174 = vunpack.c.h.b16 %v3077
    %v3175 = vunpack.c.l.b16 %v3078
    %v3176 = vunpack.c.h.b16 %v3078
    %v3177 = vunpack.c.l.b16 %v3079
    %v3178 = vunpack.c.h.b16 %v3079
    %v3179 = vunpack.c.l.b16 %v3080
    %v3180 = vunpack.c.h.b16 %v3080
    %v3181 = vunpack.c.l.b16 %v3081
    %v3182 = vunpack.c.h.b16 %v3081
    %v3183 = vunpack.c.l.b16 %v3082
    %v3184 = vunpack.c.h.b16 %v3082
    %v3185 = vunpack.c.l.b16 %v3083
    %v3186 = vunpack.c.h.b16 %v3083
    %v3187 = vunpack.c.l.b16 %v3084
    %v3188 = vunpack.c.h.b16 %v3084
    %v3189 = vunpack.c.l.b16 %v3085
    %v3190 = vunpack.c.h.b16 %v3085
    %v3191 = vunpack.c.l.b16 %v3086
    %v3192 = vunpack.c.h.b16 %v3086
    %v3193 = vunpack.c.l.b16 %v3087
    %v3194 = vunpack.c.h.b16 %v3087
    %v3195 = vunpack.c.l.b16 %v3088
    %v3196 = vunpack.c.h.b16 %v3088
    %v3197 = vunpack.c.l.b16 %v3089
    %v3198 = vunpack.c.h.b16 %v3089
    %v3199 = vunpack.c.l.b16 %v3090
    %v3200 = vunpack.c.h.b16 %v3090
    %v3201 = vunpack.c.l.b16 %v3091
    %v3202 = vunpack.c.h.b16 %v3091
    %v3203 = vunpack.c.l.b16 %v3092
    %v3204 = vunpack.c.h.b16 %v3092
    %v3205 = vunpack.c.l.b16 %v3093
    %v3206 = vunpack.c.h.b16 %v3093
    %v3207 = vunpack.c.l.b16 %v3094
    %v3208 = vunpack.c.h.b16 %v3094
    %v3209 = vunpack.c.l.b16 %v3095
    %v3210 = vunpack.c.h.b16 %v3095
    %v3211 = vunpack.c.l.b16 %v3096
    %v3212 = vunpack.c.h.b16 %v3096
    %v3213 = vunpack.c.l.b16 %v3097
    %v3214 = vunpack.c.h.b16 %v3097
    %v3215 = vunpack.c.l.b16 %v3098
    %v3216 = vunpack.c.h.b16 %v3098
    %v3217 = vpack.c.b16 %v3157, %v3153
    %v3218 = vpack.c.b16 %v3158, %v3154
    %v3219 = vpack.c.b16 %v3159, %v3155
    %v3220 = vpack.c.b16 %v3160, %v3156
    %v3221 = vpack.c.b16 %v3165, %v3161
    %v3222 = vpack.c.b16 %v3166, %v3162
    %v3223 = vpack.c.b16 %v3167, %v3163
    %v3224 = vpack.c.b16 %v3168, %v3164
    %v3225 = vpack.c.b16 %v3173, %v3169
    %v3226 = vpack.c.b16 %v3174, %v3170
    %v3227 = vpack.c.b16 %v3175, %v3171
    %v3228 = vpack.c.b16 %v3176, %v3172
    %v3229 = vpack.c.b16 %v3181, %v3177
    %v3230 = vpack.c.b16 %v3182, %v3178
    %v3231 = vpack.c.b16 %v3183, %v3179
    %v3232 = vpack.c.b16 %v3184, %v3180
    %v3233 = vpack.c.b16 %v3189, %v3185
    %v3234 = vpack.c.b16 %v3190, %v3186
    %v3235 = vpack.c.b16 %v3191, %v3187
    %v3236 = vpack.c.b16 %v3192, %v3188
    %v3237 = vpack.c.b16 %v3197, %v3193
    %v3238 = vpack.c.b16 %v3198, %v3194
    %v3239 = vpack.c.b16 %v3199, %v3195
    %v3240 = vpack.c.b16 %v3200, %v3196
    %v3241 = vpack.c.b16 %v3205, %v3201
    %v3242 = vpack.c.b16 %v3206, %v3202
    %v3243 = vpack.c.b16 %v3207, %v3203
    %v3244 = vpack.c.b16 %v3208, %v3204
    %v3245 = vpack.c.b16 %v3213, %v3209
    %v3246 = vpack.c.b16 %v3214, %v3210
    %v3247 = vpack.c.b16 %v3215, %v3211
    %v3248 = vpack.c.b16 %v3216, %v3212
    %3281 = vmatprep.subr.bf16.mxu0 %v3218
    %3282 = vmatpush1.bf16.msra.mxu0 %v3217
    %3283 = vmatprep.subr.bf16.mxu0 %v3222
    %3284 = vmatpush1.bf16.msra.mxu0 %v3221
    %3285 = vmatprep.subr.bf16.mxu0 %v3226
    %3286 = vmatpush1.bf16.msra.mxu0 %v3225
    %3287 = vmatprep.subr.bf16.mxu0 %v3230
    %3288 = vmatpush1.bf16.msra.mxu0 %v3229
    %3289 = vmatprep.subr.bf16.mxu0 %v3234
    %3290 = vmatpush1.bf16.msra.mxu0 %v3233
    %3291 = vmatprep.subr.bf16.mxu0 %v3238
    %3292 = vmatpush1.bf16.msra.mxu0 %v3237
    %3293 = vmatprep.subr.bf16.mxu0 %v3242
    %3294 = vmatpush1.bf16.msra.mxu0 %v3241
    %3295 = vmatprep.subr.bf16.mxu0 %v3246
    %3296 = vmatpush1.bf16.msra.mxu0 %v3245
    %3297 = vmatprep.subr.bf16.mxu0 0
    %3298 = vmatpush1.bf16.msra.mxu0 0
    %3299 = vmatprep.subr.bf16.mxu0 0
    %3300 = vmatpush1.bf16.msra.mxu0 0
    %3301 = vmatprep.subr.bf16.mxu0 0
    %3302 = vmatpush1.bf16.msra.mxu0 0
    %3303 = vmatprep.subr.bf16.mxu0 0
    %3304 = vmatpush1.bf16.msra.mxu0 0
    %3305 = vmatprep.subr.bf16.mxu0 0
    %3306 = vmatpush1.bf16.msra.mxu0 0
    %3307 = vmatprep.subr.bf16.mxu0 0
    %3308 = vmatpush1.bf16.msra.mxu0 0
    %3309 = vmatprep.subr.bf16.mxu0 0
    %3310 = vmatpush1.bf16.msra.mxu0 0
    %3311 = vmatprep.subr.bf16.mxu0 0
    %3312 = vmatpush1.bf16.msra.mxu0 0
    %3313 = vmatprep.mubr.bf16.mxu0 0
    %3314 = vmatmul.mubr.bf16.gmra.mrb[0].mxu0 %v3065
    %v3315 = vpop.f32.mrb[0].mxu0
    %v3316 = vadd.f32 %v3104, %v3315
    %v3317 = vpop.f32.mrb[0].mxu0
    %v3318 = vadd.f32 %v3108, %v3317
    %v3319 = vpop.f32.mrb[0].mxu0
    %v3320 = vadd.f32 %v3104, %v3319
    %v3321 = vpop.f32.mrb[0].mxu0
    %v3322 = vadd.f32 %v3108, %v3321
    %3323 = vmatprep.mubr.bf16.mxu0 0
    %3324 = vmatmul.mubr.bf16.gmra.mrb[0].mxu0 %v3066
    %v3325 = vpop.f32.mrb[0].mxu0
    %v3326 = vadd.f32 %v3104, %v3325
    %v3327 = vpop.f32.mrb[0].mxu0
    %v3328 = vadd.f32 %v3108, %v3327
    %v3329 = vpop.f32.mrb[0].mxu0
    %v3330 = vadd.f32 %v3104, %v3329
    %v3331 = vpop.f32.mrb[0].mxu0
    %v3332 = vadd.f32 %v3108, %v3331
    %3333 = vdwg.mxu0
    %3334 = vmatprep.subr.bf16.mxu0 %v3220
    %3335 = vmatpush1.bf16.msra.mxu0 %v3219
    %3336 = vmatprep.subr.bf16.mxu0 %v3224
    %3337 = vmatpush1.bf16.msra.mxu0 %v3223
    %3338 = vmatprep.subr.bf16.mxu0 %v3228
    %3339 = vmatpush1.bf16.msra.mxu0 %v3227
    %3340 = vmatprep.subr.bf16.mxu0 %v3232
    %3341 = vmatpush1.bf16.msra.mxu0 %v3231
    %3342 = vmatprep.subr.bf16.mxu0 %v3236
    %3343 = vmatpush1.bf16.msra.mxu0 %v3235
    %3344 = vmatprep.subr.bf16.mxu0 %v3240
    %3345 = vmatpush1.bf16.msra.mxu0 %v3239
    %3346 = vmatprep.subr.bf16.mxu0 %v3244
    %3347 = vmatpush1.bf16.msra.mxu0 %v3243
    %3348 = vmatprep.subr.bf16.mxu0 %v3248
    %3349 = vmatpush1.bf16.msra.mxu0 %v3247
    %3350 = vmatprep.subr.bf16.mxu0 0
    %3351 = vmatpush1.bf16.msra.mxu0 0
    %3352 = vmatprep.subr.bf16.mxu0 0
    %3353 = vmatpush1.bf16.msra.mxu0 0
    %3354 = vmatprep.subr.bf16.mxu0 0
    %3355 = vmatpush1.bf16.msra.mxu0 0
    %3356 = vmatprep.subr.bf16.mxu0 0
    %3357 = vmatpush1.bf16.msra.mxu0 0
    %3358 = vmatprep.subr.bf16.mxu0 0
    %3359 = vmatpush1.bf16.msra.mxu0 0
    %3360 = vmatprep.subr.bf16.mxu0 0
    %3361 = vmatpush1.bf16.msra.mxu0 0
    %3362 = vmatprep.subr.bf16.mxu0 0
    %3363 = vmatpush1.bf16.msra.mxu0 0
    %3364 = vmatprep.subr.bf16.mxu0 0
    %3365 = vmatpush1.bf16.msra.mxu0 0
    %3366 = vmatprep.mubr.bf16.mxu0 0
    %3367 = vmatmul.mubr.bf16.gmra.mrb[0].mxu0 %v3065
    %v3368 = vpop.f32.mrb[0].mxu0
    %v3369 = vadd.f32 %v3112, %v3368
    %v3370 = vpop.f32.mrb[0].mxu0
    %v3371 = vadd.f32 %v3116, %v3370
    %v3372 = vpop.f32.mrb[0].mxu0
    %v3373 = vadd.f32 %v3112, %v3372
    %v3374 = vpop.f32.mrb[0].mxu0
    %v3375 = vadd.f32 %v3116, %v3374
    %3376 = vmatprep.mubr.bf16.mxu0 0
    %3377 = vmatmul.mubr.bf16.gmra.mrb[0].mxu0 %v3066
    %v3378 = vpop.f32.mrb[0].mxu0
    %v3379 = vadd.f32 %v3112, %v3378
    %v3380 = vpop.f32.mrb[0].mxu0
    %v3381 = vadd.f32 %v3116, %v3380
    %v3382 = vpop.f32.mrb[0].mxu0
    %v3383 = vadd.f32 %v3112, %v3382
    %v3384 = vpop.f32.mrb[0].mxu0
    %v3385 = vadd.f32 %v3116, %v3384
    %3386 = vdwg.mxu0
    %v3387 = vmul.f32 %v3316, 0.5
    %v3388 = vmul.f32 %v3318, 0.5
    %v3389 = vmul.f32 %v3369, 0.5
    %v3390 = vmul.f32 %v3371, 0.5
    %v3391 = vmul.f32 %v3320, 0.5
    %v3392 = vmul.f32 %v3322, 0.5
    %v3393 = vmul.f32 %v3373, 0.5
    %v3394 = vmul.f32 %v3375, 0.5
    %v3395 = vmul.f32 %v3326, 0.5
    %v3396 = vmul.f32 %v3328, 0.5
    %v3397 = vmul.f32 %v3379, 0.5
    %v3398 = vmul.f32 %v3381, 0.5
    %v3399 = vmul.f32 %v3330, 0.5
    %v3400 = vmul.f32 %v3332, 0.5
    %v3401 = vmul.f32 %v3383, 0.5
    %v3402 = vmul.f32 %v3385, 0.5
    %v3403 = vmul.f32 %v3316, 0.70710677
    %v3404 = vmul.f32 %v3318, 0.70710677
    %v3405 = vmul.f32 %v3369, 0.70710677
    %v3406 = vmul.f32 %v3371, 0.70710677
    %v3407 = vmul.f32 %v3320, 0.70710677
    %v3408 = vmul.f32 %v3322, 0.70710677
    %v3409 = vmul.f32 %v3373, 0.70710677
    %v3410 = vmul.f32 %v3375, 0.70710677
    %v3411 = vmul.f32 %v3326, 0.70710677
    %v3412 = vmul.f32 %v3328, 0.70710677
    %v3413 = vmul.f32 %v3379, 0.70710677
    %v3414 = vmul.f32 %v3381, 0.70710677
    %v3415 = vmul.f32 %v3330, 0.70710677
    %v3416 = vmul.f32 %v3332, 0.70710677
    %v3417 = vmul.f32 %v3383, 0.70710677
    %v3418 = vmul.f32 %v3385, 0.70710677
    %v3419 = verf.f32.pop %v3403
    %v3420 = verf.f32.pop %v3404
    %v3421 = verf.f32.pop %v3405
    %v3422 = verf.f32.pop %v3406
    %v3423 = verf.f32.pop %v3407
    %v3424 = verf.f32.pop %v3408
    %v3425 = verf.f32.pop %v3409
    %v3426 = verf.f32.pop %v3410
    %v3427 = verf.f32.pop %v3411
    %v3428 = verf.f32.pop %v3412
    %v3429 = verf.f32.pop %v3413
    %v3430 = verf.f32.pop %v3414
    %v3431 = verf.f32.pop %v3415
    %v3432 = verf.f32.pop %v3416
    %v3433 = verf.f32.pop %v3417
    %v3434 = verf.f32.pop %v3418
    %v3435 = vadd.f32 %v3419, 1.0
    %v3436 = vadd.f32 %v3420, 1.0
    %v3437 = vadd.f32 %v3421, 1.0
    %v3438 = vadd.f32 %v3422, 1.0
    %v3439 = vadd.f32 %v3423, 1.0
    %v3440 = vadd.f32 %v3424, 1.0
    %v3441 = vadd.f32 %v3425, 1.0
    %v3442 = vadd.f32 %v3426, 1.0
    %v3443 = vadd.f32 %v3427, 1.0
    %v3444 = vadd.f32 %v3428, 1.0
    %v3445 = vadd.f32 %v3429, 1.0
    %v3446 = vadd.f32 %v3430, 1.0
    %v3447 = vadd.f32 %v3431, 1.0
    %v3448 = vadd.f32 %v3432, 1.0
    %v3449 = vadd.f32 %v3433, 1.0
    %v3450 = vadd.f32 %v3434, 1.0
    %v3451 = vmul.f32 %v3387, %v3435
    %v3452 = vmul.f32 %v3388, %v3436
    %v3453 = vmul.f32 %v3389, %v3437
    %v3454 = vmul.f32 %v3390, %v3438
    %v3455 = vmul.f32 %v3391, %v3439
    %v3456 = vmul.f32 %v3392, %v3440
    %v3457 = vmul.f32 %v3393, %v3441
    %v3458 = vmul.f32 %v3394, %v3442
    %v3459 = vmul.f32 %v3395, %v3443
    %v3460 = vmul.f32 %v3396, %v3444
    %v3461 = vmul.f32 %v3397, %v3445
    %v3462 = vmul.f32 %v3398, %v3446
    %v3463 = vmul.f32 %v3399, %v3447
    %v3464 = vmul.f32 %v3400, %v3448
    %v3465 = vmul.f32 %v3401, %v3449
    %v3466 = vmul.f32 %v3402, %v3450
    %v3467 = vpack.c.bf16 %v3455, %v3451
    %v3468 = vpack.c.bf16 %v3456, %v3452
    %v3469 = vpack.c.bf16 %v3457, %v3453
    %v3470 = vpack.c.bf16 %v3458, %v3454
    %v3471 = vpack.c.bf16 %v3463, %v3459
    %v3472 = vpack.c.bf16 %v3464, %v3460
    %v3473 = vpack.c.bf16 %v3465, %v3461
    %v3474 = vpack.c.bf16 %v3466, %v3462
    %v3475 = vld [vmem:[#allocation13] sm:$0xf]
    %v3476 = vld [vmem:[#allocation13 + $0x4] sm:$0xf]
    %v3477 = vld [vmem:[#allocation13 + $0x8] sm:$0xf]
    %v3478 = vld [vmem:[#allocation13 + $0xc] sm:$0xf]
    %v3479 = vld [vmem:[#allocation13 + $0x10] sm:$0xf]
    %v3480 = vld [vmem:[#allocation13 + $0x14] sm:$0xf]
    %v3481 = vld [vmem:[#allocation13 + $0x18] sm:$0xf]
    %v3482 = vld [vmem:[#allocation13 + $0x1c] sm:$0xf]
    %v3483 = vld [vmem:[#allocation13 + $0x20] sm:$0xf]
    %v3484 = vld [vmem:[#allocation13 + $0x24] sm:$0xf]
    %v3485 = vld [vmem:[#allocation13 + $0x28] sm:$0xf]
    %v3486 = vld [vmem:[#allocation13 + $0x2c] sm:$0xf]
    %v3487 = vld [vmem:[#allocation13 + $0x30] sm:$0xf]
    %v3488 = vld [vmem:[#allocation13 + $0x34] sm:$0xf]
    %v3489 = vld [vmem:[#allocation13 + $0x38] sm:$0xf]
    %v3490 = vld [vmem:[#allocation13 + $0x3c] sm:$0xf]
    %v3491 = vld [vmem:[#allocation13 + $0x40] sm:$0xf]
    %v3492 = vld [vmem:[#allocation13 + $0x44] sm:$0xf]
    %v3493 = vld [vmem:[#allocation13 + $0x48] sm:$0xf]
    %v3494 = vld [vmem:[#allocation13 + $0x4c] sm:$0xf]
    %v3495 = vld [vmem:[#allocation13 + $0x50] sm:$0xf]
    %v3496 = vld [vmem:[#allocation13 + $0x54] sm:$0xf]
    %v3497 = vld [vmem:[#allocation13 + $0x58] sm:$0xf]
    %v3498 = vld [vmem:[#allocation13 + $0x5c] sm:$0xf]
    %v3499 = vld [vmem:[#allocation13 + $0x60] sm:$0xf]
    %v3500 = vld [vmem:[#allocation13 + $0x64] sm:$0xf]
    %v3501 = vld [vmem:[#allocation13 + $0x68] sm:$0xf]
    %v3502 = vld [vmem:[#allocation13 + $0x6c] sm:$0xf]
    %v3503 = vld [vmem:[#allocation13 + $0x70] sm:$0xf]
    %v3504 = vld [vmem:[#allocation13 + $0x74] sm:$0xf]
    %v3505 = vld [vmem:[#allocation13 + $0x78] sm:$0xf]
    %v3506 = vld [vmem:[#allocation13 + $0x7c] sm:$0xf]
    %v3507 = vld [vmem:[#allocation13 + $0x80] sm:$0xf]
    %v3508 = vld [vmem:[#allocation13 + $0x84] sm:$0xf]
    %v3509 = vld [vmem:[#allocation13 + $0x88] sm:$0xf]
    %v3510 = vld [vmem:[#allocation13 + $0x8c] sm:$0xf]
    %v3511 = vld [vmem:[#allocation13 + $0x90] sm:$0xf]
    %v3512 = vld [vmem:[#allocation13 + $0x94] sm:$0xf]
    %v3513 = vld [vmem:[#allocation13 + $0x98] sm:$0xf]
    %v3514 = vld [vmem:[#allocation13 + $0x9c] sm:$0xf]
    %v3515 = vld [vmem:[#allocation13 + $0xa0] sm:$0xf]
    %v3516 = vld [vmem:[#allocation13 + $0xa4] sm:$0xf]
    %v3517 = vld [vmem:[#allocation13 + $0xa8] sm:$0xf]
    %v3518 = vld [vmem:[#allocation13 + $0xac] sm:$0xf]
    %v3519 = vld [vmem:[#allocation13 + $0xb0] sm:$0xf]
    %v3520 = vld [vmem:[#allocation13 + $0xb4] sm:$0xf]
    %v3521 = vld [vmem:[#allocation13 + $0xb8] sm:$0xf]
    %v3522 = vld [vmem:[#allocation13 + $0xbc] sm:$0xf]
    %v3523 = vld [vmem:[#allocation13 + $0xc0] sm:$0xf]
    %v3524 = vld [vmem:[#allocation13 + $0xc4] sm:$0xf]
    %v3525 = vld [vmem:[#allocation13 + $0xc8] sm:$0xf]
    %v3526 = vld [vmem:[#allocation13 + $0xcc] sm:$0xf]
    %v3527 = vld [vmem:[#allocation13 + $0xd0] sm:$0xf]
    %v3528 = vld [vmem:[#allocation13 + $0xd4] sm:$0xf]
    %v3529 = vld [vmem:[#allocation13 + $0xd8] sm:$0xf]
    %v3530 = vld [vmem:[#allocation13 + $0xdc] sm:$0xf]
    %v3531 = vld [vmem:[#allocation13 + $0xe0] sm:$0xf]
    %v3532 = vld [vmem:[#allocation13 + $0xe4] sm:$0xf]
    %v3533 = vld [vmem:[#allocation13 + $0xe8] sm:$0xf]
    %v3534 = vld [vmem:[#allocation13 + $0xec] sm:$0xf]
    %v3535 = vld [vmem:[#allocation13 + $0xf0] sm:$0xf]
    %v3536 = vld [vmem:[#allocation13 + $0xf4] sm:$0xf]
    %v3537 = vld [vmem:[#allocation13 + $0xf8] sm:$0xf]
    %v3538 = vld [vmem:[#allocation13 + $0xfc] sm:$0xf]
    %v3539 = vld [vmem:[%s16] sm:$0x1]
    %v3541 = vlaneseq
    %v3542 = vshrl.u32 %v3541, 7
    %v3543 = vsub.s32 0, %v3542
    %v3544 = vrot.slane %v3539, %v3543
    %v3610 = vunpack.c.l.b16 %v3475
    %v3611 = vunpack.c.l.b16 %v3476
    %v3612 = vunpack.c.l.b16 %v3477
    %v3613 = vunpack.c.l.b16 %v3478
    %v3614 = vunpack.c.l.b16 %v3479
    %v3615 = vunpack.c.l.b16 %v3480
    %v3616 = vunpack.c.l.b16 %v3481
    %v3617 = vunpack.c.l.b16 %v3482
    %v3618 = vunpack.c.l.b16 %v3483
    %v3619 = vunpack.c.l.b16 %v3484
    %v3620 = vunpack.c.l.b16 %v3485
    %v3621 = vunpack.c.l.b16 %v3486
    %v3622 = vunpack.c.l.b16 %v3487
    %v3623 = vunpack.c.l.b16 %v3488
    %v3624 = vunpack.c.l.b16 %v3489
    %v3625 = vunpack.c.l.b16 %v3490
    %v3626 = vunpack.c.l.b16 %v3491
    %v3627 = vunpack.c.l.b16 %v3492
    %v3628 = vunpack.c.l.b16 %v3493
    %v3629 = vunpack.c.l.b16 %v3494
    %v3630 = vunpack.c.l.b16 %v3495
    %v3631 = vunpack.c.l.b16 %v3496
    %v3632 = vunpack.c.l.b16 %v3497
    %v3633 = vunpack.c.l.b16 %v3498
    %v3634 = vunpack.c.l.b16 %v3499
    %v3635 = vunpack.c.l.b16 %v3500
    %v3636 = vunpack.c.l.b16 %v3501
    %v3637 = vunpack.c.l.b16 %v3502
    %v3638 = vunpack.c.l.b16 %v3503
    %v3639 = vunpack.c.l.b16 %v3504
    %v3640 = vunpack.c.l.b16 %v3505
    %v3641 = vunpack.c.l.b16 %v3506
    %v3642 = vunpack.c.l.b16 %v3507
    %v3643 = vunpack.c.l.b16 %v3508
    %v3644 = vunpack.c.l.b16 %v3509
    %v3645 = vunpack.c.l.b16 %v3510
    %v3646 = vunpack.c.l.b16 %v3511
    %v3647 = vunpack.c.l.b16 %v3512
    %v3648 = vunpack.c.l.b16 %v3513
    %v3649 = vunpack.c.l.b16 %v3514
    %v3650 = vunpack.c.l.b16 %v3515
    %v3651 = vunpack.c.l.b16 %v3516
    %v3652 = vunpack.c.l.b16 %v3517
    %v3653 = vunpack.c.l.b16 %v3518
    %v3654 = vunpack.c.l.b16 %v3519
    %v3655 = vunpack.c.l.b16 %v3520
    %v3656 = vunpack.c.l.b16 %v3521
    %v3657 = vunpack.c.l.b16 %v3522
    %v3658 = vunpack.c.l.b16 %v3523
    %v3659 = vunpack.c.l.b16 %v3524
    %v3660 = vunpack.c.l.b16 %v3525
    %v3661 = vunpack.c.l.b16 %v3526
    %v3662 = vunpack.c.l.b16 %v3527
    %v3663 = vunpack.c.l.b16 %v3528
    %v3664 = vunpack.c.l.b16 %v3529
    %v3665 = vunpack.c.l.b16 %v3530
    %v3666 = vunpack.c.l.b16 %v3531
    %v3667 = vunpack.c.l.b16 %v3532
    %v3668 = vunpack.c.l.b16 %v3533
    %v3669 = vunpack.c.l.b16 %v3534
    %v3670 = vunpack.c.l.b16 %v3535
    %v3671 = vunpack.c.l.b16 %v3536
    %v3672 = vunpack.c.l.b16 %v3537
    %v3673 = vunpack.c.l.b16 %v3538
    %v3674 = vpack.c.b16 %v3611, %v3610
    %v3675 = vpack.c.b16 %v3613, %v3612
    %v3676 = vpack.c.b16 %v3615, %v3614
    %v3677 = vpack.c.b16 %v3617, %v3616
    %v3678 = vpack.c.b16 %v3619, %v3618
    %v3679 = vpack.c.b16 %v3621, %v3620
    %v3680 = vpack.c.b16 %v3623, %v3622
    %v3681 = vpack.c.b16 %v3625, %v3624
    %v3682 = vpack.c.b16 %v3627, %v3626
    %v3683 = vpack.c.b16 %v3629, %v3628
    %v3684 = vpack.c.b16 %v3631, %v3630
    %v3685 = vpack.c.b16 %v3633, %v3632
    %v3686 = vpack.c.b16 %v3635, %v3634
    %v3687 = vpack.c.b16 %v3637, %v3636
    %v3688 = vpack.c.b16 %v3639, %v3638
    %v3689 = vpack.c.b16 %v3641, %v3640
    %v3690 = vpack.c.b16 %v3643, %v3642
    %v3691 = vpack.c.b16 %v3645, %v3644
    %v3692 = vpack.c.b16 %v3647, %v3646
    %v3693 = vpack.c.b16 %v3649, %v3648
    %v3694 = vpack.c.b16 %v3651, %v3650
    %v3695 = vpack.c.b16 %v3653, %v3652
    %v3696 = vpack.c.b16 %v3655, %v3654
    %v3697 = vpack.c.b16 %v3657, %v3656
    %v3698 = vpack.c.b16 %v3659, %v3658
    %v3699 = vpack.c.b16 %v3661, %v3660
    %v3700 = vpack.c.b16 %v3663, %v3662
    %v3701 = vpack.c.b16 %v3665, %v3664
    %v3702 = vpack.c.b16 %v3667, %v3666
    %v3703 = vpack.c.b16 %v3669, %v3668
    %v3704 = vpack.c.b16 %v3671, %v3670
    %v3705 = vpack.c.b16 %v3673, %v3672
    %3738 = vmatprep.subr.bf16.mxu0 0
    %3739 = vmatpush1.bf16.msra.mxu0 %v3674
    %3740 = vmatprep.subr.bf16.mxu0 0
    %3741 = vmatpush1.bf16.msra.mxu0 %v3675
    %3742 = vmatprep.subr.bf16.mxu0 0
    %3743 = vmatpush1.bf16.msra.mxu0 %v3676
    %3744 = vmatprep.subr.bf16.mxu0 0
    %3745 = vmatpush1.bf16.msra.mxu0 %v3677
    %3746 = vmatprep.subr.bf16.mxu0 0
    %3747 = vmatpush1.bf16.msra.mxu0 %v3678
    %3748 = vmatprep.subr.bf16.mxu0 0
    %3749 = vmatpush1.bf16.msra.mxu0 %v3679
    %3750 = vmatprep.subr.bf16.mxu0 0
    %3751 = vmatpush1.bf16.msra.mxu0 %v3680
    %3752 = vmatprep.subr.bf16.mxu0 0
    %3753 = vmatpush1.bf16.msra.mxu0 %v3681
    %3754 = vmatprep.subr.bf16.mxu0 0
    %3755 = vmatpush1.bf16.msra.mxu0 %v3682
    %3756 = vmatprep.subr.bf16.mxu0 0
    %3757 = vmatpush1.bf16.msra.mxu0 %v3683
    %3758 = vmatprep.subr.bf16.mxu0 0
    %3759 = vmatpush1.bf16.msra.mxu0 %v3684
    %3760 = vmatprep.subr.bf16.mxu0 0
    %3761 = vmatpush1.bf16.msra.mxu0 %v3685
    %3762 = vmatprep.subr.bf16.mxu0 0
    %3763 = vmatpush1.bf16.msra.mxu0 %v3686
    %3764 = vmatprep.subr.bf16.mxu0 0
    %3765 = vmatpush1.bf16.msra.mxu0 %v3687
    %3766 = vmatprep.subr.bf16.mxu0 0
    %3767 = vmatpush1.bf16.msra.mxu0 %v3688
    %3768 = vmatprep.subr.bf16.mxu0 0
    %3769 = vmatpush1.bf16.msra.mxu0 %v3689
    %3770 = vmatprep.mubr.bf16.mxu0 %v3468
    %3771 = vmatmul.mubr.bf16.gmra.mrb[0].mxu0 %v3467
    %v3772 = vpop.f32.mrb[0].mxu0
    %v3773 = vadd.f32 %v3544, %v3772
    %v3774 = vpop.f32.mrb[0].mxu0
    %v3775 = vpop.f32.mrb[0].mxu0
    %v3776 = vadd.f32 %v3544, %v3775
    %v3777 = vpop.f32.mrb[0].mxu0
    %3778 = vmatprep.mubr.bf16.mxu0 %v3472
    %3779 = vmatmul.mubr.bf16.gmra.mrb[0].mxu0 %v3471
    %v3780 = vpop.f32.mrb[0].mxu0
    %v3781 = vadd.f32 %v3544, %v3780
    %v3782 = vpop.f32.mrb[0].mxu0
    %v3783 = vpop.f32.mrb[0].mxu0
    %v3784 = vadd.f32 %v3544, %v3783
    %v3785 = vpop.f32.mrb[0].mxu0
    %3786 = vdwg.mxu0
    %3787 = vmatprep.subr.bf16.mxu0 0
    %3788 = vmatpush1.bf16.msra.mxu0 %v3690
    %3789 = vmatprep.subr.bf16.mxu0 0
    %3790 = vmatpush1.bf16.msra.mxu0 %v3691
    %3791 = vmatprep.subr.bf16.mxu0 0
    %3792 = vmatpush1.bf16.msra.mxu0 %v3692
    %3793 = vmatprep.subr.bf16.mxu0 0
    %3794 = vmatpush1.bf16.msra.mxu0 %v3693
    %3795 = vmatprep.subr.bf16.mxu0 0
    %3796 = vmatpush1.bf16.msra.mxu0 %v3694
    %3797 = vmatprep.subr.bf16.mxu0 0
    %3798 = vmatpush1.bf16.msra.mxu0 %v3695
    %3799 = vmatprep.subr.bf16.mxu0 0
    %3800 = vmatpush1.bf16.msra.mxu0 %v3696
    %3801 = vmatprep.subr.bf16.mxu0 0
    %3802 = vmatpush1.bf16.msra.mxu0 %v3697
    %3803 = vmatprep.subr.bf16.mxu0 0
    %3804 = vmatpush1.bf16.msra.mxu0 %v3698
    %3805 = vmatprep.subr.bf16.mxu0 0
    %3806 = vmatpush1.bf16.msra.mxu0 %v3699
    %3807 = vmatprep.subr.bf16.mxu0 0
    %3808 = vmatpush1.bf16.msra.mxu0 %v3700
    %3809 = vmatprep.subr.bf16.mxu0 0
    %3810 = vmatpush1.bf16.msra.mxu0 %v3701
    %3811 = vmatprep.subr.bf16.mxu0 0
    %3812 = vmatpush1.bf16.msra.mxu0 %v3702
    %3813 = vmatprep.subr.bf16.mxu0 0
    %3814 = vmatpush1.bf16.msra.mxu0 %v3703
    %3815 = vmatprep.subr.bf16.mxu0 0
    %3816 = vmatpush1.bf16.msra.mxu0 %v3704
    %3817 = vmatprep.subr.bf16.mxu0 0
    %3818 = vmatpush1.bf16.msra.mxu0 %v3705
    %3819 = vmatprep.mubr.bf16.mxu0 %v3470
    %3820 = vmatmul.mubr.bf16.gmra.mrb[0].mxu0 %v3469
    %v3821 = vpop.f32.mrb[0].mxu0
    %v3822 = vadd.f32 %v3773, %v3821
    %v3823 = vpop.f32.mrb[0].mxu0
    %v3824 = vpop.f32.mrb[0].mxu0
    %v3825 = vadd.f32 %v3776, %v3824
    %v3826 = vpop.f32.mrb[0].mxu0
    %3827 = vmatprep.mubr.bf16.mxu0 %v3474
    %3828 = vmatmul.mubr.bf16.gmra.mrb[0].mxu0 %v3473
    %v3829 = vpop.f32.mrb[0].mxu0
    %v3830 = vadd.f32 %v3781, %v3829
    %v3831 = vpop.f32.mrb[0].mxu0
    %v3832 = vpop.f32.mrb[0].mxu0
    %v3833 = vadd.f32 %v3784, %v3832
    %v3834 = vpop.f32.mrb[0].mxu0
    %3835 = vdwg.mxu0
    %v3836 = vadd.f32 %v2995, %v3822
    %v3837 = vadd.f32 %v2996, %v3825
    %v3838 = vadd.f32 %v2997, %v3830
    %v3839 = vadd.f32 %v2998, %v3833
    %3840 = vst [vmem:[#allocation14] sm:$0xff] %v3836
    %3841 = vst [vmem:[#allocation14 + $0x8] sm:$0xff] %v3837
    %3842 = vst [vmem:[#allocation14 + $0x10] sm:$0xff] %v3838
    %3843 = vst [vmem:[#allocation14 + $0x18] sm:$0xff] %v3839
    // Predicated region
    $region98: #{tpu_custom_call.1} parent=1 // pred_check
      _
    $region99: #{tpu_custom_call.1} parent=1 // pred_check_branch
      %3845 = sbr.rel (0) target = $region101
    $region100: #{tpu_custom_call.1} parent=1 // pred_region
      %s3847 = ssub.s32 512, 512
      %3848 = vsyncadd [#allocation4], %s3847
      %s3849 = sshll.u32 [#allocation14], 4
      %s3850 = int_to_ptr.vmem [resolvable:$true] %s3849
      %3855 = dma.vmem_to_hbm [thread:$0]  %s3850, 512, %s17, [#allocation4], 128, 128, 8
    $region101: #{tpu_custom_call.1} parent=1 // pred_fallthru
      _
    // Predicated region
    $region102: #{tpu_custom_call.1} parent=1 // pred_check
      _
    $region103: #{tpu_custom_call.1} parent=1 // pred_check_branch
      %3857 = sbr.rel (0) target = $region105
    $region104: #{tpu_custom_call.1} parent=1 // pred_region
      %3858 = dma.done [#allocation4], 512
    $region105: #{tpu_custom_call.1} parent=1 // pred_fallthru
      _
    %3859 = vsyncpa [#allocation3], 1
    %3860 = vsyncpa [#allocation6], 1
    %3861 = vsyncpa [#allocation9], 1
    %3862 = vsyncpa [#allocation12], 1
    %3863 = vsyncpa [#allocation4], 1

</llo_original>
